<compile_context>
chip_gen: v7x
topology: tpu7x:2x2x1
jax: 0.10.0
libtpu: 0.0.40
codegen_flags: <defaults>
</compile_context>

<pallas_src>
from functools import partial

import numpy as np
import jax
import jax.numpy as jnp
from jax.experimental import pallas as pl
from jax.experimental.pallas import tpu as pltpu


# ============================================================================
# Geometry helpers (conv1: k5 s1 p2, conv2: k5 s2 p2, conv3: k3 s2 p1)
# ============================================================================
def _conv_geometry(H, W):
    # NOTE: valid because 2*pad - kernel == -1 for both strided convs.
    H1, W1 = H, W                       # conv1 keeps spatial size
    H2 = (H1 - 1) // 2 + 1              # conv2 (k5, s2, p2)
    W2 = (W1 - 1) // 2 + 1
    H3 = (H2 - 1) // 2 + 1              # conv3 (k3, s2, p1)
    W3 = (W2 - 1) // 2 + 1
    return H1, W1, H2, W2, H3, W3


def _round_up(x, m):
    return ((x + m - 1) // m) * m


# ============================================================================
# Fused Critic kernel
# ============================================================================
def _critic_kernel(
    # ---- inputs -------------------------------------------------------------
    state_ref,                        # (tb, D_state)          f32
    x0_ref,                           # (H+4, tb, (W+4)*2)     f32 padded rows
    w1_ref, b1_ref, g1_ref, be1_ref,  # MLP layer 1 (D->256) + LayerNorm
    w2_ref, b2_ref, g2_ref, be2_ref,  # MLP layer 2 (256->128) + LayerNorm
    m1_ref, cb1_ref,                  # conv1 per-kh matrices + bias row
    m2_ref, cb2_ref,                  # conv2
    m3_ref, cb3_ref,                  # conv3
    w4_ref, b4_ref,                   # CNN linear, split by conv3 output row
    vw1a_ref, vw1b_ref, vb1_ref,      # value head layer 1 (concat split)
    vw2_ref, vb2_ref,                 # value head layer 2 as (1,128), (1,1)
    # ---- outputs ------------------------------------------------------------
    out_ref,                          # (tb, 1) f32
    # ---- scratch (even / odd row banks of the conv activations) ------------
    x1e_ref, x1o_ref,                 # conv1 output, padded rows split by parity
    x2e_ref, x2o_ref,                 # conv2 output, padded rows split by parity
    *, n_rows):
    n1, n2, n3 = n_rows
    f32, bf16 = jnp.float32, jnp.bfloat16
    tb = state_ref.shape[0]
    L0 = x0_ref.shape[-1]
    L1 = x1e_ref.shape[-1]
    L2 = x2e_ref.shape[-1]

    def elu(y):  # ELU(alpha=1); min() keeps the dead branch finite
        # (exp(x)-1 instead of expm1 to stay on the known-good lowering path)
        return jnp.where(y > 0.0, y, jnp.exp(jnp.minimum(y, 0.0)) - 1.0)

    def layer_norm(y, g, b, eps=1e-5):
        mu = jnp.mean(y, axis=-1, keepdims=True)
        var = jnp.mean(jnp.square(y - mu), axis=-1, keepdims=True)
        return (y - mu) * jax.lax.rsqrt(var + eps) * g + b

    def mm(a, w):  # bf16 MXU matmul, f32 accumulation
        return jnp.dot(a.astype(bf16), w, preferred_element_type=f32)

    # ---------------- state MLP: (Linear + ELU + LayerNorm) x 2 --------------
    s = state_ref[...]
    h = layer_norm(elu(mm(s, w1_ref[...]) + b1_ref[...]),
                   g1_ref[...], be1_ref[...])
    feat_state = layer_norm(elu(mm(h, w2_ref[...]) + b2_ref[...]),
                            g2_ref[...], be2_ref[...])          # (tb, 128)

    # ------------- zero only the H-padding rows of the activation banks -----
    zero1 = jnp.zeros((tb, L1), f32)
    zero2 = jnp.zeros((tb, L2), f32)
    x1e_ref[0] = zero1
    x1e_ref[x1e_ref.shape[0] - 1] = zero1
    x1o_ref[0] = zero1
    x1o_ref[x1o_ref.shape[0] - 1] = zero1
    x2e_ref[0] = zero2
    x2e_ref[x2e_ref.shape[0] - 1] = zero2
    x2o_ref[0] = zero2
    x2o_ref[x2o_ref.shape[0] - 1] = zero2

    # ---------------- conv1 (2->8, k5 s1 p2): 5 batched per-kh matmuls -------
    # rows are packed on sublanes as (output_row, batch); contiguous slices.
    acc = jnp.dot(x0_ref[0:n1].reshape(n1 * tb, L0).astype(bf16), m1_ref[0],
                  preferred_element_type=f32)
    for kh in range(1, 5):
        acc = acc + jnp.dot(
            x0_ref[kh:kh + n1].reshape(n1 * tb, L0).astype(bf16),
            m1_ref[kh], preferred_element_type=f32)
    y1 = elu(acc + cb1_ref[...]).reshape(n1 // 2, 2, tb, L1)
    # output row h -> padded x1 row h+2: even rows -> even bank idx 1.., odd ...
    x1e_ref[1:1 + n1 // 2] = y1[:, 0]
    x1o_ref[1:1 + n1 // 2] = y1[:, 1]

    # ---------------- conv2 (8->16, k5 s2 p2): 5 batched per-kh matmuls ------
    def conv2_in(kh):
        bank = x1e_ref if kh % 2 == 0 else x1o_ref
        s0 = kh // 2
        return bank[s0:s0 + n2].reshape(n2 * tb, L1).astype(bf16)

    acc = jnp.dot(conv2_in(0), m2_ref[0], preferred_element_type=f32)
    for kh in range(1, 5):
        acc = acc + jnp.dot(conv2_in(kh), m2_ref[kh],
                            preferred_element_type=f32)
    y2 = elu(acc + cb2_ref[...]).reshape(n2 // 2, 2, tb, L2)
    # output row ho -> padded x2 row ho+1: ho even -> odd bank, ho odd -> even
    x2o_ref[0:n2 // 2] = y2[:, 0]
    x2e_ref[1:1 + n2 // 2] = y2[:, 1]

    # ---------------- conv3 (16->32, k3 s2 p1): 3 batched per-kh matmuls -----
    def conv3_in(kh):
        bank = x2e_ref if kh % 2 == 0 else x2o_ref
        s0 = kh // 2
        return bank[s0:s0 + n3].reshape(n3 * tb, L2).astype(bf16)

    acc = jnp.dot(conv3_in(0), m3_ref[0], preferred_element_type=f32)
    for kh in range(1, 3):
        acc = acc + jnp.dot(conv3_in(kh), m3_ref[kh],
                            preferred_element_type=f32)
    y3 = elu(acc + cb3_ref[...])              # (n3*tb, W3*32) rows = (h, b)

    # ---------------- Flatten + LazyLinear(128), fused -----------------------
    fm = jnp.zeros((tb, b4_ref.shape[1]), f32) + b4_ref[...]
    for hh in range(n3):                      # n3 tiny (e.g. 4) -> unrolled
        fm = fm + jnp.dot(y3[hh * tb:(hh + 1) * tb].astype(bf16), w4_ref[hh],
                          preferred_element_type=f32)

    # ---------------- value head (fused; concat -> two matmuls) --------------
    v = elu(mm(feat_state, vw1a_ref[...]) + mm(fm, vw1b_ref[...])
            + vb1_ref[...])
    val = jnp.sum(v * vw2_ref[...], axis=-1, keepdims=True) + vb2_ref[...]
    out_ref[...] = val.astype(out_ref.dtype)


# ============================================================================
# Host-side weight preprocessing (one-time): conv -> per-kh row matrices
# ============================================================================
def _conv_row_matrices(w, b, *, stride, w_in_padded, w_out, out_pad_w):
    """Lower a Conv2d to per-kh matrices for channels-last row matmuls.

    M[kh] maps a padded input row (w_in_padded * c_in lanes) to a padded
    output row ((w_out + 2*out_pad_w) * c_out lanes); the W-stride and the
    next layer's W-padding are baked in (pad columns are exactly zero).
    """
    c_out, c_in, k, _ = w.shape
    wn = np.asarray(w, np.float32)
    bn = np.asarray(b, np.float32)
    n_cols = (w_out + 2 * out_pad_w) * c_out
    M = np.zeros((k, w_in_padded * c_in, n_cols), np.float32)
    brow = np.zeros((1, n_cols), np.float32)
    for wo in range(w_out):
        c0 = (out_pad_w + wo) * c_out
        brow[0, c0:c0 + c_out] = bn
        for kh in range(k):
            for kw in range(k):
                wi = stride * wo + kw
                M[kh, wi * c_in:(wi + 1) * c_in, c0:c0 + c_out] = \
                    wn[:, :, kh, kw].T
    return jnp.asarray(M, jnp.bfloat16), jnp.asarray(brow, jnp.float32)


def prepare_params(p, H, W):
    """One-time host-side preprocessing.

    NOTE: Linear weights are consumed in (fan_in, fan_out) layout (as produced
    by init_params below).  A real PyTorch state_dict stores (out, in) and
    would need a transpose when porting trained weights.
    """
    bf16, f32 = jnp.bfloat16, jnp.float32
    H1, W1, H2, W2, H3, W3 = _conv_geometry(H, W)
    kp = {}
    # state MLP
    kp["state_w1"] = p["mlp_w1"].astype(bf16)
    kp["state_b1"] = p["mlp_b1"].reshape(1, -1).astype(f32)
    kp["state_g1"] = p["mlp_g1"].reshape(1, -1).astype(f32)
    kp["state_be1"] = p["mlp_be1"].reshape(1, -1).astype(f32)
    kp["state_w2"] = p["mlp_w2"].astype(bf16)
    kp["state_b2"] = p["mlp_b2"].reshape(1, -1).astype(f32)
    kp["state_g2"] = p["mlp_g2"].reshape(1, -1).astype(f32)
    kp["state_be2"] = p["mlp_be2"].reshape(1, -1).astype(f32)
    # conv stack (output rows carry the *next* conv's W padding)
    kp["m1"], kp["cb1"] = _conv_row_matrices(
        p["cnn_w1"], p["cnn_b1"], stride=1, w_in_padded=W + 4, w_out=W1,
        out_pad_w=2)
    kp["m2"], kp["cb2"] = _conv_row_matrices(
        p["cnn_w2"], p["cnn_b2"], stride=2, w_in_padded=W1 + 4, w_out=W2,
        out_pad_w=1)
    kp["m3"], kp["cb3"] = _conv_row_matrices(
        p["cnn_w3"], p["cnn_b3"], stride=2, w_in_padded=W2 + 2, w_out=W3,
        out_pad_w=0)
    # CNN linear: permute PyTorch NCHW-flatten rows (c,h,w) into the kernel's
    # channels-last row order (h, w*32+c), split by conv3 output row h.
    w4 = p["cnn_w4"].reshape(32, H3, W3, 128)
    kp["w4h"] = jnp.transpose(w4, (1, 2, 0, 3)).reshape(
        H3, W3 * 32, 128).astype(bf16)
    kp["b4"] = p["cnn_b4"].reshape(1, -1).astype(f32)
    # value head: split the concat([feature_state, feature_map]) weight
    kp["vw1a"] = p["val_w1"][:128].astype(bf16)
    kp["vw1b"] = p["val_w1"][128:].astype(bf16)
    kp["vb1"] = p["val_b1"].reshape(1, -1).astype(f32)
    kp["vw2"] = p["val_w2"].reshape(1, -1).astype(f32)   # (1, 128) VPU dot
    kp["vb2"] = p["val_b2"].reshape(1, 1).astype(f32)
    return kp


# ============================================================================
# Forward pass (single fused pallas_call, batch-tiled grid)
# ============================================================================
def critic_forward(kp, obs_state, obs_map):
    """obs_state: (B, D) f32 ; obs_map: (B, 2, H, W) f32 (NCHW, like PyTorch)."""
    B, D = obs_state.shape
    _, C, H, W = obs_map.shape
    assert C == 2
    H1, W1, H2, W2, H3, W3 = _conv_geometry(H, W)
    assert H1 % 2 == 0 and H2 % 2 == 0, "row pairing assumes even conv heights"

    L0 = (W + 4) * C
    L1 = (W1 + 4) * 8
    L2 = (W2 + 2) * 16

    # Batch tile: multiple of 8 (dense sublanes, layout-trivial reshapes),
    # capped at 64; keep >= 2 grid steps when the batch allows (v7x megacore).
    b8 = _round_up(B, 8)
    if b8 >= 16:
        tb = min(64, _round_up(b8 // 2, 8))
    else:
        tb = b8
    B_pad = _round_up(B, tb)
    G = B_pad // tb

    f32 = jnp.float32
    s = jnp.pad(obs_state.astype(f32), ((0, B_pad - B), (0, 0)))

    # NCHW -> NHWC, zero-pad H/W by 2, pack (W, C) on the lane axis, then
    # pre-tile so each grid step's map input is ONE contiguous HBM chunk of
    # shape (H+4, tb, L0) with rows on the leading axis.
    x = jnp.transpose(obs_map.astype(f32), (0, 2, 3, 1))
    x = jnp.pad(x, ((0, B_pad - B), (2, 2), (2, 2), (0, 0)))
    x = x.reshape(B_pad, H + 4, L0)
    x0 = x.reshape(G, tb, H + 4, L0).transpose(0, 2, 1, 3)   # (G, H+4, tb, L0)

    weight_args = (
        kp["state_w1"], kp["state_b1"], kp["state_g1"], kp["state_be1"],
        kp["state_w2"], kp["state_b2"], kp["state_g2"], kp["state_be2"],
        kp["m1"], kp["cb1"], kp["m2"], kp["cb2"], kp["m3"], kp["cb3"],
        kp["w4h"], kp["b4"],
        kp["vw1a"], kp["vw1b"], kp["vb1"], kp["vw2"], kp["vb2"],
    )
    weight_specs = [
        pl.BlockSpec(a.shape, lambda i, _n=a.ndim: (0,) * _n)
        for a in weight_args
    ]

    P1 = H1 + 4          # padded conv1-output rows (input of conv2)
    P2 = H2 + 2          # padded conv2-output rows (input of conv3)

    grid_spec = pltpu.PrefetchScalarGridSpec(
        num_scalar_prefetch=0,
        grid=(G,),
        in_specs=[
            pl.BlockSpec((tb, D), lambda i: (i, 0)),
            pl.BlockSpec((None, H + 4, tb, L0), lambda i: (i, 0, 0, 0)),
        ] + weight_specs,
        out_specs=pl.BlockSpec((tb, 1), lambda i: (i, 0)),
        scratch_shapes=[
            pltpu.VMEM(((P1 + 1) // 2, tb, L1), jnp.float32),  # x1 even rows
            pltpu.VMEM((P1 // 2, tb, L1), jnp.float32),        # x1 odd rows
            pltpu.VMEM(((P2 + 1) // 2, tb, L2), jnp.float32),  # x2 even rows
            pltpu.VMEM((P2 // 2, tb, L2), jnp.float32),        # x2 odd rows
        ],
    )
    kernel = partial(_critic_kernel, n_rows=(H1, H2, H3))
    out = pl.pallas_call(
        kernel,
        out_shape=jax.ShapeDtypeStruct((B_pad, 1), jnp.float32),
        grid_spec=grid_spec,
        compiler_params=pltpu.CompilerParams(
            dimension_semantics=("parallel",)),
    )(s, x0, *weight_args)
    return out[:B]


# ============================================================================
# Parameter init (deterministic, synthetic; PyTorch defaults, (in,out) layout)
# ============================================================================
def _init_linear(key, fan_in, fan_out):
    kw, kb = jax.random.split(key)
    s = 1.0 / np.sqrt(fan_in)
    w = jax.random.uniform(kw, (fan_in, fan_out), jnp.float32, -s, s)
    b = jax.random.uniform(kb, (fan_out,), jnp.float32, -s, s)
    return w, b


def _init_conv(key, c_in, c_out, k):
    kw, kb = jax.random.split(key)
    s = 1.0 / np.sqrt(c_in * k * k)
    w = jax.random.uniform(kw, (c_out, c_in, k, k), jnp.float32, -s, s)
    b = jax.random.uniform(kb, (c_out,), jnp.float32, -s, s)
    return w, b


def init_params(key, d_state, H, W):
    keys = jax.random.split(key, 8)
    _, _, _, _, H3, W3 = _conv_geometry(H, W)
    p = {}
    p["mlp_w1"], p["mlp_b1"] = _init_linear(keys[0], d_state, 256)
    p["mlp_g1"] = jnp.ones((256,), jnp.float32)
    p["mlp_be1"] = jnp.zeros((256,), jnp.float32)
    p["mlp_w2"], p["mlp_b2"] = _init_linear(keys[1], 256, 128)
    p["mlp_g2"] = jnp.ones((128,), jnp.float32)
    p["mlp_be2"] = jnp.zeros((128,), jnp.float32)
    p["cnn_w1"], p["cnn_b1"] = _init_conv(keys[2], 2, 8, 5)
    p["cnn_w2"], p["cnn_b2"] = _init_conv(keys[3], 8, 16, 5)
    p["cnn_w3"], p["cnn_b3"] = _init_conv(keys[4], 16, 32, 3)
    p["cnn_w4"], p["cnn_b4"] = _init_linear(keys[5], 32 * H3 * W3, 128)
    p["val_w1"], p["val_b1"] = _init_linear(keys[6], 256, 128)
    p["val_w2"], p["val_b2"] = _init_linear(keys[7], 128, 1)
    return p


# ============================================================================
# Pure-JAX f32 reference (mirrors the PyTorch Critic exactly)
# ============================================================================
def reference_forward(p, obs_state, obs_map):
    def elu(x):
        return jnp.where(x > 0, x, jnp.expm1(x))

    def ln(x, g, b, eps=1e-5):
        mu = x.mean(-1, keepdims=True)
        var = jnp.square(x - mu).mean(-1, keepdims=True)
        return (x - mu) * jax.lax.rsqrt(var + eps) * g + b

    def conv(x, w, b, s, pad):
        y = jax.lax.conv_general_dilated(
            x, w, (s, s), [(pad, pad), (pad, pad)],
            dimension_numbers=("NCHW", "OIHW", "NCHW"))
        return y + b.reshape(1, -1, 1, 1)

    h = ln(elu(obs_state @ p["mlp_w1"] + p["mlp_b1"]), p["mlp_g1"], p["mlp_be1"])
    fs = ln(elu(h @ p["mlp_w2"] + p["mlp_b2"]), p["mlp_g2"], p["mlp_be2"])
    x = elu(conv(obs_map, p["cnn_w1"], p["cnn_b1"], 1, 2))
    x = elu(conv(x, p["cnn_w2"], p["cnn_b2"], 2, 2))
    x = elu(conv(x, p["cnn_w3"], p["cnn_b3"], 2, 1))
    fm = x.reshape(x.shape[0], -1) @ p["cnn_w4"] + p["cnn_b4"]
    feat = jnp.concatenate([fs, fm], axis=-1)
    v = elu(feat @ p["val_w1"] + p["val_b1"])
    return v @ p["val_w2"] + p["val_b2"]


if __name__ == "__main__":
    key = jax.random.PRNGKey(0)
    k_in1, k_in2, k_par = jax.random.split(key, 3)

    B, D_STATE, H, W = 2, 32, 16, 16
    obs_state = jax.random.normal(k_in1, (B, D_STATE), jnp.float32)
    obs_map = jax.random.normal(k_in2, (B, 2, H, W), jnp.float32)

    params = init_params(k_par, D_STATE, H, W)
    kparams = prepare_params(params, H, W)      # one-time host-side prep

    fwd = jax.jit(lambda s, m: critic_forward(kparams, s, m))
    value = fwd(obs_state, obs_map)
    jax.block_until_ready(value)

    assert value.shape == (B, 1), value.shape
    assert bool(jnp.all(jnp.isfinite(value)))

    # Sanity check vs a pure-JAX f32 reference (kernel uses bf16 matmul inputs
    # with f32 accumulation, so tolerance is loose but catches structural bugs).
    ref = reference_forward(params, obs_state, obs_map)
    max_err = float(jnp.max(jnp.abs(value - ref)))
    assert max_err < 5e-2, f"mismatch vs reference: {max_err}"

    print("KERNEL_OK")
</pallas_src>

<mosaic_0001>
module attributes {stable_mosaic.version = 11 : i64} {
  func.func @_critic_kernel(%arg0: i32, %arg1: memref<8x32xf32, #tpu.memory_space<vmem>>, %arg2: memref<1x20x8x40xf32, #tpu.memory_space<vmem>>, %arg3: memref<32x256xbf16, #tpu.memory_space<vmem>>, %arg4: memref<1x256xf32, #tpu.memory_space<vmem>>, %arg5: memref<1x256xf32, #tpu.memory_space<vmem>>, %arg6: memref<1x256xf32, #tpu.memory_space<vmem>>, %arg7: memref<256x128xbf16, #tpu.memory_space<vmem>>, %arg8: memref<1x128xf32, #tpu.memory_space<vmem>>, %arg9: memref<1x128xf32, #tpu.memory_space<vmem>>, %arg10: memref<1x128xf32, #tpu.memory_space<vmem>>, %arg11: memref<5x40x160xbf16, #tpu.memory_space<vmem>>, %arg12: memref<1x160xf32, #tpu.memory_space<vmem>>, %arg13: memref<5x160x160xbf16, #tpu.memory_space<vmem>>, %arg14: memref<1x160xf32, #tpu.memory_space<vmem>>, %arg15: memref<3x160x128xbf16, #tpu.memory_space<vmem>>, %arg16: memref<1x128xf32, #tpu.memory_space<vmem>>, %arg17: memref<4x128x128xbf16, #tpu.memory_space<vmem>>, %arg18: memref<1x128xf32, #tpu.memory_space<vmem>>, %arg19: memref<128x128xbf16, #tpu.memory_space<vmem>>, %arg20: memref<128x128xbf16, #tpu.memory_space<vmem>>, %arg21: memref<1x128xf32, #tpu.memory_space<vmem>>, %arg22: memref<1x128xf32, #tpu.memory_space<vmem>>, %arg23: memref<1x1xf32, #tpu.memory_space<vmem>>, %arg24: memref<8x1xf32, #tpu.memory_space<vmem>>, %arg25: memref<10x8x160xf32, #tpu.memory_space<vmem>>, %arg26: memref<10x8x160xf32, #tpu.memory_space<vmem>>, %arg27: memref<5x8x160xf32, #tpu.memory_space<vmem>>, %arg28: memref<5x8x160xf32, #tpu.memory_space<vmem>>) attributes {dimension_semantics = [#tpu.dimension_semantics<parallel>], iteration_bounds = array<i64: 1>, scalar_prefetch = 0 : i64, scratch_operands = 4 : i64, tpu.core_type = #tpu.core_type<tc>, window_params = [{transform_indices = @transform_0, window_bounds = array<i64: 8, 32>}, {transform_indices = @transform_1, window_bounds = array<i64: 1, 20, 8, 40>}, {pipeline_mode = #tpu.pipeline_mode<synchronous>, transform_indices = @transform_2, window_bounds = array<i64: 32, 256>}, {pipeline_mode = #tpu.pipeline_mode<synchronous>, transform_indices = @transform_3, window_bounds = array<i64: 1, 256>}, {pipeline_mode = #tpu.pipeline_mode<synchronous>, transform_indices = @transform_4, window_bounds = array<i64: 1, 256>}, {pipeline_mode = #tpu.pipeline_mode<synchronous>, transform_indices = @transform_5, window_bounds = array<i64: 1, 256>}, {pipeline_mode = #tpu.pipeline_mode<synchronous>, transform_indices = @transform_6, window_bounds = array<i64: 256, 128>}, {pipeline_mode = #tpu.pipeline_mode<synchronous>, transform_indices = @transform_7, window_bounds = array<i64: 1, 128>}, {pipeline_mode = #tpu.pipeline_mode<synchronous>, transform_indices = @transform_8, window_bounds = array<i64: 1, 128>}, {pipeline_mode = #tpu.pipeline_mode<synchronous>, transform_indices = @transform_9, window_bounds = array<i64: 1, 128>}, {pipeline_mode = #tpu.pipeline_mode<synchronous>, transform_indices = @transform_10, window_bounds = array<i64: 5, 40, 160>}, {pipeline_mode = #tpu.pipeline_mode<synchronous>, transform_indices = @transform_11, window_bounds = array<i64: 1, 160>}, {pipeline_mode = #tpu.pipeline_mode<synchronous>, transform_indices = @transform_12, window_bounds = array<i64: 5, 160, 160>}, {pipeline_mode = #tpu.pipeline_mode<synchronous>, transform_indices = @transform_13, window_bounds = array<i64: 1, 160>}, {pipeline_mode = #tpu.pipeline_mode<synchronous>, transform_indices = @transform_14, window_bounds = array<i64: 3, 160, 128>}, {pipeline_mode = #tpu.pipeline_mode<synchronous>, transform_indices = @transform_15, window_bounds = array<i64: 1, 128>}, {pipeline_mode = #tpu.pipeline_mode<synchronous>, transform_indices = @transform_16, window_bounds = array<i64: 4, 128, 128>}, {pipeline_mode = #tpu.pipeline_mode<synchronous>, transform_indices = @transform_17, window_bounds = array<i64: 1, 128>}, {pipeline_mode = #tpu.pipeline_mode<synchronous>, transform_indices = @transform_18, window_bounds = array<i64: 128, 128>}, {pipeline_mode = #tpu.pipeline_mode<synchronous>, transform_indices = @transform_19, window_bounds = array<i64: 128, 128>}, {pipeline_mode = #tpu.pipeline_mode<synchronous>, transform_indices = @transform_20, window_bounds = array<i64: 1, 128>}, {pipeline_mode = #tpu.pipeline_mode<synchronous>, transform_indices = @transform_21, window_bounds = array<i64: 1, 128>}, {pipeline_mode = #tpu.pipeline_mode<synchronous>, transform_indices = @transform_22, window_bounds = array<i64: 1, 1>}, {transform_indices = @transform_23, window_bounds = array<i64: 8, 1>}]} {
    %c0 = arith.constant 0 : index
    %c0_0 = arith.constant 0 : index
    %0 = vector.load %arg1[%c0, %c0_0] : memref<8x32xf32, #tpu.memory_space<vmem>>, vector<8x32xf32>
    %c0_1 = arith.constant 0 : index
    %c0_2 = arith.constant 0 : index
    %1 = vector.load %arg3[%c0_1, %c0_2] : memref<32x256xbf16, #tpu.memory_space<vmem>>, vector<32x256xbf16>
    %2 = arith.truncf %0 : vector<8x32xf32> to vector<8x32xbf16>
    %cst = arith.constant dense<0.000000e+00> : vector<8x256xf32>
    %3 = tpu.matmul %2, %1, %cst {dimension_numbers = #tpu.dot_dimension_numbers<[1], [0], [0], [1], [0, 0, 1, 1], [], []>} : vector<8x32xbf16>, vector<32x256xbf16>, vector<8x256xf32> -> vector<8x256xf32>
    %c0_3 = arith.constant 0 : index
    %c0_4 = arith.constant 0 : index
    %4 = vector.load %arg4[%c0_3, %c0_4] : memref<1x256xf32, #tpu.memory_space<vmem>>, vector<1x256xf32>
    %5 = vector.broadcast %4 : vector<1x256xf32> to vector<8x256xf32>
    %6 = arith.addf %3, %5 : vector<8x256xf32>
    %cst_5 = arith.constant 0.000000e+00 : f32
    %7 = vector.broadcast %cst_5 : f32 to vector<8x256xf32>
    %8 = arith.cmpf ogt, %6, %7 : vector<8x256xf32>
    %cst_6 = arith.constant 0.000000e+00 : f32
    %9 = vector.broadcast %cst_6 : f32 to vector<8x256xf32>
    %10 = arith.minimumf %6, %9 : vector<8x256xf32>
    %11 = math.exp %10 : vector<8x256xf32>
    %cst_7 = arith.constant 1.000000e+00 : f32
    %12 = vector.broadcast %cst_7 : f32 to vector<8x256xf32>
    %13 = arith.subf %11, %12 : vector<8x256xf32>
    %14 = arith.select %8, %6, %13 : vector<8x256xi1>, vector<8x256xf32>
    %c0_8 = arith.constant 0 : index
    %c0_9 = arith.constant 0 : index
    %15 = vector.load %arg5[%c0_8, %c0_9] : memref<1x256xf32, #tpu.memory_space<vmem>>, vector<1x256xf32>
    %c0_10 = arith.constant 0 : index
    %c0_11 = arith.constant 0 : index
    %16 = vector.load %arg6[%c0_10, %c0_11] : memref<1x256xf32, #tpu.memory_space<vmem>>, vector<1x256xf32>
    %cst_12 = arith.constant dense<0.000000e+00> : vector<8xf32>
    %17 = vector.multi_reduction <add>, %14, %cst_12 [1] : vector<8x256xf32> to vector<8xf32>
    %18 = vector.shape_cast %17 : vector<8xf32> to vector<8x1xf32>
    %cst_13 = arith.constant 2.560000e+02 : f32
    %19 = vector.broadcast %cst_13 : f32 to vector<8x1xf32>
    %20 = arith.divf %18, %19 : vector<8x1xf32>
    %21 = vector.broadcast %20 : vector<8x1xf32> to vector<8x256xf32>
    %22 = arith.subf %14, %21 : vector<8x256xf32>
    %23 = arith.mulf %22, %22 : vector<8x256xf32>
    %cst_14 = arith.constant dense<0.000000e+00> : vector<8xf32>
    %24 = vector.multi_reduction <add>, %23, %cst_14 [1] : vector<8x256xf32> to vector<8xf32>
    %25 = vector.shape_cast %24 : vector<8xf32> to vector<8x1xf32>
    %cst_15 = arith.constant 2.560000e+02 : f32
    %26 = vector.broadcast %cst_15 : f32 to vector<8x1xf32>
    %27 = arith.divf %25, %26 : vector<8x1xf32>
    %28 = vector.broadcast %20 : vector<8x1xf32> to vector<8x256xf32>
    %29 = arith.subf %14, %28 : vector<8x256xf32>
    %cst_16 = arith.constant 9.99999974E-6 : f32
    %30 = vector.broadcast %cst_16 : f32 to vector<8x1xf32>
    %31 = arith.addf %27, %30 : vector<8x1xf32>
    %32 = math.rsqrt %31 : vector<8x1xf32>
    %33 = vector.broadcast %32 : vector<8x1xf32> to vector<8x256xf32>
    %34 = arith.mulf %29, %33 : vector<8x256xf32>
    %35 = vector.broadcast %15 : vector<1x256xf32> to vector<8x256xf32>
    %36 = arith.mulf %34, %35 : vector<8x256xf32>
    %37 = vector.broadcast %16 : vector<1x256xf32> to vector<8x256xf32>
    %38 = arith.addf %36, %37 : vector<8x256xf32>
    %c0_17 = arith.constant 0 : index
    %c0_18 = arith.constant 0 : index
    %39 = vector.load %arg7[%c0_17, %c0_18] : memref<256x128xbf16, #tpu.memory_space<vmem>>, vector<256x128xbf16>
    %40 = arith.truncf %38 : vector<8x256xf32> to vector<8x256xbf16>
    %cst_19 = arith.constant dense<0.000000e+00> : vector<8x128xf32>
    %41 = tpu.matmul %40, %39, %cst_19 {dimension_numbers = #tpu.dot_dimension_numbers<[1], [0], [0], [1], [0, 0, 1, 1], [], []>} : vector<8x256xbf16>, vector<256x128xbf16>, vector<8x128xf32> -> vector<8x128xf32>
    %c0_20 = arith.constant 0 : index
    %c0_21 = arith.constant 0 : index
    %42 = vector.load %arg8[%c0_20, %c0_21] : memref<1x128xf32, #tpu.memory_space<vmem>>, vector<1x128xf32>
    %43 = vector.broadcast %42 : vector<1x128xf32> to vector<8x128xf32>
    %44 = arith.addf %41, %43 : vector<8x128xf32>
    %cst_22 = arith.constant 0.000000e+00 : f32
    %45 = vector.broadcast %cst_22 : f32 to vector<8x128xf32>
    %46 = arith.cmpf ogt, %44, %45 : vector<8x128xf32>
    %cst_23 = arith.constant 0.000000e+00 : f32
    %47 = vector.broadcast %cst_23 : f32 to vector<8x128xf32>
    %48 = arith.minimumf %44, %47 : vector<8x128xf32>
    %49 = math.exp %48 : vector<8x128xf32>
    %cst_24 = arith.constant 1.000000e+00 : f32
    %50 = vector.broadcast %cst_24 : f32 to vector<8x128xf32>
    %51 = arith.subf %49, %50 : vector<8x128xf32>
    %52 = arith.select %46, %44, %51 : vector<8x128xi1>, vector<8x128xf32>
    %c0_25 = arith.constant 0 : index
    %c0_26 = arith.constant 0 : index
    %53 = vector.load %arg9[%c0_25, %c0_26] : memref<1x128xf32, #tpu.memory_space<vmem>>, vector<1x128xf32>
    %c0_27 = arith.constant 0 : index
    %c0_28 = arith.constant 0 : index
    %54 = vector.load %arg10[%c0_27, %c0_28] : memref<1x128xf32, #tpu.memory_space<vmem>>, vector<1x128xf32>
    %cst_29 = arith.constant dense<0.000000e+00> : vector<8xf32>
    %55 = vector.multi_reduction <add>, %52, %cst_29 [1] : vector<8x128xf32> to vector<8xf32>
    %56 = vector.shape_cast %55 : vector<8xf32> to vector<8x1xf32>
    %cst_30 = arith.constant 1.280000e+02 : f32
    %57 = vector.broadcast %cst_30 : f32 to vector<8x1xf32>
    %58 = arith.divf %56, %57 : vector<8x1xf32>
    %59 = vector.broadcast %58 : vector<8x1xf32> to vector<8x128xf32>
    %60 = arith.subf %52, %59 : vector<8x128xf32>
    %61 = arith.mulf %60, %60 : vector<8x128xf32>
    %cst_31 = arith.constant dense<0.000000e+00> : vector<8xf32>
    %62 = vector.multi_reduction <add>, %61, %cst_31 [1] : vector<8x128xf32> to vector<8xf32>
    %63 = vector.shape_cast %62 : vector<8xf32> to vector<8x1xf32>
    %cst_32 = arith.constant 1.280000e+02 : f32
    %64 = vector.broadcast %cst_32 : f32 to vector<8x1xf32>
    %65 = arith.divf %63, %64 : vector<8x1xf32>
    %66 = vector.broadcast %58 : vector<8x1xf32> to vector<8x128xf32>
    %67 = arith.subf %52, %66 : vector<8x128xf32>
    %cst_33 = arith.constant 9.99999974E-6 : f32
    %68 = vector.broadcast %cst_33 : f32 to vector<8x1xf32>
    %69 = arith.addf %65, %68 : vector<8x1xf32>
    %70 = math.rsqrt %69 : vector<8x1xf32>
    %71 = vector.broadcast %70 : vector<8x1xf32> to vector<8x128xf32>
    %72 = arith.mulf %67, %71 : vector<8x128xf32>
    %73 = vector.broadcast %53 : vector<1x128xf32> to vector<8x128xf32>
    %74 = arith.mulf %72, %73 : vector<8x128xf32>
    %75 = vector.broadcast %54 : vector<1x128xf32> to vector<8x128xf32>
    %76 = arith.addf %74, %75 : vector<8x128xf32>
    %cst_34 = arith.constant 0.000000e+00 : f32
    %77 = vector.broadcast %cst_34 : f32 to vector<8x160xf32>
    %cst_35 = arith.constant 0.000000e+00 : f32
    %78 = vector.broadcast %cst_35 : f32 to vector<8x160xf32>
    %c0_36 = arith.constant 0 : index
    %c0_37 = arith.constant 0 : index
    %c0_38 = arith.constant 0 : index
    %79 = vector.load %arg25[%c0_36, %c0_37, %c0_38] : memref<10x8x160xf32, #tpu.memory_space<vmem>>, vector<1x8x160xf32>
    %80 = vector.shape_cast %79 : vector<1x8x160xf32> to vector<8x160xf32>
    %81 = vector.shape_cast %77 : vector<8x160xf32> to vector<1x8x160xf32>
    tpu.vector_store %arg25[%c0_36, %c0_37, %c0_38], %81 {strides = array<i32>} : memref<10x8x160xf32, #tpu.memory_space<vmem>>, vector<1x8x160xf32>,
    %c9 = arith.constant 9 : index
    %c0_39 = arith.constant 0 : index
    %c0_40 = arith.constant 0 : index
    %82 = vector.load %arg25[%c9, %c0_39, %c0_40] : memref<10x8x160xf32, #tpu.memory_space<vmem>>, vector<1x8x160xf32>
    %83 = vector.shape_cast %82 : vector<1x8x160xf32> to vector<8x160xf32>
    %84 = vector.shape_cast %77 : vector<8x160xf32> to vector<1x8x160xf32>
    tpu.vector_store %arg25[%c9, %c0_39, %c0_40], %84 {strides = array<i32>} : memref<10x8x160xf32, #tpu.memory_space<vmem>>, vector<1x8x160xf32>,
    %c0_41 = arith.constant 0 : index
    %c0_42 = arith.constant 0 : index
    %c0_43 = arith.constant 0 : index
    %85 = vector.load %arg26[%c0_41, %c0_42, %c0_43] : memref<10x8x160xf32, #tpu.memory_space<vmem>>, vector<1x8x160xf32>
    %86 = vector.shape_cast %85 : vector<1x8x160xf32> to vector<8x160xf32>
    %87 = vector.shape_cast %77 : vector<8x160xf32> to vector<1x8x160xf32>
    tpu.vector_store %arg26[%c0_41, %c0_42, %c0_43], %87 {strides = array<i32>} : memref<10x8x160xf32, #tpu.memory_space<vmem>>, vector<1x8x160xf32>,
    %c9_44 = arith.constant 9 : index
    %c0_45 = arith.constant 0 : index
    %c0_46 = arith.constant 0 : index
    %88 = vector.load %arg26[%c9_44, %c0_45, %c0_46] : memref<10x8x160xf32, #tpu.memory_space<vmem>>, vector<1x8x160xf32>
    %89 = vector.shape_cast %88 : vector<1x8x160xf32> to vector<8x160xf32>
    %90 = vector.shape_cast %77 : vector<8x160xf32> to vector<1x8x160xf32>
    tpu.vector_store %arg26[%c9_44, %c0_45, %c0_46], %90 {strides = array<i32>} : memref<10x8x160xf32, #tpu.memory_space<vmem>>, vector<1x8x160xf32>,
    %c0_47 = arith.constant 0 : index
    %c0_48 = arith.constant 0 : index
    %c0_49 = arith.constant 0 : index
    %91 = vector.load %arg27[%c0_47, %c0_48, %c0_49] : memref<5x8x160xf32, #tpu.memory_space<vmem>>, vector<1x8x160xf32>
    %92 = vector.shape_cast %91 : vector<1x8x160xf32> to vector<8x160xf32>
    %93 = vector.shape_cast %78 : vector<8x160xf32> to vector<1x8x160xf32>
    tpu.vector_store %arg27[%c0_47, %c0_48, %c0_49], %93 {strides = array<i32>} : memref<5x8x160xf32, #tpu.memory_space<vmem>>, vector<1x8x160xf32>,
    %c4 = arith.constant 4 : index
    %c0_50 = arith.constant 0 : index
    %c0_51 = arith.constant 0 : index
    %94 = vector.load %arg27[%c4, %c0_50, %c0_51] : memref<5x8x160xf32, #tpu.memory_space<vmem>>, vector<1x8x160xf32>
    %95 = vector.shape_cast %94 : vector<1x8x160xf32> to vector<8x160xf32>
    %96 = vector.shape_cast %78 : vector<8x160xf32> to vector<1x8x160xf32>
    tpu.vector_store %arg27[%c4, %c0_50, %c0_51], %96 {strides = array<i32>} : memref<5x8x160xf32, #tpu.memory_space<vmem>>, vector<1x8x160xf32>,
    %c0_52 = arith.constant 0 : index
    %c0_53 = arith.constant 0 : index
    %c0_54 = arith.constant 0 : index
    %97 = vector.load %arg28[%c0_52, %c0_53, %c0_54] : memref<5x8x160xf32, #tpu.memory_space<vmem>>, vector<1x8x160xf32>
    %98 = vector.shape_cast %97 : vector<1x8x160xf32> to vector<8x160xf32>
    %99 = vector.shape_cast %78 : vector<8x160xf32> to vector<1x8x160xf32>
    tpu.vector_store %arg28[%c0_52, %c0_53, %c0_54], %99 {strides = array<i32>} : memref<5x8x160xf32, #tpu.memory_space<vmem>>, vector<1x8x160xf32>,
    %c4_55 = arith.constant 4 : index
    %c0_56 = arith.constant 0 : index
    %c0_57 = arith.constant 0 : index
    %100 = vector.load %arg28[%c4_55, %c0_56, %c0_57] : memref<5x8x160xf32, #tpu.memory_space<vmem>>, vector<1x8x160xf32>
    %101 = vector.shape_cast %100 : vector<1x8x160xf32> to vector<8x160xf32>
    %102 = vector.shape_cast %78 : vector<8x160xf32> to vector<1x8x160xf32>
    tpu.vector_store %arg28[%c4_55, %c0_56, %c0_57], %102 {strides = array<i32>} : memref<5x8x160xf32, #tpu.memory_space<vmem>>, vector<1x8x160xf32>,
    %c0_58 = arith.constant 0 : index
    %c0_59 = arith.constant 0 : index
    %c0_60 = arith.constant 0 : index
    %c0_61 = arith.constant 0 : index
    %103 = vector.load %arg2[%c0_58, %c0_59, %c0_60, %c0_61] : memref<1x20x8x40xf32, #tpu.memory_space<vmem>>, vector<1x16x8x40xf32>
    %104 = vector.shape_cast %103 : vector<1x16x8x40xf32> to vector<16x8x40xf32>
    %105 = vector.shape_cast %104 : vector<16x8x40xf32> to vector<128x40xf32>
    %106 = arith.truncf %105 : vector<128x40xf32> to vector<128x40xbf16>
    %c0_62 = arith.constant 0 : index
    %c0_63 = arith.constant 0 : index
    %c0_64 = arith.constant 0 : index
    %107 = vector.load %arg11[%c0_62, %c0_63, %c0_64] : memref<5x40x160xbf16, #tpu.memory_space<vmem>>, vector<1x40x160xbf16>
    %108 = vector.shape_cast %107 : vector<1x40x160xbf16> to vector<40x160xbf16>
    %cst_65 = arith.constant dense<0.000000e+00> : vector<128x160xf32>
    %109 = tpu.matmul %106, %108, %cst_65 {dimension_numbers = #tpu.dot_dimension_numbers<[1], [0], [0], [1], [0, 0, 1, 1], [], []>} : vector<128x40xbf16>, vector<40x160xbf16>, vector<128x160xf32> -> vector<128x160xf32>
    %c0_66 = arith.constant 0 : index
    %c1 = arith.constant 1 : index
    %c0_67 = arith.constant 0 : index
    %c0_68 = arith.constant 0 : index
    %110 = vector.load %arg2[%c0_66, %c1, %c0_67, %c0_68] : memref<1x20x8x40xf32, #tpu.memory_space<vmem>>, vector<1x16x8x40xf32>
    %111 = vector.shape_cast %110 : vector<1x16x8x40xf32> to vector<16x8x40xf32>
    %112 = vector.shape_cast %111 : vector<16x8x40xf32> to vector<128x40xf32>
    %113 = arith.truncf %112 : vector<128x40xf32> to vector<128x40xbf16>
    %c1_69 = arith.constant 1 : index
    %c0_70 = arith.constant 0 : index
    %c0_71 = arith.constant 0 : index
    %114 = vector.load %arg11[%c1_69, %c0_70, %c0_71] : memref<5x40x160xbf16, #tpu.memory_space<vmem>>, vector<1x40x160xbf16>
    %115 = vector.shape_cast %114 : vector<1x40x160xbf16> to vector<40x160xbf16>
    %cst_72 = arith.constant dense<0.000000e+00> : vector<128x160xf32>
    %116 = tpu.matmul %113, %115, %cst_72 {dimension_numbers = #tpu.dot_dimension_numbers<[1], [0], [0], [1], [0, 0, 1, 1], [], []>} : vector<128x40xbf16>, vector<40x160xbf16>, vector<128x160xf32> -> vector<128x160xf32>
    %117 = arith.addf %109, %116 : vector<128x160xf32>
    %c0_73 = arith.constant 0 : index
    %c2 = arith.constant 2 : index
    %c0_74 = arith.constant 0 : index
    %c0_75 = arith.constant 0 : index
    %118 = vector.load %arg2[%c0_73, %c2, %c0_74, %c0_75] : memref<1x20x8x40xf32, #tpu.memory_space<vmem>>, vector<1x16x8x40xf32>
    %119 = vector.shape_cast %118 : vector<1x16x8x40xf32> to vector<16x8x40xf32>
    %120 = vector.shape_cast %119 : vector<16x8x40xf32> to vector<128x40xf32>
    %121 = arith.truncf %120 : vector<128x40xf32> to vector<128x40xbf16>
    %c2_76 = arith.constant 2 : index
    %c0_77 = arith.constant 0 : index
    %c0_78 = arith.constant 0 : index
    %122 = vector.load %arg11[%c2_76, %c0_77, %c0_78] : memref<5x40x160xbf16, #tpu.memory_space<vmem>>, vector<1x40x160xbf16>
    %123 = vector.shape_cast %122 : vector<1x40x160xbf16> to vector<40x160xbf16>
    %cst_79 = arith.constant dense<0.000000e+00> : vector<128x160xf32>
    %124 = tpu.matmul %121, %123, %cst_79 {dimension_numbers = #tpu.dot_dimension_numbers<[1], [0], [0], [1], [0, 0, 1, 1], [], []>} : vector<128x40xbf16>, vector<40x160xbf16>, vector<128x160xf32> -> vector<128x160xf32>
    %125 = arith.addf %117, %124 : vector<128x160xf32>
    %c0_80 = arith.constant 0 : index
    %c3 = arith.constant 3 : index
    %c0_81 = arith.constant 0 : index
    %c0_82 = arith.constant 0 : index
    %126 = vector.load %arg2[%c0_80, %c3, %c0_81, %c0_82] : memref<1x20x8x40xf32, #tpu.memory_space<vmem>>, vector<1x16x8x40xf32>
    %127 = vector.shape_cast %126 : vector<1x16x8x40xf32> to vector<16x8x40xf32>
    %128 = vector.shape_cast %127 : vector<16x8x40xf32> to vector<128x40xf32>
    %129 = arith.truncf %128 : vector<128x40xf32> to vector<128x40xbf16>
    %c3_83 = arith.constant 3 : index
    %c0_84 = arith.constant 0 : index
    %c0_85 = arith.constant 0 : index
    %130 = vector.load %arg11[%c3_83, %c0_84, %c0_85] : memref<5x40x160xbf16, #tpu.memory_space<vmem>>, vector<1x40x160xbf16>
    %131 = vector.shape_cast %130 : vector<1x40x160xbf16> to vector<40x160xbf16>
    %cst_86 = arith.constant dense<0.000000e+00> : vector<128x160xf32>
    %132 = tpu.matmul %129, %131, %cst_86 {dimension_numbers = #tpu.dot_dimension_numbers<[1], [0], [0], [1], [0, 0, 1, 1], [], []>} : vector<128x40xbf16>, vector<40x160xbf16>, vector<128x160xf32> -> vector<128x160xf32>
    %133 = arith.addf %125, %132 : vector<128x160xf32>
    %c0_87 = arith.constant 0 : index
    %c4_88 = arith.constant 4 : index
    %c0_89 = arith.constant 0 : index
    %c0_90 = arith.constant 0 : index
    %134 = vector.load %arg2[%c0_87, %c4_88, %c0_89, %c0_90] : memref<1x20x8x40xf32, #tpu.memory_space<vmem>>, vector<1x16x8x40xf32>
    %135 = vector.shape_cast %134 : vector<1x16x8x40xf32> to vector<16x8x40xf32>
    %136 = vector.shape_cast %135 : vector<16x8x40xf32> to vector<128x40xf32>
    %137 = arith.truncf %136 : vector<128x40xf32> to vector<128x40xbf16>
    %c4_91 = arith.constant 4 : index
    %c0_92 = arith.constant 0 : index
    %c0_93 = arith.constant 0 : index
    %138 = vector.load %arg11[%c4_91, %c0_92, %c0_93] : memref<5x40x160xbf16, #tpu.memory_space<vmem>>, vector<1x40x160xbf16>
    %139 = vector.shape_cast %138 : vector<1x40x160xbf16> to vector<40x160xbf16>
    %cst_94 = arith.constant dense<0.000000e+00> : vector<128x160xf32>
    %140 = tpu.matmul %137, %139, %cst_94 {dimension_numbers = #tpu.dot_dimension_numbers<[1], [0], [0], [1], [0, 0, 1, 1], [], []>} : vector<128x40xbf16>, vector<40x160xbf16>, vector<128x160xf32> -> vector<128x160xf32>
    %141 = arith.addf %133, %140 : vector<128x160xf32>
    %c0_95 = arith.constant 0 : index
    %c0_96 = arith.constant 0 : index
    %142 = vector.load %arg12[%c0_95, %c0_96] : memref<1x160xf32, #tpu.memory_space<vmem>>, vector<1x160xf32>
    %143 = vector.broadcast %142 : vector<1x160xf32> to vector<128x160xf32>
    %144 = arith.addf %141, %143 : vector<128x160xf32>
    %cst_97 = arith.constant 0.000000e+00 : f32
    %145 = vector.broadcast %cst_97 : f32 to vector<128x160xf32>
    %146 = arith.cmpf ogt, %144, %145 : vector<128x160xf32>
    %cst_98 = arith.constant 0.000000e+00 : f32
    %147 = vector.broadcast %cst_98 : f32 to vector<128x160xf32>
    %148 = arith.minimumf %144, %147 : vector<128x160xf32>
    %149 = math.exp %148 : vector<128x160xf32>
    %cst_99 = arith.constant 1.000000e+00 : f32
    %150 = vector.broadcast %cst_99 : f32 to vector<128x160xf32>
    %151 = arith.subf %149, %150 : vector<128x160xf32>
    %152 = arith.select %146, %144, %151 : vector<128x160xi1>, vector<128x160xf32>
    %153 = vector.shape_cast %152 : vector<128x160xf32> to vector<8x2x8x160xf32>
    %154 = vector.extract_strided_slice %153 {offsets = [0, 0, 0, 0], sizes = [8, 1, 8, 160], strides = [1, 1, 1, 1]} : vector<8x2x8x160xf32> to vector<8x1x8x160xf32>
    %155 = vector.shape_cast %154 : vector<8x1x8x160xf32> to vector<8x8x160xf32>
    %c1_100 = arith.constant 1 : index
    %c0_101 = arith.constant 0 : index
    %c0_102 = arith.constant 0 : index
    %156 = vector.load %arg25[%c1_100, %c0_101, %c0_102] : memref<10x8x160xf32, #tpu.memory_space<vmem>>, vector<8x8x160xf32>
    tpu.vector_store %arg25[%c1_100, %c0_101, %c0_102], %155 {strides = array<i32>} : memref<10x8x160xf32, #tpu.memory_space<vmem>>, vector<8x8x160xf32>,
    %157 = vector.extract_strided_slice %153 {offsets = [0, 1, 0, 0], sizes = [8, 1, 8, 160], strides = [1, 1, 1, 1]} : vector<8x2x8x160xf32> to vector<8x1x8x160xf32>
    %158 = vector.shape_cast %157 : vector<8x1x8x160xf32> to vector<8x8x160xf32>
    %c1_103 = arith.constant 1 : index
    %c0_104 = arith.constant 0 : index
    %c0_105 = arith.constant 0 : index
    %159 = vector.load %arg26[%c1_103, %c0_104, %c0_105] : memref<10x8x160xf32, #tpu.memory_space<vmem>>, vector<8x8x160xf32>
    tpu.vector_store %arg26[%c1_103, %c0_104, %c0_105], %158 {strides = array<i32>} : memref<10x8x160xf32, #tpu.memory_space<vmem>>, vector<8x8x160xf32>,
    %c0_106 = arith.constant 0 : index
    %c0_107 = arith.constant 0 : index
    %c0_108 = arith.constant 0 : index
    %160 = vector.load %arg25[%c0_106, %c0_107, %c0_108] : memref<10x8x160xf32, #tpu.memory_space<vmem>>, vector<8x8x160xf32>
    %161 = vector.shape_cast %160 : vector<8x8x160xf32> to vector<64x160xf32>
    %162 = arith.truncf %161 : vector<64x160xf32> to vector<64x160xbf16>
    %c0_109 = arith.constant 0 : index
    %c0_110 = arith.constant 0 : index
    %c0_111 = arith.constant 0 : index
    %163 = vector.load %arg13[%c0_109, %c0_110, %c0_111] : memref<5x160x160xbf16, #tpu.memory_space<vmem>>, vector<1x160x160xbf16>
    %164 = vector.shape_cast %163 : vector<1x160x160xbf16> to vector<160x160xbf16>
    %cst_112 = arith.constant dense<0.000000e+00> : vector<64x160xf32>
    %165 = tpu.matmul %162, %164, %cst_112 {dimension_numbers = #tpu.dot_dimension_numbers<[1], [0], [0], [1], [0, 0, 1, 1], [], []>} : vector<64x160xbf16>, vector<160x160xbf16>, vector<64x160xf32> -> vector<64x160xf32>
    %c0_113 = arith.constant 0 : index
    %c0_114 = arith.constant 0 : index
    %c0_115 = arith.constant 0 : index
    %166 = vector.load %arg26[%c0_113, %c0_114, %c0_115] : memref<10x8x160xf32, #tpu.memory_space<vmem>>, vector<8x8x160xf32>
    %167 = vector.shape_cast %166 : vector<8x8x160xf32> to vector<64x160xf32>
    %168 = arith.truncf %167 : vector<64x160xf32> to vector<64x160xbf16>
    %c1_116 = arith.constant 1 : index
    %c0_117 = arith.constant 0 : index
    %c0_118 = arith.constant 0 : index
    %169 = vector.load %arg13[%c1_116, %c0_117, %c0_118] : memref<5x160x160xbf16, #tpu.memory_space<vmem>>, vector<1x160x160xbf16>
    %170 = vector.shape_cast %169 : vector<1x160x160xbf16> to vector<160x160xbf16>
    %cst_119 = arith.constant dense<0.000000e+00> : vector<64x160xf32>
    %171 = tpu.matmul %168, %170, %cst_119 {dimension_numbers = #tpu.dot_dimension_numbers<[1], [0], [0], [1], [0, 0, 1, 1], [], []>} : vector<64x160xbf16>, vector<160x160xbf16>, vector<64x160xf32> -> vector<64x160xf32>
    %172 = arith.addf %165, %171 : vector<64x160xf32>
    %c1_120 = arith.constant 1 : index
    %c0_121 = arith.constant 0 : index
    %c0_122 = arith.constant 0 : index
    %173 = vector.load %arg25[%c1_120, %c0_121, %c0_122] : memref<10x8x160xf32, #tpu.memory_space<vmem>>, vector<8x8x160xf32>
    %174 = vector.shape_cast %173 : vector<8x8x160xf32> to vector<64x160xf32>
    %175 = arith.truncf %174 : vector<64x160xf32> to vector<64x160xbf16>
    %c2_123 = arith.constant 2 : index
    %c0_124 = arith.constant 0 : index
    %c0_125 = arith.constant 0 : index
    %176 = vector.load %arg13[%c2_123, %c0_124, %c0_125] : memref<5x160x160xbf16, #tpu.memory_space<vmem>>, vector<1x160x160xbf16>
    %177 = vector.shape_cast %176 : vector<1x160x160xbf16> to vector<160x160xbf16>
    %cst_126 = arith.constant dense<0.000000e+00> : vector<64x160xf32>
    %178 = tpu.matmul %175, %177, %cst_126 {dimension_numbers = #tpu.dot_dimension_numbers<[1], [0], [0], [1], [0, 0, 1, 1], [], []>} : vector<64x160xbf16>, vector<160x160xbf16>, vector<64x160xf32> -> vector<64x160xf32>
    %179 = arith.addf %172, %178 : vector<64x160xf32>
    %c1_127 = arith.constant 1 : index
    %c0_128 = arith.constant 0 : index
    %c0_129 = arith.constant 0 : index
    %180 = vector.load %arg26[%c1_127, %c0_128, %c0_129] : memref<10x8x160xf32, #tpu.memory_space<vmem>>, vector<8x8x160xf32>
    %181 = vector.shape_cast %180 : vector<8x8x160xf32> to vector<64x160xf32>
    %182 = arith.truncf %181 : vector<64x160xf32> to vector<64x160xbf16>
    %c3_130 = arith.constant 3 : index
    %c0_131 = arith.constant 0 : index
    %c0_132 = arith.constant 0 : index
    %183 = vector.load %arg13[%c3_130, %c0_131, %c0_132] : memref<5x160x160xbf16, #tpu.memory_space<vmem>>, vector<1x160x160xbf16>
    %184 = vector.shape_cast %183 : vector<1x160x160xbf16> to vector<160x160xbf16>
    %cst_133 = arith.constant dense<0.000000e+00> : vector<64x160xf32>
    %185 = tpu.matmul %182, %184, %cst_133 {dimension_numbers = #tpu.dot_dimension_numbers<[1], [0], [0], [1], [0, 0, 1, 1], [], []>} : vector<64x160xbf16>, vector<160x160xbf16>, vector<64x160xf32> -> vector<64x160xf32>
    %186 = arith.addf %179, %185 : vector<64x160xf32>
    %c2_134 = arith.constant 2 : index
    %c0_135 = arith.constant 0 : index
    %c0_136 = arith.constant 0 : index
    %187 = vector.load %arg25[%c2_134, %c0_135, %c0_136] : memref<10x8x160xf32, #tpu.memory_space<vmem>>, vector<8x8x160xf32>
    %188 = vector.shape_cast %187 : vector<8x8x160xf32> to vector<64x160xf32>
    %189 = arith.truncf %188 : vector<64x160xf32> to vector<64x160xbf16>
    %c4_137 = arith.constant 4 : index
    %c0_138 = arith.constant 0 : index
    %c0_139 = arith.constant 0 : index
    %190 = vector.load %arg13[%c4_137, %c0_138, %c0_139] : memref<5x160x160xbf16, #tpu.memory_space<vmem>>, vector<1x160x160xbf16>
    %191 = vector.shape_cast %190 : vector<1x160x160xbf16> to vector<160x160xbf16>
    %cst_140 = arith.constant dense<0.000000e+00> : vector<64x160xf32>
    %192 = tpu.matmul %189, %191, %cst_140 {dimension_numbers = #tpu.dot_dimension_numbers<[1], [0], [0], [1], [0, 0, 1, 1], [], []>} : vector<64x160xbf16>, vector<160x160xbf16>, vector<64x160xf32> -> vector<64x160xf32>
    %193 = arith.addf %186, %192 : vector<64x160xf32>
    %c0_141 = arith.constant 0 : index
    %c0_142 = arith.constant 0 : index
    %194 = vector.load %arg14[%c0_141, %c0_142] : memref<1x160xf32, #tpu.memory_space<vmem>>, vector<1x160xf32>
    %195 = vector.broadcast %194 : vector<1x160xf32> to vector<64x160xf32>
    %196 = arith.addf %193, %195 : vector<64x160xf32>
    %cst_143 = arith.constant 0.000000e+00 : f32
    %197 = vector.broadcast %cst_143 : f32 to vector<64x160xf32>
    %198 = arith.cmpf ogt, %196, %197 : vector<64x160xf32>
    %cst_144 = arith.constant 0.000000e+00 : f32
    %199 = vector.broadcast %cst_144 : f32 to vector<64x160xf32>
    %200 = arith.minimumf %196, %199 : vector<64x160xf32>
    %201 = math.exp %200 : vector<64x160xf32>
    %cst_145 = arith.constant 1.000000e+00 : f32
    %202 = vector.broadcast %cst_145 : f32 to vector<64x160xf32>
    %203 = arith.subf %201, %202 : vector<64x160xf32>
    %204 = arith.select %198, %196, %203 : vector<64x160xi1>, vector<64x160xf32>
    %205 = vector.shape_cast %204 : vector<64x160xf32> to vector<4x2x8x160xf32>
    %206 = vector.extract_strided_slice %205 {offsets = [0, 0, 0, 0], sizes = [4, 1, 8, 160], strides = [1, 1, 1, 1]} : vector<4x2x8x160xf32> to vector<4x1x8x160xf32>
    %207 = vector.shape_cast %206 : vector<4x1x8x160xf32> to vector<4x8x160xf32>
    %c0_146 = arith.constant 0 : index
    %c0_147 = arith.constant 0 : index
    %c0_148 = arith.constant 0 : index
    %208 = vector.load %arg28[%c0_146, %c0_147, %c0_148] : memref<5x8x160xf32, #tpu.memory_space<vmem>>, vector<4x8x160xf32>
    tpu.vector_store %arg28[%c0_146, %c0_147, %c0_148], %207 {strides = array<i32>} : memref<5x8x160xf32, #tpu.memory_space<vmem>>, vector<4x8x160xf32>,
    %209 = vector.extract_strided_slice %205 {offsets = [0, 1, 0, 0], sizes = [4, 1, 8, 160], strides = [1, 1, 1, 1]} : vector<4x2x8x160xf32> to vector<4x1x8x160xf32>
    %210 = vector.shape_cast %209 : vector<4x1x8x160xf32> to vector<4x8x160xf32>
    %c1_149 = arith.constant 1 : index
    %c0_150 = arith.constant 0 : index
    %c0_151 = arith.constant 0 : index
    %211 = vector.load %arg27[%c1_149, %c0_150, %c0_151] : memref<5x8x160xf32, #tpu.memory_space<vmem>>, vector<4x8x160xf32>
    tpu.vector_store %arg27[%c1_149, %c0_150, %c0_151], %210 {strides = array<i32>} : memref<5x8x160xf32, #tpu.memory_space<vmem>>, vector<4x8x160xf32>,
    %c0_152 = arith.constant 0 : index
    %c0_153 = arith.constant 0 : index
    %c0_154 = arith.constant 0 : index
    %212 = vector.load %arg27[%c0_152, %c0_153, %c0_154] : memref<5x8x160xf32, #tpu.memory_space<vmem>>, vector<4x8x160xf32>
    %213 = vector.shape_cast %212 : vector<4x8x160xf32> to vector<32x160xf32>
    %214 = arith.truncf %213 : vector<32x160xf32> to vector<32x160xbf16>
    %c0_155 = arith.constant 0 : index
    %c0_156 = arith.constant 0 : index
    %c0_157 = arith.constant 0 : index
    %215 = vector.load %arg15[%c0_155, %c0_156, %c0_157] : memref<3x160x128xbf16, #tpu.memory_space<vmem>>, vector<1x160x128xbf16>
    %216 = vector.shape_cast %215 : vector<1x160x128xbf16> to vector<160x128xbf16>
    %cst_158 = arith.constant dense<0.000000e+00> : vector<32x128xf32>
    %217 = tpu.matmul %214, %216, %cst_158 {dimension_numbers = #tpu.dot_dimension_numbers<[1], [0], [0], [1], [0, 0, 1, 1], [], []>} : vector<32x160xbf16>, vector<160x128xbf16>, vector<32x128xf32> -> vector<32x128xf32>
    %c0_159 = arith.constant 0 : index
    %c0_160 = arith.constant 0 : index
    %c0_161 = arith.constant 0 : index
    %218 = vector.load %arg28[%c0_159, %c0_160, %c0_161] : memref<5x8x160xf32, #tpu.memory_space<vmem>>, vector<4x8x160xf32>
    %219 = vector.shape_cast %218 : vector<4x8x160xf32> to vector<32x160xf32>
    %220 = arith.truncf %219 : vector<32x160xf32> to vector<32x160xbf16>
    %c1_162 = arith.constant 1 : index
    %c0_163 = arith.constant 0 : index
    %c0_164 = arith.constant 0 : index
    %221 = vector.load %arg15[%c1_162, %c0_163, %c0_164] : memref<3x160x128xbf16, #tpu.memory_space<vmem>>, vector<1x160x128xbf16>
    %222 = vector.shape_cast %221 : vector<1x160x128xbf16> to vector<160x128xbf16>
    %cst_165 = arith.constant dense<0.000000e+00> : vector<32x128xf32>
    %223 = tpu.matmul %220, %222, %cst_165 {dimension_numbers = #tpu.dot_dimension_numbers<[1], [0], [0], [1], [0, 0, 1, 1], [], []>} : vector<32x160xbf16>, vector<160x128xbf16>, vector<32x128xf32> -> vector<32x128xf32>
    %224 = arith.addf %217, %223 : vector<32x128xf32>
    %c1_166 = arith.constant 1 : index
    %c0_167 = arith.constant 0 : index
    %c0_168 = arith.constant 0 : index
    %225 = vector.load %arg27[%c1_166, %c0_167, %c0_168] : memref<5x8x160xf32, #tpu.memory_space<vmem>>, vector<4x8x160xf32>
    %226 = vector.shape_cast %225 : vector<4x8x160xf32> to vector<32x160xf32>
    %227 = arith.truncf %226 : vector<32x160xf32> to vector<32x160xbf16>
    %c2_169 = arith.constant 2 : index
    %c0_170 = arith.constant 0 : index
    %c0_171 = arith.constant 0 : index
    %228 = vector.load %arg15[%c2_169, %c0_170, %c0_171] : memref<3x160x128xbf16, #tpu.memory_space<vmem>>, vector<1x160x128xbf16>
    %229 = vector.shape_cast %228 : vector<1x160x128xbf16> to vector<160x128xbf16>
    %cst_172 = arith.constant dense<0.000000e+00> : vector<32x128xf32>
    %230 = tpu.matmul %227, %229, %cst_172 {dimension_numbers = #tpu.dot_dimension_numbers<[1], [0], [0], [1], [0, 0, 1, 1], [], []>} : vector<32x160xbf16>, vector<160x128xbf16>, vector<32x128xf32> -> vector<32x128xf32>
    %231 = arith.addf %224, %230 : vector<32x128xf32>
    %c0_173 = arith.constant 0 : index
    %c0_174 = arith.constant 0 : index
    %232 = vector.load %arg16[%c0_173, %c0_174] : memref<1x128xf32, #tpu.memory_space<vmem>>, vector<1x128xf32>
    %233 = vector.broadcast %232 : vector<1x128xf32> to vector<32x128xf32>
    %234 = arith.addf %231, %233 : vector<32x128xf32>
    %cst_175 = arith.constant 0.000000e+00 : f32
    %235 = vector.broadcast %cst_175 : f32 to vector<32x128xf32>
    %236 = arith.cmpf ogt, %234, %235 : vector<32x128xf32>
    %cst_176 = arith.constant 0.000000e+00 : f32
    %237 = vector.broadcast %cst_176 : f32 to vector<32x128xf32>
    %238 = arith.minimumf %234, %237 : vector<32x128xf32>
    %239 = math.exp %238 : vector<32x128xf32>
    %cst_177 = arith.constant 1.000000e+00 : f32
    %240 = vector.broadcast %cst_177 : f32 to vector<32x128xf32>
    %241 = arith.subf %239, %240 : vector<32x128xf32>
    %242 = arith.select %236, %234, %241 : vector<32x128xi1>, vector<32x128xf32>
    %cst_178 = arith.constant 0.000000e+00 : f32
    %243 = vector.broadcast %cst_178 : f32 to vector<8x128xf32>
    %c0_179 = arith.constant 0 : index
    %c0_180 = arith.constant 0 : index
    %244 = vector.load %arg18[%c0_179, %c0_180] : memref<1x128xf32, #tpu.memory_space<vmem>>, vector<1x128xf32>
    %245 = vector.broadcast %244 : vector<1x128xf32> to vector<8x128xf32>
    %246 = arith.addf %243, %245 : vector<8x128xf32>
    %247 = vector.extract_strided_slice %242 {offsets = [0, 0], sizes = [8, 128], strides = [1, 1]} : vector<32x128xf32> to vector<8x128xf32>
    %248 = arith.truncf %247 : vector<8x128xf32> to vector<8x128xbf16>
    %c0_181 = arith.constant 0 : index
    %c0_182 = arith.constant 0 : index
    %c0_183 = arith.constant 0 : index
    %249 = vector.load %arg17[%c0_181, %c0_182, %c0_183] : memref<4x128x128xbf16, #tpu.memory_space<vmem>>, vector<1x128x128xbf16>
    %250 = vector.shape_cast %249 : vector<1x128x128xbf16> to vector<128x128xbf16>
    %cst_184 = arith.constant dense<0.000000e+00> : vector<8x128xf32>
    %251 = tpu.matmul %248, %250, %cst_184 {dimension_numbers = #tpu.dot_dimension_numbers<[1], [0], [0], [1], [0, 0, 1, 1], [], []>} : vector<8x128xbf16>, vector<128x128xbf16>, vector<8x128xf32> -> vector<8x128xf32>
    %252 = arith.addf %246, %251 : vector<8x128xf32>
    %253 = vector.extract_strided_slice %242 {offsets = [8, 0], sizes = [8, 128], strides = [1, 1]} : vector<32x128xf32> to vector<8x128xf32>
    %254 = arith.truncf %253 : vector<8x128xf32> to vector<8x128xbf16>
    %c1_185 = arith.constant 1 : index
    %c0_186 = arith.constant 0 : index
    %c0_187 = arith.constant 0 : index
    %255 = vector.load %arg17[%c1_185, %c0_186, %c0_187] : memref<4x128x128xbf16, #tpu.memory_space<vmem>>, vector<1x128x128xbf16>
    %256 = vector.shape_cast %255 : vector<1x128x128xbf16> to vector<128x128xbf16>
    %cst_188 = arith.constant dense<0.000000e+00> : vector<8x128xf32>
    %257 = tpu.matmul %254, %256, %cst_188 {dimension_numbers = #tpu.dot_dimension_numbers<[1], [0], [0], [1], [0, 0, 1, 1], [], []>} : vector<8x128xbf16>, vector<128x128xbf16>, vector<8x128xf32> -> vector<8x128xf32>
    %258 = arith.addf %252, %257 : vector<8x128xf32>
    %259 = vector.extract_strided_slice %242 {offsets = [16, 0], sizes = [8, 128], strides = [1, 1]} : vector<32x128xf32> to vector<8x128xf32>
    %260 = arith.truncf %259 : vector<8x128xf32> to vector<8x128xbf16>
    %c2_189 = arith.constant 2 : index
    %c0_190 = arith.constant 0 : index
    %c0_191 = arith.constant 0 : index
    %261 = vector.load %arg17[%c2_189, %c0_190, %c0_191] : memref<4x128x128xbf16, #tpu.memory_space<vmem>>, vector<1x128x128xbf16>
    %262 = vector.shape_cast %261 : vector<1x128x128xbf16> to vector<128x128xbf16>
    %cst_192 = arith.constant dense<0.000000e+00> : vector<8x128xf32>
    %263 = tpu.matmul %260, %262, %cst_192 {dimension_numbers = #tpu.dot_dimension_numbers<[1], [0], [0], [1], [0, 0, 1, 1], [], []>} : vector<8x128xbf16>, vector<128x128xbf16>, vector<8x128xf32> -> vector<8x128xf32>
    %264 = arith.addf %258, %263 : vector<8x128xf32>
    %265 = vector.extract_strided_slice %242 {offsets = [24, 0], sizes = [8, 128], strides = [1, 1]} : vector<32x128xf32> to vector<8x128xf32>
    %266 = arith.truncf %265 : vector<8x128xf32> to vector<8x128xbf16>
    %c3_193 = arith.constant 3 : index
    %c0_194 = arith.constant 0 : index
    %c0_195 = arith.constant 0 : index
    %267 = vector.load %arg17[%c3_193, %c0_194, %c0_195] : memref<4x128x128xbf16, #tpu.memory_space<vmem>>, vector<1x128x128xbf16>
    %268 = vector.shape_cast %267 : vector<1x128x128xbf16> to vector<128x128xbf16>
    %cst_196 = arith.constant dense<0.000000e+00> : vector<8x128xf32>
    %269 = tpu.matmul %266, %268, %cst_196 {dimension_numbers = #tpu.dot_dimension_numbers<[1], [0], [0], [1], [0, 0, 1, 1], [], []>} : vector<8x128xbf16>, vector<128x128xbf16>, vector<8x128xf32> -> vector<8x128xf32>
    %270 = arith.addf %264, %269 : vector<8x128xf32>
    %c0_197 = arith.constant 0 : index
    %c0_198 = arith.constant 0 : index
    %271 = vector.load %arg19[%c0_197, %c0_198] : memref<128x128xbf16, #tpu.memory_space<vmem>>, vector<128x128xbf16>
    %272 = arith.truncf %76 : vector<8x128xf32> to vector<8x128xbf16>
    %cst_199 = arith.constant dense<0.000000e+00> : vector<8x128xf32>
    %273 = tpu.matmul %272, %271, %cst_199 {dimension_numbers = #tpu.dot_dimension_numbers<[1], [0], [0], [1], [0, 0, 1, 1], [], []>} : vector<8x128xbf16>, vector<128x128xbf16>, vector<8x128xf32> -> vector<8x128xf32>
    %c0_200 = arith.constant 0 : index
    %c0_201 = arith.constant 0 : index
    %274 = vector.load %arg20[%c0_200, %c0_201] : memref<128x128xbf16, #tpu.memory_space<vmem>>, vector<128x128xbf16>
    %275 = arith.truncf %270 : vector<8x128xf32> to vector<8x128xbf16>
    %cst_202 = arith.constant dense<0.000000e+00> : vector<8x128xf32>
    %276 = tpu.matmul %275, %274, %cst_202 {dimension_numbers = #tpu.dot_dimension_numbers<[1], [0], [0], [1], [0, 0, 1, 1], [], []>} : vector<8x128xbf16>, vector<128x128xbf16>, vector<8x128xf32> -> vector<8x128xf32>
    %277 = arith.addf %273, %276 : vector<8x128xf32>
    %c0_203 = arith.constant 0 : index
    %c0_204 = arith.constant 0 : index
    %278 = vector.load %arg21[%c0_203, %c0_204] : memref<1x128xf32, #tpu.memory_space<vmem>>, vector<1x128xf32>
    %279 = vector.broadcast %278 : vector<1x128xf32> to vector<8x128xf32>
    %280 = arith.addf %277, %279 : vector<8x128xf32>
    %cst_205 = arith.constant 0.000000e+00 : f32
    %281 = vector.broadcast %cst_205 : f32 to vector<8x128xf32>
    %282 = arith.cmpf ogt, %280, %281 : vector<8x128xf32>
    %cst_206 = arith.constant 0.000000e+00 : f32
    %283 = vector.broadcast %cst_206 : f32 to vector<8x128xf32>
    %284 = arith.minimumf %280, %283 : vector<8x128xf32>
    %285 = math.exp %284 : vector<8x128xf32>
    %cst_207 = arith.constant 1.000000e+00 : f32
    %286 = vector.broadcast %cst_207 : f32 to vector<8x128xf32>
    %287 = arith.subf %285, %286 : vector<8x128xf32>
    %288 = arith.select %282, %280, %287 : vector<8x128xi1>, vector<8x128xf32>
    %c0_208 = arith.constant 0 : index
    %c0_209 = arith.constant 0 : index
    %289 = vector.load %arg22[%c0_208, %c0_209] : memref<1x128xf32, #tpu.memory_space<vmem>>, vector<1x128xf32>
    %290 = vector.broadcast %289 : vector<1x128xf32> to vector<8x128xf32>
    %291 = arith.mulf %288, %290 : vector<8x128xf32>
    %cst_210 = arith.constant dense<0.000000e+00> : vector<8xf32>
    %292 = vector.multi_reduction <add>, %291, %cst_210 [1] : vector<8x128xf32> to vector<8xf32>
    %293 = vector.shape_cast %292 : vector<8xf32> to vector<8x1xf32>
    %c0_211 = arith.constant 0 : index
    %c0_212 = arith.constant 0 : index
    %294 = vector.load %arg23[%c0_211, %c0_212] : memref<1x1xf32, #tpu.memory_space<vmem>>, vector<1x1xf32>
    %295 = vector.broadcast %294 : vector<1x1xf32> to vector<8x1xf32>
    %296 = arith.addf %293, %295 : vector<8x1xf32>
    %c0_213 = arith.constant 0 : index
    %c0_214 = arith.constant 0 : index
    %297 = vector.load %arg24[%c0_213, %c0_214] : memref<8x1xf32, #tpu.memory_space<vmem>>, vector<8x1xf32>
    tpu.vector_store %arg24[%c0_213, %c0_214], %296 {strides = array<i32>} : memref<8x1xf32, #tpu.memory_space<vmem>>, vector<8x1xf32>,
    return
  }
  func.func @transform_0(%arg0: i32) -> (i32, i32) {
    %c0_i32 = arith.constant 0 : i32
    %c0_i32_0 = arith.constant 0 : i32
    return %arg0, %c0_i32 : i32, i32
  }
  func.func @transform_1(%arg0: i32) -> (i32, i32, i32, i32) {
    %c0_i32 = arith.constant 0 : i32
    %c0_i32_0 = arith.constant 0 : i32
    %c0_i32_1 = arith.constant 0 : i32
    %c0_i32_2 = arith.constant 0 : i32
    return %arg0, %c0_i32, %c0_i32_0, %c0_i32_1 : i32, i32, i32, i32
  }
  func.func @transform_2(%arg0: i32) -> (i32, i32) {
    %c0_i32 = arith.constant 0 : i32
    %c0_i32_0 = arith.constant 0 : i32
    %c0_i32_1 = arith.constant 0 : i32
    return %c0_i32, %c0_i32_0 : i32, i32
  }
  func.func @transform_3(%arg0: i32) -> (i32, i32) {
    %c0_i32 = arith.constant 0 : i32
    %c0_i32_0 = arith.constant 0 : i32
    %c0_i32_1 = arith.constant 0 : i32
    return %c0_i32, %c0_i32_0 : i32, i32
  }
  func.func @transform_4(%arg0: i32) -> (i32, i32) {
    %c0_i32 = arith.constant 0 : i32
    %c0_i32_0 = arith.constant 0 : i32
    %c0_i32_1 = arith.constant 0 : i32
    return %c0_i32, %c0_i32_0 : i32, i32
  }
  func.func @transform_5(%arg0: i32) -> (i32, i32) {
    %c0_i32 = arith.constant 0 : i32
    %c0_i32_0 = arith.constant 0 : i32
    %c0_i32_1 = arith.constant 0 : i32
    return %c0_i32, %c0_i32_0 : i32, i32
  }
  func.func @transform_6(%arg0: i32) -> (i32, i32) {
    %c0_i32 = arith.constant 0 : i32
    %c0_i32_0 = arith.constant 0 : i32
    %c0_i32_1 = arith.constant 0 : i32
    return %c0_i32, %c0_i32_0 : i32, i32
  }
  func.func @transform_7(%arg0: i32) -> (i32, i32) {
    %c0_i32 = arith.constant 0 : i32
    %c0_i32_0 = arith.constant 0 : i32
    %c0_i32_1 = arith.constant 0 : i32
    return %c0_i32, %c0_i32_0 : i32, i32
  }
  func.func @transform_8(%arg0: i32) -> (i32, i32) {
    %c0_i32 = arith.constant 0 : i32
    %c0_i32_0 = arith.constant 0 : i32
    %c0_i32_1 = arith.constant 0 : i32
    return %c0_i32, %c0_i32_0 : i32, i32
  }
  func.func @transform_9(%arg0: i32) -> (i32, i32) {
    %c0_i32 = arith.constant 0 : i32
    %c0_i32_0 = arith.constant 0 : i32
    %c0_i32_1 = arith.constant 0 : i32
    return %c0_i32, %c0_i32_0 : i32, i32
  }
  func.func @transform_10(%arg0: i32) -> (i32, i32, i32) {
    %c0_i32 = arith.constant 0 : i32
    %c0_i32_0 = arith.constant 0 : i32
    %c0_i32_1 = arith.constant 0 : i32
    %c0_i32_2 = arith.constant 0 : i32
    return %c0_i32, %c0_i32_0, %c0_i32_1 : i32, i32, i32
  }
  func.func @transform_11(%arg0: i32) -> (i32, i32) {
    %c0_i32 = arith.constant 0 : i32
    %c0_i32_0 = arith.constant 0 : i32
    %c0_i32_1 = arith.constant 0 : i32
    return %c0_i32, %c0_i32_0 : i32, i32
  }
  func.func @transform_12(%arg0: i32) -> (i32, i32, i32) {
    %c0_i32 = arith.constant 0 : i32
    %c0_i32_0 = arith.constant 0 : i32
    %c0_i32_1 = arith.constant 0 : i32
    %c0_i32_2 = arith.constant 0 : i32
    return %c0_i32, %c0_i32_0, %c0_i32_1 : i32, i32, i32
  }
  func.func @transform_13(%arg0: i32) -> (i32, i32) {
    %c0_i32 = arith.constant 0 : i32
    %c0_i32_0 = arith.constant 0 : i32
    %c0_i32_1 = arith.constant 0 : i32
    return %c0_i32, %c0_i32_0 : i32, i32
  }
  func.func @transform_14(%arg0: i32) -> (i32, i32, i32) {
    %c0_i32 = arith.constant 0 : i32
    %c0_i32_0 = arith.constant 0 : i32
    %c0_i32_1 = arith.constant 0 : i32
    %c0_i32_2 = arith.constant 0 : i32
    return %c0_i32, %c0_i32_0, %c0_i32_1 : i32, i32, i32
  }
  func.func @transform_15(%arg0: i32) -> (i32, i32) {
    %c0_i32 = arith.constant 0 : i32
    %c0_i32_0 = arith.constant 0 : i32
    %c0_i32_1 = arith.constant 0 : i32
    return %c0_i32, %c0_i32_0 : i32, i32
  }
  func.func @transform_16(%arg0: i32) -> (i32, i32, i32) {
    %c0_i32 = arith.constant 0 : i32
    %c0_i32_0 = arith.constant 0 : i32
    %c0_i32_1 = arith.constant 0 : i32
    %c0_i32_2 = arith.constant 0 : i32
    return %c0_i32, %c0_i32_0, %c0_i32_1 : i32, i32, i32
  }
  func.func @transform_17(%arg0: i32) -> (i32, i32) {
    %c0_i32 = arith.constant 0 : i32
    %c0_i32_0 = arith.constant 0 : i32
    %c0_i32_1 = arith.constant 0 : i32
    return %c0_i32, %c0_i32_0 : i32, i32
  }
  func.func @transform_18(%arg0: i32) -> (i32, i32) {
    %c0_i32 = arith.constant 0 : i32
    %c0_i32_0 = arith.constant 0 : i32
    %c0_i32_1 = arith.constant 0 : i32
    return %c0_i32, %c0_i32_0 : i32, i32
  }
  func.func @transform_19(%arg0: i32) -> (i32, i32) {
    %c0_i32 = arith.constant 0 : i32
    %c0_i32_0 = arith.constant 0 : i32
    %c0_i32_1 = arith.constant 0 : i32
    return %c0_i32, %c0_i32_0 : i32, i32
  }
  func.func @transform_20(%arg0: i32) -> (i32, i32) {
    %c0_i32 = arith.constant 0 : i32
    %c0_i32_0 = arith.constant 0 : i32
    %c0_i32_1 = arith.constant 0 : i32
    return %c0_i32, %c0_i32_0 : i32, i32
  }
  func.func @transform_21(%arg0: i32) -> (i32, i32) {
    %c0_i32 = arith.constant 0 : i32
    %c0_i32_0 = arith.constant 0 : i32
    %c0_i32_1 = arith.constant 0 : i32
    return %c0_i32, %c0_i32_0 : i32, i32
  }
  func.func @transform_22(%arg0: i32) -> (i32, i32) {
    %c0_i32 = arith.constant 0 : i32
    %c0_i32_0 = arith.constant 0 : i32
    %c0_i32_1 = arith.constant 0 : i32
    return %c0_i32, %c0_i32_0 : i32, i32
  }
  func.func @transform_23(%arg0: i32) -> (i32, i32) {
    %c0_i32 = arith.constant 0 : i32
    %c0_i32_0 = arith.constant 0 : i32
    return %arg0, %c0_i32 : i32, i32
  }
}

</mosaic_0001>

<llo_original>
// kernel: _lambda_.1
$region0: #{_lambda_.1}
  #allocation0 [shape = 'u32[]', space=smem, size = 0x4, offset = 0x4, fixed_abs, tag = 'smem constant byte address 0x4 - core index']
  #allocation1 [shape = 'u32[144,128]{1,0:T(1,128)}', space=vmem, size = 0x12000, scoped, tag = 'internal scratch']
  #allocation2 [shape = 'f32[10,8,160]{2,1,0:T(8,128)}', space=vmem, size = 0x14000, scoped, tag = 'scratch operand']
  #allocation3 [shape = 'f32[10,8,160]{2,1,0:T(8,128)}', space=vmem, size = 0x14000, scoped, tag = 'scratch operand']
  #allocation4 [shape = 'f32[5,8,160]{2,1,0:T(8,128)}', space=vmem, size = 0xa000, scoped, tag = 'scratch operand']
  #allocation5 [shape = 'f32[5,8,160]{2,1,0:T(8,128)}', space=vmem, size = 0xa000, scoped, tag = 'scratch operand']
  #allocation6 [shape = 'f32[1,1]{1,0:T(1,128)S(1)}', space=vmem, size = 0x200, scoped, tag = 'scoped memory for _lambda_.1']
  %s0 = inlined_call_operand.vmem [shape: f32[8,32], index: 0, kind: input, shape index: {}]
  %s1 = inlined_call_operand.vmem [shape: f32[1,20,8,40], index: 1, kind: input, shape index: {}]
  %s2 = inlined_call_operand.vmem [shape: bf16[32,256], index: 2, kind: input, shape index: {}]
  %s3 = inlined_call_operand.vmem [shape: f32[1,256], index: 3, kind: input, shape index: {}]
  %s4 = inlined_call_operand.vmem [shape: f32[1,256], index: 4, kind: input, shape index: {}]
  %s5 = inlined_call_operand.vmem [shape: f32[1,256], index: 5, kind: input, shape index: {}]
  %s6 = inlined_call_operand.vmem [shape: bf16[256,128], index: 6, kind: input, shape index: {}]
  %s7 = inlined_call_operand.vmem [shape: f32[1,128], index: 7, kind: input, shape index: {}]
  %s8 = inlined_call_operand.vmem [shape: f32[1,128], index: 8, kind: input, shape index: {}]
  %s9 = inlined_call_operand.vmem [shape: f32[1,128], index: 9, kind: input, shape index: {}]
  %s10 = inlined_call_operand.vmem [shape: bf16[5,40,160], index: 10, kind: input, shape index: {}]
  %s11 = inlined_call_operand.vmem [shape: f32[1,160], index: 11, kind: input, shape index: {}]
  %s12 = inlined_call_operand.vmem [shape: bf16[5,160,160], index: 12, kind: input, shape index: {}]
  %s13 = inlined_call_operand.vmem [shape: f32[1,160], index: 13, kind: input, shape index: {}]
  %s14 = inlined_call_operand.vmem [shape: bf16[3,160,128], index: 14, kind: input, shape index: {}]
  %s15 = inlined_call_operand.vmem [shape: f32[1,128], index: 15, kind: input, shape index: {}]
  %s16 = inlined_call_operand.vmem [shape: bf16[4,128,128], index: 16, kind: input, shape index: {}]
  %s17 = inlined_call_operand.vmem [shape: f32[1,128], index: 17, kind: input, shape index: {}]
  %s18 = inlined_call_operand.vmem [shape: bf16[128,128], index: 18, kind: input, shape index: {}]
  %s19 = inlined_call_operand.vmem [shape: bf16[128,128], index: 19, kind: input, shape index: {}]
  %s20 = inlined_call_operand.vmem [shape: f32[1,128], index: 20, kind: input, shape index: {}]
  %s21 = inlined_call_operand.vmem [shape: f32[1,128], index: 21, kind: input, shape index: {}]
  %s22 = inlined_call_operand.<no memory space> [shape: f32[1,1], index: 22, kind: input, shape index: {}]
  %s23 = inlined_call_operand.vmem [shape: f32[8,1], index: 23, kind: output, shape index: {}]
  %s24 = sld [smem:[#allocation0]]
  $region102: #{_lambda_.1} parent=0
    _
  %s26 = ssub.s32 1, %s24
  %s27 = scalar_select 0, %s26, %s24
  %v28 = vstv %s22
  %29 = vst [vmem:[#allocation6] sm:$0x1] %v28
  // Predicated region
  $region2: #{_lambda_.1} parent=0 // pred_check
    _
  $region3: #{_lambda_.1} parent=0 // pred_check_branch
    %31 = sbr.rel (0) target = $region5
  $region4: #{_lambda_.1} parent=0 // pred_region
    _
  $region5: #{_lambda_.1} parent=0 // pred_fallthru
    _
  // Predicated region
  $region6: #{_lambda_.1} parent=0 // pred_check
    _
  $region7: #{_lambda_.1} parent=0 // pred_check_branch
    %33 = sbr.rel (0) target = $region9
  $region8: #{_lambda_.1} parent=0 // pred_region
    _
  $region9: #{_lambda_.1} parent=0 // pred_fallthru
    _
  // Predicated region
  $region10: #{_lambda_.1} parent=0 // pred_check
    _
  $region11: #{_lambda_.1} parent=0 // pred_check_branch
    %35 = sbr.rel (0) target = $region13
  $region12: #{_lambda_.1} parent=0 // pred_region
    _
  $region13: #{_lambda_.1} parent=0 // pred_fallthru
    _
  // Predicated region
  $region14: #{_lambda_.1} parent=0 // pred_check
    _
  $region15: #{_lambda_.1} parent=0 // pred_check_branch
    %37 = sbr.rel (0) target = $region17
  $region16: #{_lambda_.1} parent=0 // pred_region
    _
  $region17: #{_lambda_.1} parent=0 // pred_fallthru
    _
  // Predicated region
  $region18: #{_lambda_.1} parent=0 // pred_check
    _
  $region19: #{_lambda_.1} parent=0 // pred_check_branch
    %39 = sbr.rel (0) target = $region21
  $region20: #{_lambda_.1} parent=0 // pred_region
    _
  $region21: #{_lambda_.1} parent=0 // pred_fallthru
    _
  // Predicated region
  $region22: #{_lambda_.1} parent=0 // pred_check
    _
  $region23: #{_lambda_.1} parent=0 // pred_check_branch
    %41 = sbr.rel (0) target = $region25
  $region24: #{_lambda_.1} parent=0 // pred_region
    _
  $region25: #{_lambda_.1} parent=0 // pred_fallthru
    _
  // Predicated region
  $region26: #{_lambda_.1} parent=0 // pred_check
    _
  $region27: #{_lambda_.1} parent=0 // pred_check_branch
    %43 = sbr.rel (0) target = $region29
  $region28: #{_lambda_.1} parent=0 // pred_region
    _
  $region29: #{_lambda_.1} parent=0 // pred_fallthru
    _
  // Predicated region
  $region30: #{_lambda_.1} parent=0 // pred_check
    _
  $region31: #{_lambda_.1} parent=0 // pred_check_branch
    %45 = sbr.rel (0) target = $region33
  $region32: #{_lambda_.1} parent=0 // pred_region
    _
  $region33: #{_lambda_.1} parent=0 // pred_fallthru
    _
  // Predicated region
  $region34: #{_lambda_.1} parent=0 // pred_check
    _
  $region35: #{_lambda_.1} parent=0 // pred_check_branch
    %47 = sbr.rel (0) target = $region37
  $region36: #{_lambda_.1} parent=0 // pred_region
    _
  $region37: #{_lambda_.1} parent=0 // pred_fallthru
    _
  // Predicated region
  $region38: #{_lambda_.1} parent=0 // pred_check
    _
  $region39: #{_lambda_.1} parent=0 // pred_check_branch
    %49 = sbr.rel (0) target = $region41
  $region40: #{_lambda_.1} parent=0 // pred_region
    _
  $region41: #{_lambda_.1} parent=0 // pred_fallthru
    _
  // Predicated region
  $region42: #{_lambda_.1} parent=0 // pred_check
    _
  $region43: #{_lambda_.1} parent=0 // pred_check_branch
    %51 = sbr.rel (0) target = $region45
  $region44: #{_lambda_.1} parent=0 // pred_region
    _
  $region45: #{_lambda_.1} parent=0 // pred_fallthru
    _
  // Predicated region
  $region46: #{_lambda_.1} parent=0 // pred_check
    _
  $region47: #{_lambda_.1} parent=0 // pred_check_branch
    %53 = sbr.rel (0) target = $region49
  $region48: #{_lambda_.1} parent=0 // pred_region
    _
  $region49: #{_lambda_.1} parent=0 // pred_fallthru
    _
  // Predicated region
  $region50: #{_lambda_.1} parent=0 // pred_check
    _
  $region51: #{_lambda_.1} parent=0 // pred_check_branch
    %55 = sbr.rel (0) target = $region53
  $region52: #{_lambda_.1} parent=0 // pred_region
    _
  $region53: #{_lambda_.1} parent=0 // pred_fallthru
    _
  // Predicated region
  $region54: #{_lambda_.1} parent=0 // pred_check
    _
  $region55: #{_lambda_.1} parent=0 // pred_check_branch
    %57 = sbr.rel (0) target = $region57
  $region56: #{_lambda_.1} parent=0 // pred_region
    _
  $region57: #{_lambda_.1} parent=0 // pred_fallthru
    _
  // Predicated region
  $region58: #{_lambda_.1} parent=0 // pred_check
    _
  $region59: #{_lambda_.1} parent=0 // pred_check_branch
    %59 = sbr.rel (0) target = $region61
  $region60: #{_lambda_.1} parent=0 // pred_region
    _
  $region61: #{_lambda_.1} parent=0 // pred_fallthru
    _
  // Predicated region
  $region62: #{_lambda_.1} parent=0 // pred_check
    _
  $region63: #{_lambda_.1} parent=0 // pred_check_branch
    %61 = sbr.rel (0) target = $region65
  $region64: #{_lambda_.1} parent=0 // pred_region
    _
  $region65: #{_lambda_.1} parent=0 // pred_fallthru
    _
  // Predicated region
  $region66: #{_lambda_.1} parent=0 // pred_check
    _
  $region67: #{_lambda_.1} parent=0 // pred_check_branch
    %63 = sbr.rel (0) target = $region69
  $region68: #{_lambda_.1} parent=0 // pred_region
    _
  $region69: #{_lambda_.1} parent=0 // pred_fallthru
    _
  // Predicated region
  $region70: #{_lambda_.1} parent=0 // pred_check
    _
  $region71: #{_lambda_.1} parent=0 // pred_check_branch
    %65 = sbr.rel (0) target = $region73
  $region72: #{_lambda_.1} parent=0 // pred_region
    _
  $region73: #{_lambda_.1} parent=0 // pred_fallthru
    _
  // Predicated region
  $region74: #{_lambda_.1} parent=0 // pred_check
    _
  $region75: #{_lambda_.1} parent=0 // pred_check_branch
    %67 = sbr.rel (0) target = $region77
  $region76: #{_lambda_.1} parent=0 // pred_region
    _
  $region77: #{_lambda_.1} parent=0 // pred_fallthru
    _
  // Predicated region
  $region78: #{_lambda_.1} parent=0 // pred_check
    _
  $region79: #{_lambda_.1} parent=0 // pred_check_branch
    %69 = sbr.rel (0) target = $region81
  $region80: #{_lambda_.1} parent=0 // pred_region
    _
  $region81: #{_lambda_.1} parent=0 // pred_fallthru
    _
  // Predicated region
  $region82: #{_lambda_.1} parent=0 // pred_check
    _
  $region83: #{_lambda_.1} parent=0 // pred_check_branch
    %71 = sbr.rel (0) target = $region85
  $region84: #{_lambda_.1} parent=0 // pred_region
    _
  $region85: #{_lambda_.1} parent=0 // pred_fallthru
    _
  // Predicated region
  $region86: #{_lambda_.1} parent=0 // pred_check
    _
  $region87: #{_lambda_.1} parent=0 // pred_check_branch
    %73 = sbr.rel (0) target = $region89
  $region88: #{_lambda_.1} parent=0 // pred_region
    _
  $region89: #{_lambda_.1} parent=0 // pred_fallthru
    _
  // Predicated region
  $region90: #{_lambda_.1} parent=0 // pred_check
    _
  $region91: #{_lambda_.1} parent=0 // pred_check_branch
    %75 = sbr.rel (0) target = $region93
  $region92: #{_lambda_.1} parent=0 // pred_region
    _
  $region93: #{_lambda_.1} parent=0 // pred_fallthru
    _
  %v77 = vld [vmem:[%s0] sm:$0xff]
  %v78 = vld [vmem:[%s2] sm:$0xff]
  %v79 = vld [vmem:[%s2 + $0x8] sm:$0xff]
  %v80 = vld [vmem:[%s2 + $0x10] sm:$0xff]
  %v81 = vld [vmem:[%s2 + $0x18] sm:$0xff]
  %v82 = vpack.c.bf16 %v77, %v77
  %v83 = vld [vmem:[%s3] sm:$0x3]
  %v85 = vlaneseq
  %v86 = vshrl.u32 %v85, 7
  %v87 = vsub.s32 0, %v86
  %v88 = vrot.slane %v83, %v87
  %v89 = vlaneseq
  %v90 = vshrl.u32 %v89, 7
  %v91 = vsub.s32 1, %v90
  %v92 = vrot.slane %v83, %v91
  %v99 = vunpack.c.l.b16 %v78
  %v100 = vunpack.c.h.b16 %v78
  %v101 = vunpack.c.l.b16 %v79
  %v102 = vunpack.c.h.b16 %v79
  %v103 = vunpack.c.l.b16 %v80
  %v104 = vunpack.c.h.b16 %v80
  %v105 = vunpack.c.l.b16 %v81
  %v106 = vunpack.c.h.b16 %v81
  %v107 = vpack.c.b16 %v101, %v99
  %v108 = vpack.c.b16 %v102, %v100
  %v109 = vpack.c.b16 %v105, %v103
  %v110 = vpack.c.b16 %v106, %v104
  %vm115 = vcmask 261120
  %v117 = vsel %vm115, %v82, 0
  %119 = vmatprep.subr.bf16.mxu0 %v108
  %120 = vmatpush1.bf16.msra.mxu0 %v107
  %121 = vmatprep.subr.bf16.mxu0 %v110
  %122 = vmatpush1.bf16.msra.mxu0 %v109
  %123 = vmatprep.subr.bf16.mxu0 0
  %124 = vmatpush1.bf16.msra.mxu0 0
  %125 = vmatprep.subr.bf16.mxu0 0
  %126 = vmatpush1.bf16.msra.mxu0 0
  %127 = vmatprep.subr.bf16.mxu0 0
  %128 = vmatpush1.bf16.msra.mxu0 0
  %129 = vmatprep.subr.bf16.mxu0 0
  %130 = vmatpush1.bf16.msra.mxu0 0
  %131 = vmatprep.subr.bf16.mxu0 0
  %132 = vmatpush1.bf16.msra.mxu0 0
  %133 = vmatprep.subr.bf16.mxu0 0
  %134 = vmatpush1.bf16.msra.mxu0 0
  %135 = vmatprep.subr.bf16.mxu0 0
  %136 = vmatpush1.bf16.msra.mxu0 0
  %137 = vmatprep.subr.bf16.mxu0 0
  %138 = vmatpush1.bf16.msra.mxu0 0
  %139 = vmatprep.subr.bf16.mxu0 0
  %140 = vmatpush1.bf16.msra.mxu0 0
  %141 = vmatprep.subr.bf16.mxu0 0
  %142 = vmatpush1.bf16.msra.mxu0 0
  %143 = vmatprep.subr.bf16.mxu0 0
  %144 = vmatpush1.bf16.msra.mxu0 0
  %145 = vmatprep.subr.bf16.mxu0 0
  %146 = vmatpush1.bf16.msra.mxu0 0
  %147 = vmatprep.subr.bf16.mxu0 0
  %148 = vmatpush1.bf16.msra.mxu0 0
  %149 = vmatprep.subr.bf16.mxu0 0
  %150 = vmatpush1.bf16.msra.mxu0 0
  %151 = vmatprep.mubr.bf16.mxu0 0
  %152 = vmatmul.mubr.bf16.gmra.mrb[0].mxu0 %v117
  %v153 = vpop.f32.mrb[0].mxu0
  %v154 = vadd.f32 %v88, %v153
  %v155 = vpop.f32.mrb[0].mxu0
  %v156 = vadd.f32 %v92, %v155
  %v157 = vpop.f32.mrb[0].mxu0
  %v158 = vpop.f32.mrb[0].mxu0
  %159 = vdwg.mxu0
  %vm160 = vcmp.gt.f32.partialorder %v154, 0.0
  %vm161 = vcmp.gt.f32.partialorder %v156, 0.0
  %v162 = vmin.f32 %v154, 0.0
  %v163 = vmin.f32 %v156, 0.0
  %v164 = vmul.f32 %v162, 1.442695
  %v165 = vpow.pop %v164
  %v166 = vmul.f32 %v163, 1.442695
  %v167 = vpow.pop %v166
  %v168 = vsub.f32 %v165, 1.0
  %v169 = vsub.f32 %v167, 1.0
  %v170 = vsel %vm160, %v154, %v168
  %v171 = vsel %vm161, %v156, %v169
  %v172 = vld [vmem:[%s4] sm:$0x3]
  %v173 = vld [vmem:[%s5] sm:$0x3]
  %v174 = vadd.f32 %v170, %v171
  %175 = vadd.xlane.f32.xlu0 %v174
  %v176 = vpop.xlane.xlu0 %175
  %v177 = vrcp.pop 256.0
  %v178 = vmul.f32 %v176, %v177
  %v179 = vsub.f32 %v170, %v178
  %v180 = vsub.f32 %v171, %v178
  %v181 = vmul.f32 %v179, %v179
  %v182 = vmul.f32 %v180, %v180
  %v183 = vadd.f32 %v181, %v182
  %184 = vadd.xlane.f32.xlu0 %v183
  %v185 = vpop.xlane.xlu0 %184
  %v186 = vmul.f32 %v185, %v177
  %v187 = vadd.f32 %v186, 1e-05
  %v188 = vrsqrt.pop %v187
  %v189 = vmul.f32 %v179, %v188
  %v190 = vmul.f32 %v180, %v188
  %v192 = vlaneseq
  %v193 = vshrl.u32 %v192, 7
  %v194 = vsub.s32 0, %v193
  %v195 = vrot.slane %v172, %v194
  %v196 = vlaneseq
  %v197 = vshrl.u32 %v196, 7
  %v198 = vsub.s32 1, %v197
  %v199 = vrot.slane %v172, %v198
  %v202 = vmul.f32 %v189, %v195
  %v203 = vmul.f32 %v190, %v199
  %v205 = vlaneseq
  %v206 = vshrl.u32 %v205, 7
  %v207 = vsub.s32 0, %v206
  %v208 = vrot.slane %v173, %v207
  %v209 = vlaneseq
  %v210 = vshrl.u32 %v209, 7
  %v211 = vsub.s32 1, %v210
  %v212 = vrot.slane %v173, %v211
  %v215 = vadd.f32 %v202, %v208
  %v216 = vadd.f32 %v203, %v212
  %v217 = vld [vmem:[%s6] sm:$0xf]
  %v218 = vld [vmem:[%s6 + $0x4] sm:$0xf]
  %v219 = vld [vmem:[%s6 + $0x8] sm:$0xf]
  %v220 = vld [vmem:[%s6 + $0xc] sm:$0xf]
  %v221 = vld [vmem:[%s6 + $0x10] sm:$0xf]
  %v222 = vld [vmem:[%s6 + $0x14] sm:$0xf]
  %v223 = vld [vmem:[%s6 + $0x18] sm:$0xf]
  %v224 = vld [vmem:[%s6 + $0x1c] sm:$0xf]
  %v225 = vld [vmem:[%s6 + $0x20] sm:$0xf]
  %v226 = vld [vmem:[%s6 + $0x24] sm:$0xf]
  %v227 = vld [vmem:[%s6 + $0x28] sm:$0xf]
  %v228 = vld [vmem:[%s6 + $0x2c] sm:$0xf]
  %v229 = vld [vmem:[%s6 + $0x30] sm:$0xf]
  %v230 = vld [vmem:[%s6 + $0x34] sm:$0xf]
  %v231 = vld [vmem:[%s6 + $0x38] sm:$0xf]
  %v232 = vld [vmem:[%s6 + $0x3c] sm:$0xf]
  %v233 = vld [vmem:[%s6 + $0x40] sm:$0xf]
  %v234 = vld [vmem:[%s6 + $0x44] sm:$0xf]
  %v235 = vld [vmem:[%s6 + $0x48] sm:$0xf]
  %v236 = vld [vmem:[%s6 + $0x4c] sm:$0xf]
  %v237 = vld [vmem:[%s6 + $0x50] sm:$0xf]
  %v238 = vld [vmem:[%s6 + $0x54] sm:$0xf]
  %v239 = vld [vmem:[%s6 + $0x58] sm:$0xf]
  %v240 = vld [vmem:[%s6 + $0x5c] sm:$0xf]
  %v241 = vld [vmem:[%s6 + $0x60] sm:$0xf]
  %v242 = vld [vmem:[%s6 + $0x64] sm:$0xf]
  %v243 = vld [vmem:[%s6 + $0x68] sm:$0xf]
  %v244 = vld [vmem:[%s6 + $0x6c] sm:$0xf]
  %v245 = vld [vmem:[%s6 + $0x70] sm:$0xf]
  %v246 = vld [vmem:[%s6 + $0x74] sm:$0xf]
  %v247 = vld [vmem:[%s6 + $0x78] sm:$0xf]
  %v248 = vld [vmem:[%s6 + $0x7c] sm:$0xf]
  %v249 = vpack.c.bf16 %v215, %v215
  %v250 = vpack.c.bf16 %v216, %v216
  %v251 = vld [vmem:[%s7] sm:$0x1]
  %v253 = vlaneseq
  %v254 = vshrl.u32 %v253, 7
  %v255 = vsub.s32 0, %v254
  %v256 = vrot.slane %v251, %v255
  %v290 = vunpack.c.l.b16 %v217
  %v291 = vunpack.c.l.b16 %v218
  %v292 = vunpack.c.l.b16 %v219
  %v293 = vunpack.c.l.b16 %v220
  %v294 = vunpack.c.l.b16 %v221
  %v295 = vunpack.c.l.b16 %v222
  %v296 = vunpack.c.l.b16 %v223
  %v297 = vunpack.c.l.b16 %v224
  %v298 = vunpack.c.l.b16 %v225
  %v299 = vunpack.c.l.b16 %v226
  %v300 = vunpack.c.l.b16 %v227
  %v301 = vunpack.c.l.b16 %v228
  %v302 = vunpack.c.l.b16 %v229
  %v303 = vunpack.c.l.b16 %v230
  %v304 = vunpack.c.l.b16 %v231
  %v305 = vunpack.c.l.b16 %v232
  %v306 = vunpack.c.l.b16 %v233
  %v307 = vunpack.c.l.b16 %v234
  %v308 = vunpack.c.l.b16 %v235
  %v309 = vunpack.c.l.b16 %v236
  %v310 = vunpack.c.l.b16 %v237
  %v311 = vunpack.c.l.b16 %v238
  %v312 = vunpack.c.l.b16 %v239
  %v313 = vunpack.c.l.b16 %v240
  %v314 = vunpack.c.l.b16 %v241
  %v315 = vunpack.c.l.b16 %v242
  %v316 = vunpack.c.l.b16 %v243
  %v317 = vunpack.c.l.b16 %v244
  %v318 = vunpack.c.l.b16 %v245
  %v319 = vunpack.c.l.b16 %v246
  %v320 = vunpack.c.l.b16 %v247
  %v321 = vunpack.c.l.b16 %v248
  %v322 = vpack.c.b16 %v291, %v290
  %v323 = vpack.c.b16 %v293, %v292
  %v324 = vpack.c.b16 %v295, %v294
  %v325 = vpack.c.b16 %v297, %v296
  %v326 = vpack.c.b16 %v299, %v298
  %v327 = vpack.c.b16 %v301, %v300
  %v328 = vpack.c.b16 %v303, %v302
  %v329 = vpack.c.b16 %v305, %v304
  %v330 = vpack.c.b16 %v307, %v306
  %v331 = vpack.c.b16 %v309, %v308
  %v332 = vpack.c.b16 %v311, %v310
  %v333 = vpack.c.b16 %v313, %v312
  %v334 = vpack.c.b16 %v315, %v314
  %v335 = vpack.c.b16 %v317, %v316
  %v336 = vpack.c.b16 %v319, %v318
  %v337 = vpack.c.b16 %v321, %v320
  %354 = vmatprep.subr.bf16.mxu0 0
  %355 = vmatpush1.bf16.msra.mxu0 %v322
  %356 = vmatprep.subr.bf16.mxu0 0
  %357 = vmatpush1.bf16.msra.mxu0 %v323
  %358 = vmatprep.subr.bf16.mxu0 0
  %359 = vmatpush1.bf16.msra.mxu0 %v324
  %360 = vmatprep.subr.bf16.mxu0 0
  %361 = vmatpush1.bf16.msra.mxu0 %v325
  %362 = vmatprep.subr.bf16.mxu0 0
  %363 = vmatpush1.bf16.msra.mxu0 %v326
  %364 = vmatprep.subr.bf16.mxu0 0
  %365 = vmatpush1.bf16.msra.mxu0 %v327
  %366 = vmatprep.subr.bf16.mxu0 0
  %367 = vmatpush1.bf16.msra.mxu0 %v328
  %368 = vmatprep.subr.bf16.mxu0 0
  %369 = vmatpush1.bf16.msra.mxu0 %v329
  %370 = vmatprep.subr.bf16.mxu0 0
  %371 = vmatpush1.bf16.msra.mxu0 %v330
  %372 = vmatprep.subr.bf16.mxu0 0
  %373 = vmatpush1.bf16.msra.mxu0 %v331
  %374 = vmatprep.subr.bf16.mxu0 0
  %375 = vmatpush1.bf16.msra.mxu0 %v332
  %376 = vmatprep.subr.bf16.mxu0 0
  %377 = vmatpush1.bf16.msra.mxu0 %v333
  %378 = vmatprep.subr.bf16.mxu0 0
  %379 = vmatpush1.bf16.msra.mxu0 %v334
  %380 = vmatprep.subr.bf16.mxu0 0
  %381 = vmatpush1.bf16.msra.mxu0 %v335
  %382 = vmatprep.subr.bf16.mxu0 0
  %383 = vmatpush1.bf16.msra.mxu0 %v336
  %384 = vmatprep.subr.bf16.mxu0 0
  %385 = vmatpush1.bf16.msra.mxu0 %v337
  %386 = vmatprep.mubr.bf16.mxu0 %v250
  %387 = vmatmul.mubr.bf16.gmra.mrb[0].mxu0 %v249
  %v388 = vpop.f32.mrb[0].mxu0
  %v389 = vadd.f32 %v256, %v388
  %v390 = vpop.f32.mrb[0].mxu0
  %v391 = vpop.f32.mrb[0].mxu0
  %v392 = vpop.f32.mrb[0].mxu0
  %393 = vdwg.mxu0
  %vm394 = vcmp.gt.f32.partialorder %v389, 0.0
  %v395 = vmin.f32 %v389, 0.0
  %v396 = vmul.f32 %v395, 1.442695
  %v397 = vpow.pop %v396
  %v398 = vsub.f32 %v397, 1.0
  %v399 = vsel %vm394, %v389, %v398
  %v400 = vld [vmem:[%s8] sm:$0x1]
  %v401 = vld [vmem:[%s9] sm:$0x1]
  %402 = vadd.xlane.f32.xlu0 %v399
  %v403 = vpop.xlane.xlu0 %402
  %v404 = vrcp.pop 128.0
  %v405 = vmul.f32 %v403, %v404
  %v406 = vsub.f32 %v399, %v405
  %v407 = vmul.f32 %v406, %v406
  %408 = vadd.xlane.f32.xlu0 %v407
  %v409 = vpop.xlane.xlu0 %408
  %v410 = vmul.f32 %v409, %v404
  %v411 = vadd.f32 %v410, 1e-05
  %v412 = vrsqrt.pop %v411
  %v413 = vmul.f32 %v406, %v412
  %v415 = vlaneseq
  %v416 = vshrl.u32 %v415, 7
  %v417 = vsub.s32 0, %v416
  %v418 = vrot.slane %v400, %v417
  %v420 = vmul.f32 %v413, %v418
  %v422 = vlaneseq
  %v423 = vshrl.u32 %v422, 7
  %v424 = vsub.s32 0, %v423
  %v425 = vrot.slane %v401, %v424
  %v427 = vadd.f32 %v420, %v425
  %428 = vst [vmem:[#allocation2] sm:$0xff] 0.0
  %429 = vst.msk [vmem:[#allocation2 + $0x8] sm:$0xff] %vm115, 0.0
  %s430 = scalar_lea.vmem [#allocation2], 144
  %431 = vst [vmem:[%s430] sm:$0xff] 0.0
  %432 = vst.msk [vmem:[%s430 + $0x8] sm:$0xff] %vm115, 0.0
  %433 = vst [vmem:[#allocation3] sm:$0xff] 0.0
  %434 = vst.msk [vmem:[#allocation3 + $0x8] sm:$0xff] %vm115, 0.0
  %s435 = scalar_lea.vmem [#allocation3], 144
  %436 = vst [vmem:[%s435] sm:$0xff] 0.0
  %437 = vst.msk [vmem:[%s435 + $0x8] sm:$0xff] %vm115, 0.0
  %438 = vst [vmem:[#allocation4] sm:$0xff] 0.0
  %439 = vst.msk [vmem:[#allocation4 + $0x8] sm:$0xff] %vm115, 0.0
  %s440 = scalar_lea.vmem [#allocation4], 64
  %441 = vst [vmem:[%s440] sm:$0xff] 0.0
  %442 = vst.msk [vmem:[%s440 + $0x8] sm:$0xff] %vm115, 0.0
  %443 = vst [vmem:[#allocation5] sm:$0xff] 0.0
  %444 = vst.msk [vmem:[#allocation5 + $0x8] sm:$0xff] %vm115, 0.0
  %s445 = scalar_lea.vmem [#allocation5], 64
  %446 = vst [vmem:[%s445] sm:$0xff] 0.0
  %447 = vst.msk [vmem:[%s445 + $0x8] sm:$0xff] %vm115, 0.0
  %v448 = vld [vmem:[%s1] sm:$0xff]
  %v449 = vld [vmem:[%s1 + $0x8] sm:$0xff]
  %v450 = vld [vmem:[%s1 + $0x10] sm:$0xff]
  %v451 = vld [vmem:[%s1 + $0x18] sm:$0xff]
  %v452 = vld [vmem:[%s1 + $0x20] sm:$0xff]
  %v453 = vld [vmem:[%s1 + $0x28] sm:$0xff]
  %v454 = vld [vmem:[%s1 + $0x30] sm:$0xff]
  %v455 = vld [vmem:[%s1 + $0x38] sm:$0xff]
  %v456 = vld [vmem:[%s1 + $0x40] sm:$0xff]
  %v457 = vld [vmem:[%s1 + $0x48] sm:$0xff]
  %v458 = vld [vmem:[%s1 + $0x50] sm:$0xff]
  %v459 = vld [vmem:[%s1 + $0x58] sm:$0xff]
  %v460 = vld [vmem:[%s1 + $0x60] sm:$0xff]
  %v461 = vld [vmem:[%s1 + $0x68] sm:$0xff]
  %v462 = vld [vmem:[%s1 + $0x70] sm:$0xff]
  %v463 = vld [vmem:[%s1 + $0x78] sm:$0xff]
  %v464 = vpack.c.bf16 %v449, %v448
  %v465 = vpack.c.bf16 %v451, %v450
  %v466 = vpack.c.bf16 %v453, %v452
  %v467 = vpack.c.bf16 %v455, %v454
  %v468 = vpack.c.bf16 %v457, %v456
  %v469 = vpack.c.bf16 %v459, %v458
  %v470 = vpack.c.bf16 %v461, %v460
  %v471 = vpack.c.bf16 %v463, %v462
  %v472 = vld [vmem:[%s10] sm:$0xff]
  %v473 = vld [vmem:[%s10 + $0x8] sm:$0xff]
  %v474 = vld [vmem:[%s10 + $0x10] sm:$0xff]
  %v475 = vld [vmem:[%s10 + $0x18] sm:$0xff]
  %v476 = vld [vmem:[%s10 + $0x20] sm:$0xff]
  %s477 = scalar_lea.vmem %s1, 8
  %v478 = vld [vmem:[%s477] sm:$0xff]
  %v479 = vld [vmem:[%s477 + $0x8] sm:$0xff]
  %v480 = vld [vmem:[%s477 + $0x10] sm:$0xff]
  %v481 = vld [vmem:[%s477 + $0x18] sm:$0xff]
  %v482 = vld [vmem:[%s477 + $0x20] sm:$0xff]
  %v483 = vld [vmem:[%s477 + $0x28] sm:$0xff]
  %v484 = vld [vmem:[%s477 + $0x30] sm:$0xff]
  %v485 = vld [vmem:[%s477 + $0x38] sm:$0xff]
  %v486 = vld [vmem:[%s477 + $0x40] sm:$0xff]
  %v487 = vld [vmem:[%s477 + $0x48] sm:$0xff]
  %v488 = vld [vmem:[%s477 + $0x50] sm:$0xff]
  %v489 = vld [vmem:[%s477 + $0x58] sm:$0xff]
  %v490 = vld [vmem:[%s477 + $0x60] sm:$0xff]
  %v491 = vld [vmem:[%s477 + $0x68] sm:$0xff]
  %v492 = vld [vmem:[%s477 + $0x70] sm:$0xff]
  %v493 = vld [vmem:[%s477 + $0x78] sm:$0xff]
  %v494 = vpack.c.bf16 %v479, %v478
  %v495 = vpack.c.bf16 %v481, %v480
  %v496 = vpack.c.bf16 %v483, %v482
  %v497 = vpack.c.bf16 %v485, %v484
  %v498 = vpack.c.bf16 %v487, %v486
  %v499 = vpack.c.bf16 %v489, %v488
  %v500 = vpack.c.bf16 %v491, %v490
  %v501 = vpack.c.bf16 %v493, %v492
  %s502 = scalar_lea.vmem %s10, 40
  %v503 = vld [vmem:[%s502] sm:$0xff]
  %v504 = vld [vmem:[%s502 + $0x8] sm:$0xff]
  %v505 = vld [vmem:[%s502 + $0x10] sm:$0xff]
  %v506 = vld [vmem:[%s502 + $0x18] sm:$0xff]
  %v507 = vld [vmem:[%s502 + $0x20] sm:$0xff]
  %v513 = vunpack.c.l.b16 %v503
  %v514 = vunpack.c.h.b16 %v503
  %v515 = vunpack.c.l.b16 %v504
  %v516 = vunpack.c.h.b16 %v504
  %v517 = vunpack.c.l.b16 %v505
  %v518 = vunpack.c.h.b16 %v505
  %v519 = vunpack.c.l.b16 %v506
  %v520 = vunpack.c.h.b16 %v506
  %v521 = vunpack.c.l.b16 %v507
  %v522 = vunpack.c.h.b16 %v507
  %v523 = vpack.c.b16 %v515, %v513
  %v524 = vpack.c.b16 %v516, %v514
  %v525 = vpack.c.b16 %v519, %v517
  %v526 = vpack.c.b16 %v520, %v518
  %v527 = vpack.c.b16 %v521, %v521
  %v528 = vpack.c.b16 %v522, %v522
  %vm533 = vcmask 326656
  %v535 = vsel %vm533, %v494, 0
  %v538 = vsel %vm533, %v495, 0
  %v541 = vsel %vm533, %v496, 0
  %v544 = vsel %vm533, %v497, 0
  %v547 = vsel %vm533, %v498, 0
  %v550 = vsel %vm533, %v499, 0
  %v553 = vsel %vm533, %v500, 0
  %v556 = vsel %vm533, %v501, 0
  %vm558 = vcmask 1043456
  %v560 = vsel %vm558, %v527, 0
  %v563 = vsel %vm558, %v528, 0
  %565 = vmatprep.subr.bf16.mxu0 %v524
  %566 = vmatpush1.bf16.msra.mxu0 %v523
  %567 = vmatprep.subr.bf16.mxu0 %v526
  %568 = vmatpush1.bf16.msra.mxu0 %v525
  %569 = vmatprep.subr.bf16.mxu0 %v563
  %570 = vmatpush1.bf16.msra.mxu0 %v560
  %571 = vmatprep.subr.bf16.mxu0 0
  %572 = vmatpush1.bf16.msra.mxu0 0
  %573 = vmatprep.subr.bf16.mxu0 0
  %574 = vmatpush1.bf16.msra.mxu0 0
  %575 = vmatprep.subr.bf16.mxu0 0
  %576 = vmatpush1.bf16.msra.mxu0 0
  %577 = vmatprep.subr.bf16.mxu0 0
  %578 = vmatpush1.bf16.msra.mxu0 0
  %579 = vmatprep.subr.bf16.mxu0 0
  %580 = vmatpush1.bf16.msra.mxu0 0
  %581 = vmatprep.subr.bf16.mxu0 0
  %582 = vmatpush1.bf16.msra.mxu0 0
  %583 = vmatprep.subr.bf16.mxu0 0
  %584 = vmatpush1.bf16.msra.mxu0 0
  %585 = vmatprep.subr.bf16.mxu0 0
  %586 = vmatpush1.bf16.msra.mxu0 0
  %587 = vmatprep.subr.bf16.mxu0 0
  %588 = vmatpush1.bf16.msra.mxu0 0
  %589 = vmatprep.subr.bf16.mxu0 0
  %590 = vmatpush1.bf16.msra.mxu0 0
  %591 = vmatprep.subr.bf16.mxu0 0
  %592 = vmatpush1.bf16.msra.mxu0 0
  %593 = vmatprep.subr.bf16.mxu0 0
  %594 = vmatpush1.bf16.msra.mxu0 0
  %595 = vmatprep.subr.bf16.mxu0 0
  %596 = vmatpush1.bf16.msra.mxu0 0
  %597 = vmatprep.mubr.bf16.mxu0 0
  %598 = vmatmul.mubr.bf16.gmra.mrb[0].mxu0 %v535
  %v599 = vpop.f32.mrb[0].mxu0
  %v600 = vadd.f32 0.0, %v599
  %v601 = vpop.f32.mrb[0].mxu0
  %v602 = vadd.f32 0.0, %v601
  %v603 = vpop.f32.mrb[0].mxu0
  %v604 = vadd.f32 0.0, %v603
  %v605 = vpop.f32.mrb[0].mxu0
  %v606 = vadd.f32 0.0, %v605
  %607 = vmatprep.mubr.bf16.mxu0 0
  %608 = vmatmul.mubr.bf16.gmra.mrb[0].mxu0 %v538
  %v609 = vpop.f32.mrb[0].mxu0
  %v610 = vadd.f32 0.0, %v609
  %v611 = vpop.f32.mrb[0].mxu0
  %v612 = vadd.f32 0.0, %v611
  %v613 = vpop.f32.mrb[0].mxu0
  %v614 = vadd.f32 0.0, %v613
  %v615 = vpop.f32.mrb[0].mxu0
  %v616 = vadd.f32 0.0, %v615
  %617 = vmatprep.mubr.bf16.mxu0 0
  %618 = vmatmul.mubr.bf16.gmra.mrb[0].mxu0 %v541
  %v619 = vpop.f32.mrb[0].mxu0
  %v620 = vadd.f32 0.0, %v619
  %v621 = vpop.f32.mrb[0].mxu0
  %v622 = vadd.f32 0.0, %v621
  %v623 = vpop.f32.mrb[0].mxu0
  %v624 = vadd.f32 0.0, %v623
  %v625 = vpop.f32.mrb[0].mxu0
  %v626 = vadd.f32 0.0, %v625
  %627 = vmatprep.mubr.bf16.mxu0 0
  %628 = vmatmul.mubr.bf16.gmra.mrb[0].mxu0 %v544
  %v629 = vpop.f32.mrb[0].mxu0
  %v630 = vadd.f32 0.0, %v629
  %v631 = vpop.f32.mrb[0].mxu0
  %v632 = vadd.f32 0.0, %v631
  %v633 = vpop.f32.mrb[0].mxu0
  %v634 = vadd.f32 0.0, %v633
  %v635 = vpop.f32.mrb[0].mxu0
  %v636 = vadd.f32 0.0, %v635
  %637 = vmatprep.mubr.bf16.mxu0 0
  %638 = vmatmul.mubr.bf16.gmra.mrb[0].mxu0 %v547
  %v639 = vpop.f32.mrb[0].mxu0
  %v640 = vadd.f32 0.0, %v639
  %v641 = vpop.f32.mrb[0].mxu0
  %v642 = vadd.f32 0.0, %v641
  %v643 = vpop.f32.mrb[0].mxu0
  %v644 = vadd.f32 0.0, %v643
  %v645 = vpop.f32.mrb[0].mxu0
  %v646 = vadd.f32 0.0, %v645
  %647 = vmatprep.mubr.bf16.mxu0 0
  %648 = vmatmul.mubr.bf16.gmra.mrb[0].mxu0 %v550
  %v649 = vpop.f32.mrb[0].mxu0
  %v650 = vadd.f32 0.0, %v649
  %v651 = vpop.f32.mrb[0].mxu0
  %v652 = vadd.f32 0.0, %v651
  %v653 = vpop.f32.mrb[0].mxu0
  %v654 = vadd.f32 0.0, %v653
  %v655 = vpop.f32.mrb[0].mxu0
  %v656 = vadd.f32 0.0, %v655
  %657 = vmatprep.mubr.bf16.mxu0 0
  %658 = vmatmul.mubr.bf16.gmra.mrb[0].mxu0 %v553
  %v659 = vpop.f32.mrb[0].mxu0
  %v660 = vadd.f32 0.0, %v659
  %v661 = vpop.f32.mrb[0].mxu0
  %v662 = vadd.f32 0.0, %v661
  %v663 = vpop.f32.mrb[0].mxu0
  %v664 = vadd.f32 0.0, %v663
  %v665 = vpop.f32.mrb[0].mxu0
  %v666 = vadd.f32 0.0, %v665
  %667 = vmatprep.mubr.bf16.mxu0 0
  %668 = vmatmul.mubr.bf16.gmra.mrb[0].mxu0 %v556
  %v669 = vpop.f32.mrb[0].mxu0
  %v670 = vadd.f32 0.0, %v669
  %v671 = vpop.f32.mrb[0].mxu0
  %v672 = vadd.f32 0.0, %v671
  %v673 = vpop.f32.mrb[0].mxu0
  %v674 = vadd.f32 0.0, %v673
  %v675 = vpop.f32.mrb[0].mxu0
  %v676 = vadd.f32 0.0, %v675
  %677 = vdwg.mxu0
  %v683 = vunpack.c.l.b16 %v472
  %v684 = vunpack.c.h.b16 %v472
  %v685 = vunpack.c.l.b16 %v473
  %v686 = vunpack.c.h.b16 %v473
  %v687 = vunpack.c.l.b16 %v474
  %v688 = vunpack.c.h.b16 %v474
  %v689 = vunpack.c.l.b16 %v475
  %v690 = vunpack.c.h.b16 %v475
  %v691 = vunpack.c.l.b16 %v476
  %v692 = vunpack.c.h.b16 %v476
  %v693 = vpack.c.b16 %v685, %v683
  %v694 = vpack.c.b16 %v686, %v684
  %v695 = vpack.c.b16 %v689, %v687
  %v696 = vpack.c.b16 %v690, %v688
  %v697 = vpack.c.b16 %v691, %v691
  %v698 = vpack.c.b16 %v692, %v692
  %v704 = vsel %vm533, %v464, 0
  %v707 = vsel %vm533, %v465, 0
  %v710 = vsel %vm533, %v466, 0
  %v713 = vsel %vm533, %v467, 0
  %v716 = vsel %vm533, %v468, 0
  %v719 = vsel %vm533, %v469, 0
  %v722 = vsel %vm533, %v470, 0
  %v725 = vsel %vm533, %v471, 0
  %v728 = vsel %vm558, %v697, 0
  %v731 = vsel %vm558, %v698, 0
  %733 = vmatprep.subr.bf16.mxu0 %v694
  %734 = vmatpush1.bf16.msra.mxu0 %v693
  %735 = vmatprep.subr.bf16.mxu0 %v696
  %736 = vmatpush1.bf16.msra.mxu0 %v695
  %737 = vmatprep.subr.bf16.mxu0 %v731
  %738 = vmatpush1.bf16.msra.mxu0 %v728
  %739 = vmatprep.subr.bf16.mxu0 0
  %740 = vmatpush1.bf16.msra.mxu0 0
  %741 = vmatprep.subr.bf16.mxu0 0
  %742 = vmatpush1.bf16.msra.mxu0 0
  %743 = vmatprep.subr.bf16.mxu0 0
  %744 = vmatpush1.bf16.msra.mxu0 0
  %745 = vmatprep.subr.bf16.mxu0 0
  %746 = vmatpush1.bf16.msra.mxu0 0
  %747 = vmatprep.subr.bf16.mxu0 0
  %748 = vmatpush1.bf16.msra.mxu0 0
  %749 = vmatprep.subr.bf16.mxu0 0
  %750 = vmatpush1.bf16.msra.mxu0 0
  %751 = vmatprep.subr.bf16.mxu0 0
  %752 = vmatpush1.bf16.msra.mxu0 0
  %753 = vmatprep.subr.bf16.mxu0 0
  %754 = vmatpush1.bf16.msra.mxu0 0
  %755 = vmatprep.subr.bf16.mxu0 0
  %756 = vmatpush1.bf16.msra.mxu0 0
  %757 = vmatprep.subr.bf16.mxu0 0
  %758 = vmatpush1.bf16.msra.mxu0 0
  %759 = vmatprep.subr.bf16.mxu0 0
  %760 = vmatpush1.bf16.msra.mxu0 0
  %761 = vmatprep.subr.bf16.mxu0 0
  %762 = vmatpush1.bf16.msra.mxu0 0
  %763 = vmatprep.subr.bf16.mxu0 0
  %764 = vmatpush1.bf16.msra.mxu0 0
  %765 = vmatprep.mubr.bf16.mxu0 0
  %766 = vmatmul.mubr.bf16.gmra.mrb[0].mxu0 %v704
  %v767 = vpop.f32.mrb[0].mxu0
  %v768 = vadd.f32 %v600, %v767
  %v769 = vpop.f32.mrb[0].mxu0
  %v770 = vadd.f32 %v602, %v769
  %v771 = vpop.f32.mrb[0].mxu0
  %v772 = vadd.f32 %v604, %v771
  %v773 = vpop.f32.mrb[0].mxu0
  %v774 = vadd.f32 %v606, %v773
  %775 = vmatprep.mubr.bf16.mxu0 0
  %776 = vmatmul.mubr.bf16.gmra.mrb[0].mxu0 %v707
  %v777 = vpop.f32.mrb[0].mxu0
  %v778 = vadd.f32 %v610, %v777
  %v779 = vpop.f32.mrb[0].mxu0
  %v780 = vadd.f32 %v612, %v779
  %v781 = vpop.f32.mrb[0].mxu0
  %v782 = vadd.f32 %v614, %v781
  %v783 = vpop.f32.mrb[0].mxu0
  %v784 = vadd.f32 %v616, %v783
  %785 = vmatprep.mubr.bf16.mxu0 0
  %786 = vmatmul.mubr.bf16.gmra.mrb[0].mxu0 %v710
  %v787 = vpop.f32.mrb[0].mxu0
  %v788 = vadd.f32 %v620, %v787
  %v789 = vpop.f32.mrb[0].mxu0
  %v790 = vadd.f32 %v622, %v789
  %v791 = vpop.f32.mrb[0].mxu0
  %v792 = vadd.f32 %v624, %v791
  %v793 = vpop.f32.mrb[0].mxu0
  %v794 = vadd.f32 %v626, %v793
  %795 = vmatprep.mubr.bf16.mxu0 0
  %796 = vmatmul.mubr.bf16.gmra.mrb[0].mxu0 %v713
  %v797 = vpop.f32.mrb[0].mxu0
  %v798 = vadd.f32 %v630, %v797
  %v799 = vpop.f32.mrb[0].mxu0
  %v800 = vadd.f32 %v632, %v799
  %v801 = vpop.f32.mrb[0].mxu0
  %v802 = vadd.f32 %v634, %v801
  %v803 = vpop.f32.mrb[0].mxu0
  %v804 = vadd.f32 %v636, %v803
  %805 = vmatprep.mubr.bf16.mxu0 0
  %806 = vmatmul.mubr.bf16.gmra.mrb[0].mxu0 %v716
  %v807 = vpop.f32.mrb[0].mxu0
  %v808 = vadd.f32 %v640, %v807
  %v809 = vpop.f32.mrb[0].mxu0
  %v810 = vadd.f32 %v642, %v809
  %v811 = vpop.f32.mrb[0].mxu0
  %v812 = vadd.f32 %v644, %v811
  %v813 = vpop.f32.mrb[0].mxu0
  %v814 = vadd.f32 %v646, %v813
  %815 = vmatprep.mubr.bf16.mxu0 0
  %816 = vmatmul.mubr.bf16.gmra.mrb[0].mxu0 %v719
  %v817 = vpop.f32.mrb[0].mxu0
  %v818 = vadd.f32 %v650, %v817
  %v819 = vpop.f32.mrb[0].mxu0
  %v820 = vadd.f32 %v652, %v819
  %v821 = vpop.f32.mrb[0].mxu0
  %v822 = vadd.f32 %v654, %v821
  %v823 = vpop.f32.mrb[0].mxu0
  %v824 = vadd.f32 %v656, %v823
  %825 = vmatprep.mubr.bf16.mxu0 0
  %826 = vmatmul.mubr.bf16.gmra.mrb[0].mxu0 %v722
  %v827 = vpop.f32.mrb[0].mxu0
  %v828 = vadd.f32 %v660, %v827
  %v829 = vpop.f32.mrb[0].mxu0
  %v830 = vadd.f32 %v662, %v829
  %v831 = vpop.f32.mrb[0].mxu0
  %v832 = vadd.f32 %v664, %v831
  %v833 = vpop.f32.mrb[0].mxu0
  %v834 = vadd.f32 %v666, %v833
  %835 = vmatprep.mubr.bf16.mxu0 0
  %836 = vmatmul.mubr.bf16.gmra.mrb[0].mxu0 %v725
  %v837 = vpop.f32.mrb[0].mxu0
  %v838 = vadd.f32 %v670, %v837
  %v839 = vpop.f32.mrb[0].mxu0
  %v840 = vadd.f32 %v672, %v839
  %v841 = vpop.f32.mrb[0].mxu0
  %v842 = vadd.f32 %v674, %v841
  %v843 = vpop.f32.mrb[0].mxu0
  %v844 = vadd.f32 %v676, %v843
  %845 = vdwg.mxu0
  %s846 = scalar_lea.vmem %s1, 16
  %v847 = vld [vmem:[%s846] sm:$0xff]
  %v848 = vld [vmem:[%s846 + $0x8] sm:$0xff]
  %v849 = vld [vmem:[%s846 + $0x10] sm:$0xff]
  %v850 = vld [vmem:[%s846 + $0x18] sm:$0xff]
  %v851 = vld [vmem:[%s846 + $0x20] sm:$0xff]
  %v852 = vld [vmem:[%s846 + $0x28] sm:$0xff]
  %v853 = vld [vmem:[%s846 + $0x30] sm:$0xff]
  %v854 = vld [vmem:[%s846 + $0x38] sm:$0xff]
  %v855 = vld [vmem:[%s846 + $0x40] sm:$0xff]
  %v856 = vld [vmem:[%s846 + $0x48] sm:$0xff]
  %v857 = vld [vmem:[%s846 + $0x50] sm:$0xff]
  %v858 = vld [vmem:[%s846 + $0x58] sm:$0xff]
  %v859 = vld [vmem:[%s846 + $0x60] sm:$0xff]
  %v860 = vld [vmem:[%s846 + $0x68] sm:$0xff]
  %v861 = vld [vmem:[%s846 + $0x70] sm:$0xff]
  %v862 = vld [vmem:[%s846 + $0x78] sm:$0xff]
  %v863 = vpack.c.bf16 %v848, %v847
  %v864 = vpack.c.bf16 %v850, %v849
  %v865 = vpack.c.bf16 %v852, %v851
  %v866 = vpack.c.bf16 %v854, %v853
  %v867 = vpack.c.bf16 %v856, %v855
  %v868 = vpack.c.bf16 %v858, %v857
  %v869 = vpack.c.bf16 %v860, %v859
  %v870 = vpack.c.bf16 %v862, %v861
  %s871 = scalar_lea.vmem %s10, 80
  %v872 = vld [vmem:[%s871] sm:$0xff]
  %v873 = vld [vmem:[%s871 + $0x8] sm:$0xff]
  %v874 = vld [vmem:[%s871 + $0x10] sm:$0xff]
  %v875 = vld [vmem:[%s871 + $0x18] sm:$0xff]
  %v876 = vld [vmem:[%s871 + $0x20] sm:$0xff]
  %v882 = vunpack.c.l.b16 %v872
  %v883 = vunpack.c.h.b16 %v872
  %v884 = vunpack.c.l.b16 %v873
  %v885 = vunpack.c.h.b16 %v873
  %v886 = vunpack.c.l.b16 %v874
  %v887 = vunpack.c.h.b16 %v874
  %v888 = vunpack.c.l.b16 %v875
  %v889 = vunpack.c.h.b16 %v875
  %v890 = vunpack.c.l.b16 %v876
  %v891 = vunpack.c.h.b16 %v876
  %v892 = vpack.c.b16 %v884, %v882
  %v893 = vpack.c.b16 %v885, %v883
  %v894 = vpack.c.b16 %v888, %v886
  %v895 = vpack.c.b16 %v889, %v887
  %v896 = vpack.c.b16 %v890, %v890
  %v897 = vpack.c.b16 %v891, %v891
  %v903 = vsel %vm533, %v863, 0
  %v906 = vsel %vm533, %v864, 0
  %v909 = vsel %vm533, %v865, 0
  %v912 = vsel %vm533, %v866, 0
  %v915 = vsel %vm533, %v867, 0
  %v918 = vsel %vm533, %v868, 0
  %v921 = vsel %vm533, %v869, 0
  %v924 = vsel %vm533, %v870, 0
  %v927 = vsel %vm558, %v896, 0
  %v930 = vsel %vm558, %v897, 0
  %932 = vmatprep.subr.bf16.mxu0 %v893
  %933 = vmatpush1.bf16.msra.mxu0 %v892
  %934 = vmatprep.subr.bf16.mxu0 %v895
  %935 = vmatpush1.bf16.msra.mxu0 %v894
  %936 = vmatprep.subr.bf16.mxu0 %v930
  %937 = vmatpush1.bf16.msra.mxu0 %v927
  %938 = vmatprep.subr.bf16.mxu0 0
  %939 = vmatpush1.bf16.msra.mxu0 0
  %940 = vmatprep.subr.bf16.mxu0 0
  %941 = vmatpush1.bf16.msra.mxu0 0
  %942 = vmatprep.subr.bf16.mxu0 0
  %943 = vmatpush1.bf16.msra.mxu0 0
  %944 = vmatprep.subr.bf16.mxu0 0
  %945 = vmatpush1.bf16.msra.mxu0 0
  %946 = vmatprep.subr.bf16.mxu0 0
  %947 = vmatpush1.bf16.msra.mxu0 0
  %948 = vmatprep.subr.bf16.mxu0 0
  %949 = vmatpush1.bf16.msra.mxu0 0
  %950 = vmatprep.subr.bf16.mxu0 0
  %951 = vmatpush1.bf16.msra.mxu0 0
  %952 = vmatprep.subr.bf16.mxu0 0
  %953 = vmatpush1.bf16.msra.mxu0 0
  %954 = vmatprep.subr.bf16.mxu0 0
  %955 = vmatpush1.bf16.msra.mxu0 0
  %956 = vmatprep.subr.bf16.mxu0 0
  %957 = vmatpush1.bf16.msra.mxu0 0
  %958 = vmatprep.subr.bf16.mxu0 0
  %959 = vmatpush1.bf16.msra.mxu0 0
  %960 = vmatprep.subr.bf16.mxu0 0
  %961 = vmatpush1.bf16.msra.mxu0 0
  %962 = vmatprep.subr.bf16.mxu0 0
  %963 = vmatpush1.bf16.msra.mxu0 0
  %964 = vmatprep.mubr.bf16.mxu0 0
  %965 = vmatmul.mubr.bf16.gmra.mrb[0].mxu0 %v903
  %v966 = vpop.f32.mrb[0].mxu0
  %v967 = vadd.f32 0.0, %v966
  %v968 = vpop.f32.mrb[0].mxu0
  %v969 = vadd.f32 0.0, %v968
  %v970 = vpop.f32.mrb[0].mxu0
  %v971 = vadd.f32 0.0, %v970
  %v972 = vpop.f32.mrb[0].mxu0
  %v973 = vadd.f32 0.0, %v972
  %974 = vmatprep.mubr.bf16.mxu0 0
  %975 = vmatmul.mubr.bf16.gmra.mrb[0].mxu0 %v906
  %v976 = vpop.f32.mrb[0].mxu0
  %v977 = vadd.f32 0.0, %v976
  %v978 = vpop.f32.mrb[0].mxu0
  %v979 = vadd.f32 0.0, %v978
  %v980 = vpop.f32.mrb[0].mxu0
  %v981 = vadd.f32 0.0, %v980
  %v982 = vpop.f32.mrb[0].mxu0
  %v983 = vadd.f32 0.0, %v982
  %984 = vmatprep.mubr.bf16.mxu0 0
  %985 = vmatmul.mubr.bf16.gmra.mrb[0].mxu0 %v909
  %v986 = vpop.f32.mrb[0].mxu0
  %v987 = vadd.f32 0.0, %v986
  %v988 = vpop.f32.mrb[0].mxu0
  %v989 = vadd.f32 0.0, %v988
  %v990 = vpop.f32.mrb[0].mxu0
  %v991 = vadd.f32 0.0, %v990
  %v992 = vpop.f32.mrb[0].mxu0
  %v993 = vadd.f32 0.0, %v992
  %994 = vmatprep.mubr.bf16.mxu0 0
  %995 = vmatmul.mubr.bf16.gmra.mrb[0].mxu0 %v912
  %v996 = vpop.f32.mrb[0].mxu0
  %v997 = vadd.f32 0.0, %v996
  %v998 = vpop.f32.mrb[0].mxu0
  %v999 = vadd.f32 0.0, %v998
  %v1000 = vpop.f32.mrb[0].mxu0
  %v1001 = vadd.f32 0.0, %v1000
  %v1002 = vpop.f32.mrb[0].mxu0
  %v1003 = vadd.f32 0.0, %v1002
  %1004 = vmatprep.mubr.bf16.mxu0 0
  %1005 = vmatmul.mubr.bf16.gmra.mrb[0].mxu0 %v915
  %v1006 = vpop.f32.mrb[0].mxu0
  %v1007 = vadd.f32 0.0, %v1006
  %v1008 = vpop.f32.mrb[0].mxu0
  %v1009 = vadd.f32 0.0, %v1008
  %v1010 = vpop.f32.mrb[0].mxu0
  %v1011 = vadd.f32 0.0, %v1010
  %v1012 = vpop.f32.mrb[0].mxu0
  %v1013 = vadd.f32 0.0, %v1012
  %1014 = vmatprep.mubr.bf16.mxu0 0
  %1015 = vmatmul.mubr.bf16.gmra.mrb[0].mxu0 %v918
  %v1016 = vpop.f32.mrb[0].mxu0
  %v1017 = vadd.f32 0.0, %v1016
  %v1018 = vpop.f32.mrb[0].mxu0
  %v1019 = vadd.f32 0.0, %v1018
  %v1020 = vpop.f32.mrb[0].mxu0
  %v1021 = vadd.f32 0.0, %v1020
  %v1022 = vpop.f32.mrb[0].mxu0
  %v1023 = vadd.f32 0.0, %v1022
  %1024 = vmatprep.mubr.bf16.mxu0 0
  %1025 = vmatmul.mubr.bf16.gmra.mrb[0].mxu0 %v921
  %v1026 = vpop.f32.mrb[0].mxu0
  %v1027 = vadd.f32 0.0, %v1026
  %v1028 = vpop.f32.mrb[0].mxu0
  %v1029 = vadd.f32 0.0, %v1028
  %v1030 = vpop.f32.mrb[0].mxu0
  %v1031 = vadd.f32 0.0, %v1030
  %v1032 = vpop.f32.mrb[0].mxu0
  %v1033 = vadd.f32 0.0, %v1032
  %1034 = vmatprep.mubr.bf16.mxu0 0
  %1035 = vmatmul.mubr.bf16.gmra.mrb[0].mxu0 %v924
  %v1036 = vpop.f32.mrb[0].mxu0
  %v1037 = vadd.f32 0.0, %v1036
  %v1038 = vpop.f32.mrb[0].mxu0
  %v1039 = vadd.f32 0.0, %v1038
  %v1040 = vpop.f32.mrb[0].mxu0
  %v1041 = vadd.f32 0.0, %v1040
  %v1042 = vpop.f32.mrb[0].mxu0
  %v1043 = vadd.f32 0.0, %v1042
  %1044 = vdwg.mxu0
  %v1045 = vadd.f32 %v768, %v967
  %v1046 = vadd.f32 %v770, %v969
  %v1047 = vadd.f32 %v772, %v971
  %v1048 = vadd.f32 %v774, %v973
  %v1049 = vadd.f32 %v778, %v977
  %v1050 = vadd.f32 %v780, %v979
  %v1051 = vadd.f32 %v782, %v981
  %v1052 = vadd.f32 %v784, %v983
  %v1053 = vadd.f32 %v788, %v987
  %v1054 = vadd.f32 %v790, %v989
  %v1055 = vadd.f32 %v792, %v991
  %v1056 = vadd.f32 %v794, %v993
  %v1057 = vadd.f32 %v798, %v997
  %v1058 = vadd.f32 %v800, %v999
  %v1059 = vadd.f32 %v802, %v1001
  %v1060 = vadd.f32 %v804, %v1003
  %v1061 = vadd.f32 %v808, %v1007
  %v1062 = vadd.f32 %v810, %v1009
  %v1063 = vadd.f32 %v812, %v1011
  %v1064 = vadd.f32 %v814, %v1013
  %v1065 = vadd.f32 %v818, %v1017
  %v1066 = vadd.f32 %v820, %v1019
  %v1067 = vadd.f32 %v822, %v1021
  %v1068 = vadd.f32 %v824, %v1023
  %v1069 = vadd.f32 %v828, %v1027
  %v1070 = vadd.f32 %v830, %v1029
  %v1071 = vadd.f32 %v832, %v1031
  %v1072 = vadd.f32 %v834, %v1033
  %v1073 = vadd.f32 %v838, %v1037
  %v1074 = vadd.f32 %v840, %v1039
  %v1075 = vadd.f32 %v842, %v1041
  %v1076 = vadd.f32 %v844, %v1043
  %s1077 = scalar_lea.vmem %s1, 24
  %v1078 = vld [vmem:[%s1077] sm:$0xff]
  %v1079 = vld [vmem:[%s1077 + $0x8] sm:$0xff]
  %v1080 = vld [vmem:[%s1077 + $0x10] sm:$0xff]
  %v1081 = vld [vmem:[%s1077 + $0x18] sm:$0xff]
  %v1082 = vld [vmem:[%s1077 + $0x20] sm:$0xff]
  %v1083 = vld [vmem:[%s1077 + $0x28] sm:$0xff]
  %v1084 = vld [vmem:[%s1077 + $0x30] sm:$0xff]
  %v1085 = vld [vmem:[%s1077 + $0x38] sm:$0xff]
  %v1086 = vld [vmem:[%s1077 + $0x40] sm:$0xff]
  %v1087 = vld [vmem:[%s1077 + $0x48] sm:$0xff]
  %v1088 = vld [vmem:[%s1077 + $0x50] sm:$0xff]
  %v1089 = vld [vmem:[%s1077 + $0x58] sm:$0xff]
  %v1090 = vld [vmem:[%s1077 + $0x60] sm:$0xff]
  %v1091 = vld [vmem:[%s1077 + $0x68] sm:$0xff]
  %v1092 = vld [vmem:[%s1077 + $0x70] sm:$0xff]
  %v1093 = vld [vmem:[%s1077 + $0x78] sm:$0xff]
  %v1094 = vpack.c.bf16 %v1079, %v1078
  %v1095 = vpack.c.bf16 %v1081, %v1080
  %v1096 = vpack.c.bf16 %v1083, %v1082
  %v1097 = vpack.c.bf16 %v1085, %v1084
  %v1098 = vpack.c.bf16 %v1087, %v1086
  %v1099 = vpack.c.bf16 %v1089, %v1088
  %v1100 = vpack.c.bf16 %v1091, %v1090
  %v1101 = vpack.c.bf16 %v1093, %v1092
  %s1102 = scalar_lea.vmem %s10, 120
  %v1103 = vld [vmem:[%s1102] sm:$0xff]
  %v1104 = vld [vmem:[%s1102 + $0x8] sm:$0xff]
  %v1105 = vld [vmem:[%s1102 + $0x10] sm:$0xff]
  %v1106 = vld [vmem:[%s1102 + $0x18] sm:$0xff]
  %v1107 = vld [vmem:[%s1102 + $0x20] sm:$0xff]
  %v1113 = vunpack.c.l.b16 %v1103
  %v1114 = vunpack.c.h.b16 %v1103
  %v1115 = vunpack.c.l.b16 %v1104
  %v1116 = vunpack.c.h.b16 %v1104
  %v1117 = vunpack.c.l.b16 %v1105
  %v1118 = vunpack.c.h.b16 %v1105
  %v1119 = vunpack.c.l.b16 %v1106
  %v1120 = vunpack.c.h.b16 %v1106
  %v1121 = vunpack.c.l.b16 %v1107
  %v1122 = vunpack.c.h.b16 %v1107
  %v1123 = vpack.c.b16 %v1115, %v1113
  %v1124 = vpack.c.b16 %v1116, %v1114
  %v1125 = vpack.c.b16 %v1119, %v1117
  %v1126 = vpack.c.b16 %v1120, %v1118
  %v1127 = vpack.c.b16 %v1121, %v1121
  %v1128 = vpack.c.b16 %v1122, %v1122
  %v1134 = vsel %vm533, %v1094, 0
  %v1137 = vsel %vm533, %v1095, 0
  %v1140 = vsel %vm533, %v1096, 0
  %v1143 = vsel %vm533, %v1097, 0
  %v1146 = vsel %vm533, %v1098, 0
  %v1149 = vsel %vm533, %v1099, 0
  %v1152 = vsel %vm533, %v1100, 0
  %v1155 = vsel %vm533, %v1101, 0
  %v1158 = vsel %vm558, %v1127, 0
  %v1161 = vsel %vm558, %v1128, 0
  %1163 = vmatprep.subr.bf16.mxu0 %v1124
  %1164 = vmatpush1.bf16.msra.mxu0 %v1123
  %1165 = vmatprep.subr.bf16.mxu0 %v1126
  %1166 = vmatpush1.bf16.msra.mxu0 %v1125
  %1167 = vmatprep.subr.bf16.mxu0 %v1161
  %1168 = vmatpush1.bf16.msra.mxu0 %v1158
  %1169 = vmatprep.subr.bf16.mxu0 0
  %1170 = vmatpush1.bf16.msra.mxu0 0
  %1171 = vmatprep.subr.bf16.mxu0 0
  %1172 = vmatpush1.bf16.msra.mxu0 0
  %1173 = vmatprep.subr.bf16.mxu0 0
  %1174 = vmatpush1.bf16.msra.mxu0 0
  %1175 = vmatprep.subr.bf16.mxu0 0
  %1176 = vmatpush1.bf16.msra.mxu0 0
  %1177 = vmatprep.subr.bf16.mxu0 0
  %1178 = vmatpush1.bf16.msra.mxu0 0
  %1179 = vmatprep.subr.bf16.mxu0 0
  %1180 = vmatpush1.bf16.msra.mxu0 0
  %1181 = vmatprep.subr.bf16.mxu0 0
  %1182 = vmatpush1.bf16.msra.mxu0 0
  %1183 = vmatprep.subr.bf16.mxu0 0
  %1184 = vmatpush1.bf16.msra.mxu0 0
  %1185 = vmatprep.subr.bf16.mxu0 0
  %1186 = vmatpush1.bf16.msra.mxu0 0
  %1187 = vmatprep.subr.bf16.mxu0 0
  %1188 = vmatpush1.bf16.msra.mxu0 0
  %1189 = vmatprep.subr.bf16.mxu0 0
  %1190 = vmatpush1.bf16.msra.mxu0 0
  %1191 = vmatprep.subr.bf16.mxu0 0
  %1192 = vmatpush1.bf16.msra.mxu0 0
  %1193 = vmatprep.subr.bf16.mxu0 0
  %1194 = vmatpush1.bf16.msra.mxu0 0
  %1195 = vmatprep.mubr.bf16.mxu0 0
  %1196 = vmatmul.mubr.bf16.gmra.mrb[0].mxu0 %v1134
  %v1197 = vpop.f32.mrb[0].mxu0
  %v1198 = vadd.f32 0.0, %v1197
  %v1199 = vpop.f32.mrb[0].mxu0
  %v1200 = vadd.f32 0.0, %v1199
  %v1201 = vpop.f32.mrb[0].mxu0
  %v1202 = vadd.f32 0.0, %v1201
  %v1203 = vpop.f32.mrb[0].mxu0
  %v1204 = vadd.f32 0.0, %v1203
  %1205 = vmatprep.mubr.bf16.mxu0 0
  %1206 = vmatmul.mubr.bf16.gmra.mrb[0].mxu0 %v1137
  %v1207 = vpop.f32.mrb[0].mxu0
  %v1208 = vadd.f32 0.0, %v1207
  %v1209 = vpop.f32.mrb[0].mxu0
  %v1210 = vadd.f32 0.0, %v1209
  %v1211 = vpop.f32.mrb[0].mxu0
  %v1212 = vadd.f32 0.0, %v1211
  %v1213 = vpop.f32.mrb[0].mxu0
  %v1214 = vadd.f32 0.0, %v1213
  %1215 = vmatprep.mubr.bf16.mxu0 0
  %1216 = vmatmul.mubr.bf16.gmra.mrb[0].mxu0 %v1140
  %v1217 = vpop.f32.mrb[0].mxu0
  %v1218 = vadd.f32 0.0, %v1217
  %v1219 = vpop.f32.mrb[0].mxu0
  %v1220 = vadd.f32 0.0, %v1219
  %v1221 = vpop.f32.mrb[0].mxu0
  %v1222 = vadd.f32 0.0, %v1221
  %v1223 = vpop.f32.mrb[0].mxu0
  %v1224 = vadd.f32 0.0, %v1223
  %1225 = vmatprep.mubr.bf16.mxu0 0
  %1226 = vmatmul.mubr.bf16.gmra.mrb[0].mxu0 %v1143
  %v1227 = vpop.f32.mrb[0].mxu0
  %v1228 = vadd.f32 0.0, %v1227
  %v1229 = vpop.f32.mrb[0].mxu0
  %v1230 = vadd.f32 0.0, %v1229
  %v1231 = vpop.f32.mrb[0].mxu0
  %v1232 = vadd.f32 0.0, %v1231
  %v1233 = vpop.f32.mrb[0].mxu0
  %v1234 = vadd.f32 0.0, %v1233
  %1235 = vmatprep.mubr.bf16.mxu0 0
  %1236 = vmatmul.mubr.bf16.gmra.mrb[0].mxu0 %v1146
  %v1237 = vpop.f32.mrb[0].mxu0
  %v1238 = vadd.f32 0.0, %v1237
  %v1239 = vpop.f32.mrb[0].mxu0
  %v1240 = vadd.f32 0.0, %v1239
  %v1241 = vpop.f32.mrb[0].mxu0
  %v1242 = vadd.f32 0.0, %v1241
  %v1243 = vpop.f32.mrb[0].mxu0
  %v1244 = vadd.f32 0.0, %v1243
  %1245 = vmatprep.mubr.bf16.mxu0 0
  %1246 = vmatmul.mubr.bf16.gmra.mrb[0].mxu0 %v1149
  %v1247 = vpop.f32.mrb[0].mxu0
  %v1248 = vadd.f32 0.0, %v1247
  %v1249 = vpop.f32.mrb[0].mxu0
  %v1250 = vadd.f32 0.0, %v1249
  %v1251 = vpop.f32.mrb[0].mxu0
  %v1252 = vadd.f32 0.0, %v1251
  %v1253 = vpop.f32.mrb[0].mxu0
  %v1254 = vadd.f32 0.0, %v1253
  %1255 = vmatprep.mubr.bf16.mxu0 0
  %1256 = vmatmul.mubr.bf16.gmra.mrb[0].mxu0 %v1152
  %v1257 = vpop.f32.mrb[0].mxu0
  %v1258 = vadd.f32 0.0, %v1257
  %v1259 = vpop.f32.mrb[0].mxu0
  %v1260 = vadd.f32 0.0, %v1259
  %v1261 = vpop.f32.mrb[0].mxu0
  %v1262 = vadd.f32 0.0, %v1261
  %v1263 = vpop.f32.mrb[0].mxu0
  %v1264 = vadd.f32 0.0, %v1263
  %1265 = vmatprep.mubr.bf16.mxu0 0
  %1266 = vmatmul.mubr.bf16.gmra.mrb[0].mxu0 %v1155
  %v1267 = vpop.f32.mrb[0].mxu0
  %v1268 = vadd.f32 0.0, %v1267
  %v1269 = vpop.f32.mrb[0].mxu0
  %v1270 = vadd.f32 0.0, %v1269
  %v1271 = vpop.f32.mrb[0].mxu0
  %v1272 = vadd.f32 0.0, %v1271
  %v1273 = vpop.f32.mrb[0].mxu0
  %v1274 = vadd.f32 0.0, %v1273
  %1275 = vdwg.mxu0
  %v1276 = vadd.f32 %v1045, %v1198
  %v1277 = vadd.f32 %v1046, %v1200
  %v1278 = vadd.f32 %v1047, %v1202
  %v1279 = vadd.f32 %v1048, %v1204
  %v1280 = vadd.f32 %v1049, %v1208
  %v1281 = vadd.f32 %v1050, %v1210
  %v1282 = vadd.f32 %v1051, %v1212
  %v1283 = vadd.f32 %v1052, %v1214
  %v1284 = vadd.f32 %v1053, %v1218
  %v1285 = vadd.f32 %v1054, %v1220
  %v1286 = vadd.f32 %v1055, %v1222
  %v1287 = vadd.f32 %v1056, %v1224
  %v1288 = vadd.f32 %v1057, %v1228
  %v1289 = vadd.f32 %v1058, %v1230
  %v1290 = vadd.f32 %v1059, %v1232
  %v1291 = vadd.f32 %v1060, %v1234
  %v1292 = vadd.f32 %v1061, %v1238
  %v1293 = vadd.f32 %v1062, %v1240
  %v1294 = vadd.f32 %v1063, %v1242
  %v1295 = vadd.f32 %v1064, %v1244
  %v1296 = vadd.f32 %v1065, %v1248
  %v1297 = vadd.f32 %v1066, %v1250
  %v1298 = vadd.f32 %v1067, %v1252
  %v1299 = vadd.f32 %v1068, %v1254
  %v1300 = vadd.f32 %v1069, %v1258
  %v1301 = vadd.f32 %v1070, %v1260
  %v1302 = vadd.f32 %v1071, %v1262
  %v1303 = vadd.f32 %v1072, %v1264
  %v1304 = vadd.f32 %v1073, %v1268
  %v1305 = vadd.f32 %v1074, %v1270
  %v1306 = vadd.f32 %v1075, %v1272
  %v1307 = vadd.f32 %v1076, %v1274
  %s1308 = scalar_lea.vmem %s1, 32
  %v1309 = vld [vmem:[%s1308] sm:$0xff]
  %v1310 = vld [vmem:[%s1308 + $0x8] sm:$0xff]
  %v1311 = vld [vmem:[%s1308 + $0x10] sm:$0xff]
  %v1312 = vld [vmem:[%s1308 + $0x18] sm:$0xff]
  %v1313 = vld [vmem:[%s1308 + $0x20] sm:$0xff]
  %v1314 = vld [vmem:[%s1308 + $0x28] sm:$0xff]
  %v1315 = vld [vmem:[%s1308 + $0x30] sm:$0xff]
  %v1316 = vld [vmem:[%s1308 + $0x38] sm:$0xff]
  %v1317 = vld [vmem:[%s1308 + $0x40] sm:$0xff]
  %v1318 = vld [vmem:[%s1308 + $0x48] sm:$0xff]
  %v1319 = vld [vmem:[%s1308 + $0x50] sm:$0xff]
  %v1320 = vld [vmem:[%s1308 + $0x58] sm:$0xff]
  %v1321 = vld [vmem:[%s1308 + $0x60] sm:$0xff]
  %v1322 = vld [vmem:[%s1308 + $0x68] sm:$0xff]
  %v1323 = vld [vmem:[%s1308 + $0x70] sm:$0xff]
  %v1324 = vld [vmem:[%s1308 + $0x78] sm:$0xff]
  %v1325 = vpack.c.bf16 %v1310, %v1309
  %v1326 = vpack.c.bf16 %v1312, %v1311
  %v1327 = vpack.c.bf16 %v1314, %v1313
  %v1328 = vpack.c.bf16 %v1316, %v1315
  %v1329 = vpack.c.bf16 %v1318, %v1317
  %v1330 = vpack.c.bf16 %v1320, %v1319
  %v1331 = vpack.c.bf16 %v1322, %v1321
  %v1332 = vpack.c.bf16 %v1324, %v1323
  %s1333 = scalar_lea.vmem %s10, 160
  %v1334 = vld [vmem:[%s1333] sm:$0xff]
  %v1335 = vld [vmem:[%s1333 + $0x8] sm:$0xff]
  %v1336 = vld [vmem:[%s1333 + $0x10] sm:$0xff]
  %v1337 = vld [vmem:[%s1333 + $0x18] sm:$0xff]
  %v1338 = vld [vmem:[%s1333 + $0x20] sm:$0xff]
  %v1344 = vunpack.c.l.b16 %v1334
  %v1345 = vunpack.c.h.b16 %v1334
  %v1346 = vunpack.c.l.b16 %v1335
  %v1347 = vunpack.c.h.b16 %v1335
  %v1348 = vunpack.c.l.b16 %v1336
  %v1349 = vunpack.c.h.b16 %v1336
  %v1350 = vunpack.c.l.b16 %v1337
  %v1351 = vunpack.c.h.b16 %v1337
  %v1352 = vunpack.c.l.b16 %v1338
  %v1353 = vunpack.c.h.b16 %v1338
  %v1354 = vpack.c.b16 %v1346, %v1344
  %v1355 = vpack.c.b16 %v1347, %v1345
  %v1356 = vpack.c.b16 %v1350, %v1348
  %v1357 = vpack.c.b16 %v1351, %v1349
  %v1358 = vpack.c.b16 %v1352, %v1352
  %v1359 = vpack.c.b16 %v1353, %v1353
  %v1365 = vsel %vm533, %v1325, 0
  %v1368 = vsel %vm533, %v1326, 0
  %v1371 = vsel %vm533, %v1327, 0
  %v1374 = vsel %vm533, %v1328, 0
  %v1377 = vsel %vm533, %v1329, 0
  %v1380 = vsel %vm533, %v1330, 0
  %v1383 = vsel %vm533, %v1331, 0
  %v1386 = vsel %vm533, %v1332, 0
  %v1389 = vsel %vm558, %v1358, 0
  %v1392 = vsel %vm558, %v1359, 0
  %1394 = vmatprep.subr.bf16.mxu0 %v1355
  %1395 = vmatpush1.bf16.msra.mxu0 %v1354
  %1396 = vmatprep.subr.bf16.mxu0 %v1357
  %1397 = vmatpush1.bf16.msra.mxu0 %v1356
  %1398 = vmatprep.subr.bf16.mxu0 %v1392
  %1399 = vmatpush1.bf16.msra.mxu0 %v1389
  %1400 = vmatprep.subr.bf16.mxu0 0
  %1401 = vmatpush1.bf16.msra.mxu0 0
  %1402 = vmatprep.subr.bf16.mxu0 0
  %1403 = vmatpush1.bf16.msra.mxu0 0
  %1404 = vmatprep.subr.bf16.mxu0 0
  %1405 = vmatpush1.bf16.msra.mxu0 0
  %1406 = vmatprep.subr.bf16.mxu0 0
  %1407 = vmatpush1.bf16.msra.mxu0 0
  %1408 = vmatprep.subr.bf16.mxu0 0
  %1409 = vmatpush1.bf16.msra.mxu0 0
  %1410 = vmatprep.subr.bf16.mxu0 0
  %1411 = vmatpush1.bf16.msra.mxu0 0
  %1412 = vmatprep.subr.bf16.mxu0 0
  %1413 = vmatpush1.bf16.msra.mxu0 0
  %1414 = vmatprep.subr.bf16.mxu0 0
  %1415 = vmatpush1.bf16.msra.mxu0 0
  %1416 = vmatprep.subr.bf16.mxu0 0
  %1417 = vmatpush1.bf16.msra.mxu0 0
  %1418 = vmatprep.subr.bf16.mxu0 0
  %1419 = vmatpush1.bf16.msra.mxu0 0
  %1420 = vmatprep.subr.bf16.mxu0 0
  %1421 = vmatpush1.bf16.msra.mxu0 0
  %1422 = vmatprep.subr.bf16.mxu0 0
  %1423 = vmatpush1.bf16.msra.mxu0 0
  %1424 = vmatprep.subr.bf16.mxu0 0
  %1425 = vmatpush1.bf16.msra.mxu0 0
  %1426 = vmatprep.mubr.bf16.mxu0 0
  %1427 = vmatmul.mubr.bf16.gmra.mrb[0].mxu0 %v1365
  %v1428 = vpop.f32.mrb[0].mxu0
  %v1429 = vadd.f32 0.0, %v1428
  %v1430 = vpop.f32.mrb[0].mxu0
  %v1431 = vadd.f32 0.0, %v1430
  %v1432 = vpop.f32.mrb[0].mxu0
  %v1433 = vadd.f32 0.0, %v1432
  %v1434 = vpop.f32.mrb[0].mxu0
  %v1435 = vadd.f32 0.0, %v1434
  %1436 = vmatprep.mubr.bf16.mxu0 0
  %1437 = vmatmul.mubr.bf16.gmra.mrb[0].mxu0 %v1368
  %v1438 = vpop.f32.mrb[0].mxu0
  %v1439 = vadd.f32 0.0, %v1438
  %v1440 = vpop.f32.mrb[0].mxu0
  %v1441 = vadd.f32 0.0, %v1440
  %v1442 = vpop.f32.mrb[0].mxu0
  %v1443 = vadd.f32 0.0, %v1442
  %v1444 = vpop.f32.mrb[0].mxu0
  %v1445 = vadd.f32 0.0, %v1444
  %1446 = vmatprep.mubr.bf16.mxu0 0
  %1447 = vmatmul.mubr.bf16.gmra.mrb[0].mxu0 %v1371
  %v1448 = vpop.f32.mrb[0].mxu0
  %v1449 = vadd.f32 0.0, %v1448
  %v1450 = vpop.f32.mrb[0].mxu0
  %v1451 = vadd.f32 0.0, %v1450
  %v1452 = vpop.f32.mrb[0].mxu0
  %v1453 = vadd.f32 0.0, %v1452
  %v1454 = vpop.f32.mrb[0].mxu0
  %v1455 = vadd.f32 0.0, %v1454
  %1456 = vmatprep.mubr.bf16.mxu0 0
  %1457 = vmatmul.mubr.bf16.gmra.mrb[0].mxu0 %v1374
  %v1458 = vpop.f32.mrb[0].mxu0
  %v1459 = vadd.f32 0.0, %v1458
  %v1460 = vpop.f32.mrb[0].mxu0
  %v1461 = vadd.f32 0.0, %v1460
  %v1462 = vpop.f32.mrb[0].mxu0
  %v1463 = vadd.f32 0.0, %v1462
  %v1464 = vpop.f32.mrb[0].mxu0
  %v1465 = vadd.f32 0.0, %v1464
  %1466 = vmatprep.mubr.bf16.mxu0 0
  %1467 = vmatmul.mubr.bf16.gmra.mrb[0].mxu0 %v1377
  %v1468 = vpop.f32.mrb[0].mxu0
  %v1469 = vadd.f32 0.0, %v1468
  %v1470 = vpop.f32.mrb[0].mxu0
  %v1471 = vadd.f32 0.0, %v1470
  %v1472 = vpop.f32.mrb[0].mxu0
  %v1473 = vadd.f32 0.0, %v1472
  %v1474 = vpop.f32.mrb[0].mxu0
  %v1475 = vadd.f32 0.0, %v1474
  %1476 = vmatprep.mubr.bf16.mxu0 0
  %1477 = vmatmul.mubr.bf16.gmra.mrb[0].mxu0 %v1380
  %v1478 = vpop.f32.mrb[0].mxu0
  %v1479 = vadd.f32 0.0, %v1478
  %v1480 = vpop.f32.mrb[0].mxu0
  %v1481 = vadd.f32 0.0, %v1480
  %v1482 = vpop.f32.mrb[0].mxu0
  %v1483 = vadd.f32 0.0, %v1482
  %v1484 = vpop.f32.mrb[0].mxu0
  %v1485 = vadd.f32 0.0, %v1484
  %1486 = vmatprep.mubr.bf16.mxu0 0
  %1487 = vmatmul.mubr.bf16.gmra.mrb[0].mxu0 %v1383
  %v1488 = vpop.f32.mrb[0].mxu0
  %v1489 = vadd.f32 0.0, %v1488
  %v1490 = vpop.f32.mrb[0].mxu0
  %v1491 = vadd.f32 0.0, %v1490
  %v1492 = vpop.f32.mrb[0].mxu0
  %v1493 = vadd.f32 0.0, %v1492
  %v1494 = vpop.f32.mrb[0].mxu0
  %v1495 = vadd.f32 0.0, %v1494
  %1496 = vmatprep.mubr.bf16.mxu0 0
  %1497 = vmatmul.mubr.bf16.gmra.mrb[0].mxu0 %v1386
  %v1498 = vpop.f32.mrb[0].mxu0
  %v1499 = vadd.f32 0.0, %v1498
  %v1500 = vpop.f32.mrb[0].mxu0
  %v1501 = vadd.f32 0.0, %v1500
  %v1502 = vpop.f32.mrb[0].mxu0
  %v1503 = vadd.f32 0.0, %v1502
  %v1504 = vpop.f32.mrb[0].mxu0
  %v1505 = vadd.f32 0.0, %v1504
  %1506 = vdwg.mxu0
  %v1507 = vadd.f32 %v1276, %v1429
  %v1508 = vadd.f32 %v1277, %v1431
  %v1509 = vadd.f32 %v1278, %v1433
  %v1510 = vadd.f32 %v1279, %v1435
  %v1511 = vadd.f32 %v1280, %v1439
  %v1512 = vadd.f32 %v1281, %v1441
  %v1513 = vadd.f32 %v1282, %v1443
  %v1514 = vadd.f32 %v1283, %v1445
  %v1515 = vadd.f32 %v1284, %v1449
  %v1516 = vadd.f32 %v1285, %v1451
  %v1517 = vadd.f32 %v1286, %v1453
  %v1518 = vadd.f32 %v1287, %v1455
  %v1519 = vadd.f32 %v1288, %v1459
  %v1520 = vadd.f32 %v1289, %v1461
  %v1521 = vadd.f32 %v1290, %v1463
  %v1522 = vadd.f32 %v1291, %v1465
  %v1523 = vadd.f32 %v1292, %v1469
  %v1524 = vadd.f32 %v1293, %v1471
  %v1525 = vadd.f32 %v1294, %v1473
  %v1526 = vadd.f32 %v1295, %v1475
  %v1527 = vadd.f32 %v1296, %v1479
  %v1528 = vadd.f32 %v1297, %v1481
  %v1529 = vadd.f32 %v1298, %v1483
  %v1530 = vadd.f32 %v1299, %v1485
  %v1531 = vadd.f32 %v1300, %v1489
  %v1532 = vadd.f32 %v1301, %v1491
  %v1533 = vadd.f32 %v1302, %v1493
  %v1534 = vadd.f32 %v1303, %v1495
  %v1535 = vadd.f32 %v1304, %v1499
  %v1536 = vadd.f32 %v1305, %v1501
  %v1537 = vadd.f32 %v1306, %v1503
  %v1538 = vadd.f32 %v1307, %v1505
  %v1539 = vld [vmem:[%s11] sm:$0x3]
  %v1541 = vlaneseq
  %v1542 = vshrl.u32 %v1541, 7
  %v1543 = vsub.s32 0, %v1542
  %v1544 = vrot.slane %v1539, %v1543
  %v1545 = vlaneseq
  %v1546 = vshrl.u32 %v1545, 7
  %v1547 = vsub.s32 1, %v1546
  %v1548 = vrot.slane %v1539, %v1547
  %v1551 = vadd.f32 %v1507, %v1544
  %v1552 = vadd.f32 %v1508, %v1548
  %v1553 = vadd.f32 %v1509, %v1544
  %v1554 = vadd.f32 %v1510, %v1548
  %v1555 = vadd.f32 %v1511, %v1544
  %v1556 = vadd.f32 %v1512, %v1548
  %v1557 = vadd.f32 %v1513, %v1544
  %v1558 = vadd.f32 %v1514, %v1548
  %v1559 = vadd.f32 %v1515, %v1544
  %v1560 = vadd.f32 %v1516, %v1548
  %v1561 = vadd.f32 %v1517, %v1544
  %v1562 = vadd.f32 %v1518, %v1548
  %v1563 = vadd.f32 %v1519, %v1544
  %v1564 = vadd.f32 %v1520, %v1548
  %v1565 = vadd.f32 %v1521, %v1544
  %v1566 = vadd.f32 %v1522, %v1548
  %v1567 = vadd.f32 %v1523, %v1544
  %v1568 = vadd.f32 %v1524, %v1548
  %v1569 = vadd.f32 %v1525, %v1544
  %v1570 = vadd.f32 %v1526, %v1548
  %v1571 = vadd.f32 %v1527, %v1544
  %v1572 = vadd.f32 %v1528, %v1548
  %v1573 = vadd.f32 %v1529, %v1544
  %v1574 = vadd.f32 %v1530, %v1548
  %v1575 = vadd.f32 %v1531, %v1544
  %v1576 = vadd.f32 %v1532, %v1548
  %v1577 = vadd.f32 %v1533, %v1544
  %v1578 = vadd.f32 %v1534, %v1548
  %v1579 = vadd.f32 %v1535, %v1544
  %v1580 = vadd.f32 %v1536, %v1548
  %v1581 = vadd.f32 %v1537, %v1544
  %v1582 = vadd.f32 %v1538, %v1548
  %vm1583 = vcmp.gt.f32.partialorder %v1551, 0.0
  %vm1584 = vcmp.gt.f32.partialorder %v1552, 0.0
  %vm1585 = vcmp.gt.f32.partialorder %v1553, 0.0
  %vm1586 = vcmp.gt.f32.partialorder %v1554, 0.0
  %vm1587 = vcmp.gt.f32.partialorder %v1555, 0.0
  %vm1588 = vcmp.gt.f32.partialorder %v1556, 0.0
  %vm1589 = vcmp.gt.f32.partialorder %v1557, 0.0
  %vm1590 = vcmp.gt.f32.partialorder %v1558, 0.0
  %vm1591 = vcmp.gt.f32.partialorder %v1559, 0.0
  %vm1592 = vcmp.gt.f32.partialorder %v1560, 0.0
  %vm1593 = vcmp.gt.f32.partialorder %v1561, 0.0
  %vm1594 = vcmp.gt.f32.partialorder %v1562, 0.0
  %vm1595 = vcmp.gt.f32.partialorder %v1563, 0.0
  %vm1596 = vcmp.gt.f32.partialorder %v1564, 0.0
  %vm1597 = vcmp.gt.f32.partialorder %v1565, 0.0
  %vm1598 = vcmp.gt.f32.partialorder %v1566, 0.0
  %vm1599 = vcmp.gt.f32.partialorder %v1567, 0.0
  %vm1600 = vcmp.gt.f32.partialorder %v1568, 0.0
  %vm1601 = vcmp.gt.f32.partialorder %v1569, 0.0
  %vm1602 = vcmp.gt.f32.partialorder %v1570, 0.0
  %vm1603 = vcmp.gt.f32.partialorder %v1571, 0.0
  %vm1604 = vcmp.gt.f32.partialorder %v1572, 0.0
  %vm1605 = vcmp.gt.f32.partialorder %v1573, 0.0
  %vm1606 = vcmp.gt.f32.partialorder %v1574, 0.0
  %vm1607 = vcmp.gt.f32.partialorder %v1575, 0.0
  %vm1608 = vcmp.gt.f32.partialorder %v1576, 0.0
  %vm1609 = vcmp.gt.f32.partialorder %v1577, 0.0
  %vm1610 = vcmp.gt.f32.partialorder %v1578, 0.0
  %vm1611 = vcmp.gt.f32.partialorder %v1579, 0.0
  %vm1612 = vcmp.gt.f32.partialorder %v1580, 0.0
  %vm1613 = vcmp.gt.f32.partialorder %v1581, 0.0
  %vm1614 = vcmp.gt.f32.partialorder %v1582, 0.0
  %v1615 = vmin.f32 %v1551, 0.0
  %v1616 = vmin.f32 %v1552, 0.0
  %v1617 = vmin.f32 %v1553, 0.0
  %v1618 = vmin.f32 %v1554, 0.0
  %v1619 = vmin.f32 %v1555, 0.0
  %v1620 = vmin.f32 %v1556, 0.0
  %v1621 = vmin.f32 %v1557, 0.0
  %v1622 = vmin.f32 %v1558, 0.0
  %v1623 = vmin.f32 %v1559, 0.0
  %v1624 = vmin.f32 %v1560, 0.0
  %v1625 = vmin.f32 %v1561, 0.0
  %v1626 = vmin.f32 %v1562, 0.0
  %v1627 = vmin.f32 %v1563, 0.0
  %v1628 = vmin.f32 %v1564, 0.0
  %v1629 = vmin.f32 %v1565, 0.0
  %v1630 = vmin.f32 %v1566, 0.0
  %v1631 = vmin.f32 %v1567, 0.0
  %v1632 = vmin.f32 %v1568, 0.0
  %v1633 = vmin.f32 %v1569, 0.0
  %v1634 = vmin.f32 %v1570, 0.0
  %v1635 = vmin.f32 %v1571, 0.0
  %v1636 = vmin.f32 %v1572, 0.0
  %v1637 = vmin.f32 %v1573, 0.0
  %v1638 = vmin.f32 %v1574, 0.0
  %v1639 = vmin.f32 %v1575, 0.0
  %v1640 = vmin.f32 %v1576, 0.0
  %v1641 = vmin.f32 %v1577, 0.0
  %v1642 = vmin.f32 %v1578, 0.0
  %v1643 = vmin.f32 %v1579, 0.0
  %v1644 = vmin.f32 %v1580, 0.0
  %v1645 = vmin.f32 %v1581, 0.0
  %v1646 = vmin.f32 %v1582, 0.0
  %v1647 = vmul.f32 %v1615, 1.442695
  %v1648 = vpow.pop %v1647
  %v1649 = vmul.f32 %v1616, 1.442695
  %v1650 = vpow.pop %v1649
  %v1651 = vmul.f32 %v1617, 1.442695
  %v1652 = vpow.pop %v1651
  %v1653 = vmul.f32 %v1618, 1.442695
  %v1654 = vpow.pop %v1653
  %v1655 = vmul.f32 %v1619, 1.442695
  %v1656 = vpow.pop %v1655
  %v1657 = vmul.f32 %v1620, 1.442695
  %v1658 = vpow.pop %v1657
  %v1659 = vmul.f32 %v1621, 1.442695
  %v1660 = vpow.pop %v1659
  %v1661 = vmul.f32 %v1622, 1.442695
  %v1662 = vpow.pop %v1661
  %v1663 = vmul.f32 %v1623, 1.442695
  %v1664 = vpow.pop %v1663
  %v1665 = vmul.f32 %v1624, 1.442695
  %v1666 = vpow.pop %v1665
  %v1667 = vmul.f32 %v1625, 1.442695
  %v1668 = vpow.pop %v1667
  %v1669 = vmul.f32 %v1626, 1.442695
  %v1670 = vpow.pop %v1669
  %v1671 = vmul.f32 %v1627, 1.442695
  %v1672 = vpow.pop %v1671
  %v1673 = vmul.f32 %v1628, 1.442695
  %v1674 = vpow.pop %v1673
  %v1675 = vmul.f32 %v1629, 1.442695
  %v1676 = vpow.pop %v1675
  %v1677 = vmul.f32 %v1630, 1.442695
  %v1678 = vpow.pop %v1677
  %v1679 = vmul.f32 %v1631, 1.442695
  %v1680 = vpow.pop %v1679
  %v1681 = vmul.f32 %v1632, 1.442695
  %v1682 = vpow.pop %v1681
  %v1683 = vmul.f32 %v1633, 1.442695
  %v1684 = vpow.pop %v1683
  %v1685 = vmul.f32 %v1634, 1.442695
  %v1686 = vpow.pop %v1685
  %v1687 = vmul.f32 %v1635, 1.442695
  %v1688 = vpow.pop %v1687
  %v1689 = vmul.f32 %v1636, 1.442695
  %v1690 = vpow.pop %v1689
  %v1691 = vmul.f32 %v1637, 1.442695
  %v1692 = vpow.pop %v1691
  %v1693 = vmul.f32 %v1638, 1.442695
  %v1694 = vpow.pop %v1693
  %v1695 = vmul.f32 %v1639, 1.442695
  %v1696 = vpow.pop %v1695
  %v1697 = vmul.f32 %v1640, 1.442695
  %v1698 = vpow.pop %v1697
  %v1699 = vmul.f32 %v1641, 1.442695
  %v1700 = vpow.pop %v1699
  %v1701 = vmul.f32 %v1642, 1.442695
  %v1702 = vpow.pop %v1701
  %v1703 = vmul.f32 %v1643, 1.442695
  %v1704 = vpow.pop %v1703
  %v1705 = vmul.f32 %v1644, 1.442695
  %v1706 = vpow.pop %v1705
  %v1707 = vmul.f32 %v1645, 1.442695
  %v1708 = vpow.pop %v1707
  %v1709 = vmul.f32 %v1646, 1.442695
  %v1710 = vpow.pop %v1709
  %v1711 = vsub.f32 %v1648, 1.0
  %v1712 = vsub.f32 %v1650, 1.0
  %v1713 = vsub.f32 %v1652, 1.0
  %v1714 = vsub.f32 %v1654, 1.0
  %v1715 = vsub.f32 %v1656, 1.0
  %v1716 = vsub.f32 %v1658, 1.0
  %v1717 = vsub.f32 %v1660, 1.0
  %v1718 = vsub.f32 %v1662, 1.0
  %v1719 = vsub.f32 %v1664, 1.0
  %v1720 = vsub.f32 %v1666, 1.0
  %v1721 = vsub.f32 %v1668, 1.0
  %v1722 = vsub.f32 %v1670, 1.0
  %v1723 = vsub.f32 %v1672, 1.0
  %v1724 = vsub.f32 %v1674, 1.0
  %v1725 = vsub.f32 %v1676, 1.0
  %v1726 = vsub.f32 %v1678, 1.0
  %v1727 = vsub.f32 %v1680, 1.0
  %v1728 = vsub.f32 %v1682, 1.0
  %v1729 = vsub.f32 %v1684, 1.0
  %v1730 = vsub.f32 %v1686, 1.0
  %v1731 = vsub.f32 %v1688, 1.0
  %v1732 = vsub.f32 %v1690, 1.0
  %v1733 = vsub.f32 %v1692, 1.0
  %v1734 = vsub.f32 %v1694, 1.0
  %v1735 = vsub.f32 %v1696, 1.0
  %v1736 = vsub.f32 %v1698, 1.0
  %v1737 = vsub.f32 %v1700, 1.0
  %v1738 = vsub.f32 %v1702, 1.0
  %v1739 = vsub.f32 %v1704, 1.0
  %v1740 = vsub.f32 %v1706, 1.0
  %v1741 = vsub.f32 %v1708, 1.0
  %v1742 = vsub.f32 %v1710, 1.0
  %v1743 = vsel %vm1583, %v1551, %v1711
  %v1744 = vsel %vm1584, %v1552, %v1712
  %v1745 = vsel %vm1585, %v1553, %v1713
  %v1746 = vsel %vm1586, %v1554, %v1714
  %v1747 = vsel %vm1587, %v1555, %v1715
  %v1748 = vsel %vm1588, %v1556, %v1716
  %v1749 = vsel %vm1589, %v1557, %v1717
  %v1750 = vsel %vm1590, %v1558, %v1718
  %v1751 = vsel %vm1591, %v1559, %v1719
  %v1752 = vsel %vm1592, %v1560, %v1720
  %v1753 = vsel %vm1593, %v1561, %v1721
  %v1754 = vsel %vm1594, %v1562, %v1722
  %v1755 = vsel %vm1595, %v1563, %v1723
  %v1756 = vsel %vm1596, %v1564, %v1724
  %v1757 = vsel %vm1597, %v1565, %v1725
  %v1758 = vsel %vm1598, %v1566, %v1726
  %v1759 = vsel %vm1599, %v1567, %v1727
  %v1760 = vsel %vm1600, %v1568, %v1728
  %v1761 = vsel %vm1601, %v1569, %v1729
  %v1762 = vsel %vm1602, %v1570, %v1730
  %v1763 = vsel %vm1603, %v1571, %v1731
  %v1764 = vsel %vm1604, %v1572, %v1732
  %v1765 = vsel %vm1605, %v1573, %v1733
  %v1766 = vsel %vm1606, %v1574, %v1734
  %v1767 = vsel %vm1607, %v1575, %v1735
  %v1768 = vsel %vm1608, %v1576, %v1736
  %v1769 = vsel %vm1609, %v1577, %v1737
  %v1770 = vsel %vm1610, %v1578, %v1738
  %v1771 = vsel %vm1611, %v1579, %v1739
  %v1772 = vsel %vm1612, %v1580, %v1740
  %v1773 = vsel %vm1613, %v1581, %v1741
  %v1774 = vsel %vm1614, %v1582, %v1742
  %s1775 = scalar_lea.vmem [#allocation2], 16
  %1776 = vst [vmem:[%s1775] sm:$0xff] %v1743
  %1777 = vst.msk [vmem:[%s1775 + $0x8] sm:$0xff] %vm115, %v1744
  %1778 = vst [vmem:[%s1775 + $0x10] sm:$0xff] %v1747
  %1779 = vst.msk [vmem:[%s1775 + $0x18] sm:$0xff] %vm115, %v1748
  %1780 = vst [vmem:[%s1775 + $0x20] sm:$0xff] %v1751
  %1781 = vst.msk [vmem:[%s1775 + $0x28] sm:$0xff] %vm115, %v1752
  %1782 = vst [vmem:[%s1775 + $0x30] sm:$0xff] %v1755
  %1783 = vst.msk [vmem:[%s1775 + $0x38] sm:$0xff] %vm115, %v1756
  %1784 = vst [vmem:[%s1775 + $0x40] sm:$0xff] %v1759
  %1785 = vst.msk [vmem:[%s1775 + $0x48] sm:$0xff] %vm115, %v1760
  %1786 = vst [vmem:[%s1775 + $0x50] sm:$0xff] %v1763
  %1787 = vst.msk [vmem:[%s1775 + $0x58] sm:$0xff] %vm115, %v1764
  %1788 = vst [vmem:[%s1775 + $0x60] sm:$0xff] %v1767
  %1789 = vst.msk [vmem:[%s1775 + $0x68] sm:$0xff] %vm115, %v1768
  %1790 = vst [vmem:[%s1775 + $0x70] sm:$0xff] %v1771
  %1791 = vst.msk [vmem:[%s1775 + $0x78] sm:$0xff] %vm115, %v1772
  %s1792 = scalar_lea.vmem [#allocation3], 16
  %1793 = vst [vmem:[%s1792] sm:$0xff] %v1745
  %1794 = vst.msk [vmem:[%s1792 + $0x8] sm:$0xff] %vm115, %v1746
  %1795 = vst [vmem:[%s1792 + $0x10] sm:$0xff] %v1749
  %1796 = vst.msk [vmem:[%s1792 + $0x18] sm:$0xff] %vm115, %v1750
  %1797 = vst [vmem:[%s1792 + $0x20] sm:$0xff] %v1753
  %1798 = vst.msk [vmem:[%s1792 + $0x28] sm:$0xff] %vm115, %v1754
  %1799 = vst [vmem:[%s1792 + $0x30] sm:$0xff] %v1757
  %1800 = vst.msk [vmem:[%s1792 + $0x38] sm:$0xff] %vm115, %v1758
  %1801 = vst [vmem:[%s1792 + $0x40] sm:$0xff] %v1761
  %1802 = vst.msk [vmem:[%s1792 + $0x48] sm:$0xff] %vm115, %v1762
  %1803 = vst [vmem:[%s1792 + $0x50] sm:$0xff] %v1765
  %1804 = vst.msk [vmem:[%s1792 + $0x58] sm:$0xff] %vm115, %v1766
  %1805 = vst [vmem:[%s1792 + $0x60] sm:$0xff] %v1769
  %1806 = vst.msk [vmem:[%s1792 + $0x68] sm:$0xff] %vm115, %v1770
  %1807 = vst [vmem:[%s1792 + $0x70] sm:$0xff] %v1773
  %1808 = vst.msk [vmem:[%s1792 + $0x78] sm:$0xff] %vm115, %v1774
  %v1809 = vld [vmem:[#allocation2] sm:$0xff]
  %v1810 = vld [vmem:[#allocation2 + $0x8] sm:$0xff]
  %v1811 = vld [vmem:[#allocation2 + $0x10] sm:$0xff]
  %v1812 = vld [vmem:[#allocation2 + $0x18] sm:$0xff]
  %v1813 = vld [vmem:[#allocation2 + $0x20] sm:$0xff]
  %v1814 = vld [vmem:[#allocation2 + $0x28] sm:$0xff]
  %v1815 = vld [vmem:[#allocation2 + $0x30] sm:$0xff]
  %v1816 = vld [vmem:[#allocation2 + $0x38] sm:$0xff]
  %v1817 = vld [vmem:[#allocation2 + $0x40] sm:$0xff]
  %v1818 = vld [vmem:[#allocation2 + $0x48] sm:$0xff]
  %v1819 = vld [vmem:[#allocation2 + $0x50] sm:$0xff]
  %v1820 = vld [vmem:[#allocation2 + $0x58] sm:$0xff]
  %v1821 = vld [vmem:[#allocation2 + $0x60] sm:$0xff]
  %v1822 = vld [vmem:[#allocation2 + $0x68] sm:$0xff]
  %v1823 = vld [vmem:[#allocation2 + $0x70] sm:$0xff]
  %v1824 = vld [vmem:[#allocation2 + $0x78] sm:$0xff]
  %v1825 = vpack.c.bf16 %v1811, %v1809
  %v1826 = vpack.c.bf16 %v1812, %v1810
  %v1827 = vpack.c.bf16 %v1815, %v1813
  %v1828 = vpack.c.bf16 %v1816, %v1814
  %v1829 = vpack.c.bf16 %v1819, %v1817
  %v1830 = vpack.c.bf16 %v1820, %v1818
  %v1831 = vpack.c.bf16 %v1823, %v1821
  %v1832 = vpack.c.bf16 %v1824, %v1822
  %v1833 = vld [vmem:[%s12] sm:$0xff]
  %v1834 = vld [vmem:[%s12 + $0x8] sm:$0xff]
  %v1835 = vld [vmem:[%s12 + $0x10] sm:$0xff]
  %v1836 = vld [vmem:[%s12 + $0x18] sm:$0xff]
  %v1837 = vld [vmem:[%s12 + $0x20] sm:$0xff]
  %v1838 = vld [vmem:[%s12 + $0x28] sm:$0xff]
  %v1839 = vld [vmem:[%s12 + $0x30] sm:$0xff]
  %v1840 = vld [vmem:[%s12 + $0x38] sm:$0xff]
  %v1841 = vld [vmem:[%s12 + $0x40] sm:$0xff]
  %v1842 = vld [vmem:[%s12 + $0x48] sm:$0xff]
  %v1843 = vld [vmem:[%s12 + $0x50] sm:$0xff]
  %v1844 = vld [vmem:[%s12 + $0x58] sm:$0xff]
  %v1845 = vld [vmem:[%s12 + $0x60] sm:$0xff]
  %v1846 = vld [vmem:[%s12 + $0x68] sm:$0xff]
  %v1847 = vld [vmem:[%s12 + $0x70] sm:$0xff]
  %v1848 = vld [vmem:[%s12 + $0x78] sm:$0xff]
  %v1849 = vld [vmem:[%s12 + $0x80] sm:$0xff]
  %v1850 = vld [vmem:[%s12 + $0x88] sm:$0xff]
  %v1851 = vld [vmem:[%s12 + $0x90] sm:$0xff]
  %v1852 = vld [vmem:[%s12 + $0x98] sm:$0xff]
  %v1853 = vld [vmem:[#allocation3] sm:$0xff]
  %v1854 = vld [vmem:[#allocation3 + $0x8] sm:$0xff]
  %v1855 = vld [vmem:[#allocation3 + $0x10] sm:$0xff]
  %v1856 = vld [vmem:[#allocation3 + $0x18] sm:$0xff]
  %v1857 = vld [vmem:[#allocation3 + $0x20] sm:$0xff]
  %v1858 = vld [vmem:[#allocation3 + $0x28] sm:$0xff]
  %v1859 = vld [vmem:[#allocation3 + $0x30] sm:$0xff]
  %v1860 = vld [vmem:[#allocation3 + $0x38] sm:$0xff]
  %v1861 = vld [vmem:[#allocation3 + $0x40] sm:$0xff]
  %v1862 = vld [vmem:[#allocation3 + $0x48] sm:$0xff]
  %v1863 = vld [vmem:[#allocation3 + $0x50] sm:$0xff]
  %v1864 = vld [vmem:[#allocation3 + $0x58] sm:$0xff]
  %v1865 = vld [vmem:[#allocation3 + $0x60] sm:$0xff]
  %v1866 = vld [vmem:[#allocation3 + $0x68] sm:$0xff]
  %v1867 = vld [vmem:[#allocation3 + $0x70] sm:$0xff]
  %v1868 = vld [vmem:[#allocation3 + $0x78] sm:$0xff]
  %v1869 = vpack.c.bf16 %v1855, %v1853
  %v1870 = vpack.c.bf16 %v1856, %v1854
  %v1871 = vpack.c.bf16 %v1859, %v1857
  %v1872 = vpack.c.bf16 %v1860, %v1858
  %v1873 = vpack.c.bf16 %v1863, %v1861
  %v1874 = vpack.c.bf16 %v1864, %v1862
  %v1875 = vpack.c.bf16 %v1867, %v1865
  %v1876 = vpack.c.bf16 %v1868, %v1866
  %s1877 = scalar_lea.vmem %s12, 160
  %v1878 = vld [vmem:[%s1877] sm:$0xff]
  %v1879 = vld [vmem:[%s1877 + $0x8] sm:$0xff]
  %v1880 = vld [vmem:[%s1877 + $0x10] sm:$0xff]
  %v1881 = vld [vmem:[%s1877 + $0x18] sm:$0xff]
  %v1882 = vld [vmem:[%s1877 + $0x20] sm:$0xff]
  %v1883 = vld [vmem:[%s1877 + $0x28] sm:$0xff]
  %v1884 = vld [vmem:[%s1877 + $0x30] sm:$0xff]
  %v1885 = vld [vmem:[%s1877 + $0x38] sm:$0xff]
  %v1886 = vld [vmem:[%s1877 + $0x40] sm:$0xff]
  %v1887 = vld [vmem:[%s1877 + $0x48] sm:$0xff]
  %v1888 = vld [vmem:[%s1877 + $0x50] sm:$0xff]
  %v1889 = vld [vmem:[%s1877 + $0x58] sm:$0xff]
  %v1890 = vld [vmem:[%s1877 + $0x60] sm:$0xff]
  %v1891 = vld [vmem:[%s1877 + $0x68] sm:$0xff]
  %v1892 = vld [vmem:[%s1877 + $0x70] sm:$0xff]
  %v1893 = vld [vmem:[%s1877 + $0x78] sm:$0xff]
  %v1894 = vld [vmem:[%s1877 + $0x80] sm:$0xff]
  %v1895 = vld [vmem:[%s1877 + $0x88] sm:$0xff]
  %v1896 = vld [vmem:[%s1877 + $0x90] sm:$0xff]
  %v1897 = vld [vmem:[%s1877 + $0x98] sm:$0xff]
  %v1918 = vunpack.c.l.b16 %v1878
  %v1919 = vunpack.c.h.b16 %v1878
  %v1920 = vunpack.c.l.b16 %v1879
  %v1921 = vunpack.c.h.b16 %v1879
  %v1922 = vunpack.c.l.b16 %v1880
  %v1923 = vunpack.c.h.b16 %v1880
  %v1924 = vunpack.c.l.b16 %v1881
  %v1925 = vunpack.c.h.b16 %v1881
  %v1926 = vunpack.c.l.b16 %v1882
  %v1927 = vunpack.c.h.b16 %v1882
  %v1928 = vunpack.c.l.b16 %v1883
  %v1929 = vunpack.c.h.b16 %v1883
  %v1930 = vunpack.c.l.b16 %v1884
  %v1931 = vunpack.c.h.b16 %v1884
  %v1932 = vunpack.c.l.b16 %v1885
  %v1933 = vunpack.c.h.b16 %v1885
  %v1934 = vunpack.c.l.b16 %v1886
  %v1935 = vunpack.c.h.b16 %v1886
  %v1936 = vunpack.c.l.b16 %v1887
  %v1937 = vunpack.c.h.b16 %v1887
  %v1938 = vunpack.c.l.b16 %v1888
  %v1939 = vunpack.c.h.b16 %v1888
  %v1940 = vunpack.c.l.b16 %v1889
  %v1941 = vunpack.c.h.b16 %v1889
  %v1942 = vunpack.c.l.b16 %v1890
  %v1943 = vunpack.c.h.b16 %v1890
  %v1944 = vunpack.c.l.b16 %v1891
  %v1945 = vunpack.c.h.b16 %v1891
  %v1946 = vunpack.c.l.b16 %v1892
  %v1947 = vunpack.c.h.b16 %v1892
  %v1948 = vunpack.c.l.b16 %v1893
  %v1949 = vunpack.c.h.b16 %v1893
  %v1950 = vunpack.c.l.b16 %v1894
  %v1951 = vunpack.c.h.b16 %v1894
  %v1952 = vunpack.c.l.b16 %v1895
  %v1953 = vunpack.c.h.b16 %v1895
  %v1954 = vunpack.c.l.b16 %v1896
  %v1955 = vunpack.c.h.b16 %v1896
  %v1956 = vunpack.c.l.b16 %v1897
  %v1957 = vunpack.c.h.b16 %v1897
  %v1958 = vpack.c.b16 %v1920, %v1918
  %v1959 = vpack.c.b16 %v1921, %v1919
  %v1960 = vpack.c.b16 %v1924, %v1922
  %v1961 = vpack.c.b16 %v1925, %v1923
  %v1962 = vpack.c.b16 %v1928, %v1926
  %v1963 = vpack.c.b16 %v1929, %v1927
  %v1964 = vpack.c.b16 %v1932, %v1930
  %v1965 = vpack.c.b16 %v1933, %v1931
  %v1966 = vpack.c.b16 %v1936, %v1934
  %v1967 = vpack.c.b16 %v1937, %v1935
  %v1968 = vpack.c.b16 %v1940, %v1938
  %v1969 = vpack.c.b16 %v1941, %v1939
  %v1970 = vpack.c.b16 %v1944, %v1942
  %v1971 = vpack.c.b16 %v1945, %v1943
  %v1972 = vpack.c.b16 %v1948, %v1946
  %v1973 = vpack.c.b16 %v1949, %v1947
  %v1974 = vpack.c.b16 %v1952, %v1950
  %v1975 = vpack.c.b16 %v1953, %v1951
  %v1976 = vpack.c.b16 %v1956, %v1954
  %v1977 = vpack.c.b16 %v1957, %v1955
  %v1999 = vsel %vm115, %v1870, 0
  %v2002 = vsel %vm115, %v1872, 0
  %v2005 = vsel %vm115, %v1874, 0
  %v2008 = vsel %vm115, %v1876, 0
  %2010 = vmatprep.subr.bf16.mxu0 %v1959
  %2011 = vmatpush1.bf16.msra.mxu0 %v1958
  %2012 = vmatprep.subr.bf16.mxu0 %v1961
  %2013 = vmatpush1.bf16.msra.mxu0 %v1960
  %2014 = vmatprep.subr.bf16.mxu0 %v1963
  %2015 = vmatpush1.bf16.msra.mxu0 %v1962
  %2016 = vmatprep.subr.bf16.mxu0 %v1965
  %2017 = vmatpush1.bf16.msra.mxu0 %v1964
  %2018 = vmatprep.subr.bf16.mxu0 %v1967
  %2019 = vmatpush1.bf16.msra.mxu0 %v1966
  %2020 = vmatprep.subr.bf16.mxu0 %v1969
  %2021 = vmatpush1.bf16.msra.mxu0 %v1968
  %2022 = vmatprep.subr.bf16.mxu0 %v1971
  %2023 = vmatpush1.bf16.msra.mxu0 %v1970
  %2024 = vmatprep.subr.bf16.mxu0 %v1973
  %2025 = vmatpush1.bf16.msra.mxu0 %v1972
  %2026 = vmatprep.subr.bf16.mxu0 %v1975
  %2027 = vmatpush1.bf16.msra.mxu0 %v1974
  %2028 = vmatprep.subr.bf16.mxu0 %v1977
  %2029 = vmatpush1.bf16.msra.mxu0 %v1976
  %2030 = vmatprep.subr.bf16.mxu0 0
  %2031 = vmatpush1.bf16.msra.mxu0 0
  %2032 = vmatprep.subr.bf16.mxu0 0
  %2033 = vmatpush1.bf16.msra.mxu0 0
  %2034 = vmatprep.subr.bf16.mxu0 0
  %2035 = vmatpush1.bf16.msra.mxu0 0
  %2036 = vmatprep.subr.bf16.mxu0 0
  %2037 = vmatpush1.bf16.msra.mxu0 0
  %2038 = vmatprep.subr.bf16.mxu0 0
  %2039 = vmatpush1.bf16.msra.mxu0 0
  %2040 = vmatprep.subr.bf16.mxu0 0
  %2041 = vmatpush1.bf16.msra.mxu0 0
  %2042 = vmatprep.mubr.bf16.mxu0 %v1999
  %2043 = vmatmul.mubr.bf16.gmra.mrb[0].mxu0 %v1869
  %v2044 = vpop.f32.mrb[0].mxu0
  %v2045 = vadd.f32 0.0, %v2044
  %v2046 = vpop.f32.mrb[0].mxu0
  %v2047 = vadd.f32 0.0, %v2046
  %v2048 = vpop.f32.mrb[0].mxu0
  %v2049 = vadd.f32 0.0, %v2048
  %v2050 = vpop.f32.mrb[0].mxu0
  %v2051 = vadd.f32 0.0, %v2050
  %2052 = vmatprep.mubr.bf16.mxu0 %v2002
  %2053 = vmatmul.mubr.bf16.gmra.mrb[0].mxu0 %v1871
  %v2054 = vpop.f32.mrb[0].mxu0
  %v2055 = vadd.f32 0.0, %v2054
  %v2056 = vpop.f32.mrb[0].mxu0
  %v2057 = vadd.f32 0.0, %v2056
  %v2058 = vpop.f32.mrb[0].mxu0
  %v2059 = vadd.f32 0.0, %v2058
  %v2060 = vpop.f32.mrb[0].mxu0
  %v2061 = vadd.f32 0.0, %v2060
  %2062 = vmatprep.mubr.bf16.mxu0 %v2005
  %2063 = vmatmul.mubr.bf16.gmra.mrb[0].mxu0 %v1873
  %v2064 = vpop.f32.mrb[0].mxu0
  %v2065 = vadd.f32 0.0, %v2064
  %v2066 = vpop.f32.mrb[0].mxu0
  %v2067 = vadd.f32 0.0, %v2066
  %v2068 = vpop.f32.mrb[0].mxu0
  %v2069 = vadd.f32 0.0, %v2068
  %v2070 = vpop.f32.mrb[0].mxu0
  %v2071 = vadd.f32 0.0, %v2070
  %2072 = vmatprep.mubr.bf16.mxu0 %v2008
  %2073 = vmatmul.mubr.bf16.gmra.mrb[0].mxu0 %v1875
  %v2074 = vpop.f32.mrb[0].mxu0
  %v2075 = vadd.f32 0.0, %v2074
  %v2076 = vpop.f32.mrb[0].mxu0
  %v2077 = vadd.f32 0.0, %v2076
  %v2078 = vpop.f32.mrb[0].mxu0
  %v2079 = vadd.f32 0.0, %v2078
  %v2080 = vpop.f32.mrb[0].mxu0
  %v2081 = vadd.f32 0.0, %v2080
  %2082 = vdwg.mxu0
  %v2103 = vunpack.c.l.b16 %v1833
  %v2104 = vunpack.c.h.b16 %v1833
  %v2105 = vunpack.c.l.b16 %v1834
  %v2106 = vunpack.c.h.b16 %v1834
  %v2107 = vunpack.c.l.b16 %v1835
  %v2108 = vunpack.c.h.b16 %v1835
  %v2109 = vunpack.c.l.b16 %v1836
  %v2110 = vunpack.c.h.b16 %v1836
  %v2111 = vunpack.c.l.b16 %v1837
  %v2112 = vunpack.c.h.b16 %v1837
  %v2113 = vunpack.c.l.b16 %v1838
  %v2114 = vunpack.c.h.b16 %v1838
  %v2115 = vunpack.c.l.b16 %v1839
  %v2116 = vunpack.c.h.b16 %v1839
  %v2117 = vunpack.c.l.b16 %v1840
  %v2118 = vunpack.c.h.b16 %v1840
  %v2119 = vunpack.c.l.b16 %v1841
  %v2120 = vunpack.c.h.b16 %v1841
  %v2121 = vunpack.c.l.b16 %v1842
  %v2122 = vunpack.c.h.b16 %v1842
  %v2123 = vunpack.c.l.b16 %v1843
  %v2124 = vunpack.c.h.b16 %v1843
  %v2125 = vunpack.c.l.b16 %v1844
  %v2126 = vunpack.c.h.b16 %v1844
  %v2127 = vunpack.c.l.b16 %v1845
  %v2128 = vunpack.c.h.b16 %v1845
  %v2129 = vunpack.c.l.b16 %v1846
  %v2130 = vunpack.c.h.b16 %v1846
  %v2131 = vunpack.c.l.b16 %v1847
  %v2132 = vunpack.c.h.b16 %v1847
  %v2133 = vunpack.c.l.b16 %v1848
  %v2134 = vunpack.c.h.b16 %v1848
  %v2135 = vunpack.c.l.b16 %v1849
  %v2136 = vunpack.c.h.b16 %v1849
  %v2137 = vunpack.c.l.b16 %v1850
  %v2138 = vunpack.c.h.b16 %v1850
  %v2139 = vunpack.c.l.b16 %v1851
  %v2140 = vunpack.c.h.b16 %v1851
  %v2141 = vunpack.c.l.b16 %v1852
  %v2142 = vunpack.c.h.b16 %v1852
  %v2143 = vpack.c.b16 %v2105, %v2103
  %v2144 = vpack.c.b16 %v2106, %v2104
  %v2145 = vpack.c.b16 %v2109, %v2107
  %v2146 = vpack.c.b16 %v2110, %v2108
  %v2147 = vpack.c.b16 %v2113, %v2111
  %v2148 = vpack.c.b16 %v2114, %v2112
  %v2149 = vpack.c.b16 %v2117, %v2115
  %v2150 = vpack.c.b16 %v2118, %v2116
  %v2151 = vpack.c.b16 %v2121, %v2119
  %v2152 = vpack.c.b16 %v2122, %v2120
  %v2153 = vpack.c.b16 %v2125, %v2123
  %v2154 = vpack.c.b16 %v2126, %v2124
  %v2155 = vpack.c.b16 %v2129, %v2127
  %v2156 = vpack.c.b16 %v2130, %v2128
  %v2157 = vpack.c.b16 %v2133, %v2131
  %v2158 = vpack.c.b16 %v2134, %v2132
  %v2159 = vpack.c.b16 %v2137, %v2135
  %v2160 = vpack.c.b16 %v2138, %v2136
  %v2161 = vpack.c.b16 %v2141, %v2139
  %v2162 = vpack.c.b16 %v2142, %v2140
  %v2184 = vsel %vm115, %v1826, 0
  %v2187 = vsel %vm115, %v1828, 0
  %v2190 = vsel %vm115, %v1830, 0
  %v2193 = vsel %vm115, %v1832, 0
  %2195 = vmatprep.subr.bf16.mxu0 %v2144
  %2196 = vmatpush1.bf16.msra.mxu0 %v2143
  %2197 = vmatprep.subr.bf16.mxu0 %v2146
  %2198 = vmatpush1.bf16.msra.mxu0 %v2145
  %2199 = vmatprep.subr.bf16.mxu0 %v2148
  %2200 = vmatpush1.bf16.msra.mxu0 %v2147
  %2201 = vmatprep.subr.bf16.mxu0 %v2150
  %2202 = vmatpush1.bf16.msra.mxu0 %v2149
  %2203 = vmatprep.subr.bf16.mxu0 %v2152
  %2204 = vmatpush1.bf16.msra.mxu0 %v2151
  %2205 = vmatprep.subr.bf16.mxu0 %v2154
  %2206 = vmatpush1.bf16.msra.mxu0 %v2153
  %2207 = vmatprep.subr.bf16.mxu0 %v2156
  %2208 = vmatpush1.bf16.msra.mxu0 %v2155
  %2209 = vmatprep.subr.bf16.mxu0 %v2158
  %2210 = vmatpush1.bf16.msra.mxu0 %v2157
  %2211 = vmatprep.subr.bf16.mxu0 %v2160
  %2212 = vmatpush1.bf16.msra.mxu0 %v2159
  %2213 = vmatprep.subr.bf16.mxu0 %v2162
  %2214 = vmatpush1.bf16.msra.mxu0 %v2161
  %2215 = vmatprep.subr.bf16.mxu0 0
  %2216 = vmatpush1.bf16.msra.mxu0 0
  %2217 = vmatprep.subr.bf16.mxu0 0
  %2218 = vmatpush1.bf16.msra.mxu0 0
  %2219 = vmatprep.subr.bf16.mxu0 0
  %2220 = vmatpush1.bf16.msra.mxu0 0
  %2221 = vmatprep.subr.bf16.mxu0 0
  %2222 = vmatpush1.bf16.msra.mxu0 0
  %2223 = vmatprep.subr.bf16.mxu0 0
  %2224 = vmatpush1.bf16.msra.mxu0 0
  %2225 = vmatprep.subr.bf16.mxu0 0
  %2226 = vmatpush1.bf16.msra.mxu0 0
  %2227 = vmatprep.mubr.bf16.mxu0 %v2184
  %2228 = vmatmul.mubr.bf16.gmra.mrb[0].mxu0 %v1825
  %v2229 = vpop.f32.mrb[0].mxu0
  %v2230 = vadd.f32 %v2045, %v2229
  %v2231 = vpop.f32.mrb[0].mxu0
  %v2232 = vadd.f32 %v2047, %v2231
  %v2233 = vpop.f32.mrb[0].mxu0
  %v2234 = vadd.f32 %v2049, %v2233
  %v2235 = vpop.f32.mrb[0].mxu0
  %v2236 = vadd.f32 %v2051, %v2235
  %2237 = vmatprep.mubr.bf16.mxu0 %v2187
  %2238 = vmatmul.mubr.bf16.gmra.mrb[0].mxu0 %v1827
  %v2239 = vpop.f32.mrb[0].mxu0
  %v2240 = vadd.f32 %v2055, %v2239
  %v2241 = vpop.f32.mrb[0].mxu0
  %v2242 = vadd.f32 %v2057, %v2241
  %v2243 = vpop.f32.mrb[0].mxu0
  %v2244 = vadd.f32 %v2059, %v2243
  %v2245 = vpop.f32.mrb[0].mxu0
  %v2246 = vadd.f32 %v2061, %v2245
  %2247 = vmatprep.mubr.bf16.mxu0 %v2190
  %2248 = vmatmul.mubr.bf16.gmra.mrb[0].mxu0 %v1829
  %v2249 = vpop.f32.mrb[0].mxu0
  %v2250 = vadd.f32 %v2065, %v2249
  %v2251 = vpop.f32.mrb[0].mxu0
  %v2252 = vadd.f32 %v2067, %v2251
  %v2253 = vpop.f32.mrb[0].mxu0
  %v2254 = vadd.f32 %v2069, %v2253
  %v2255 = vpop.f32.mrb[0].mxu0
  %v2256 = vadd.f32 %v2071, %v2255
  %2257 = vmatprep.mubr.bf16.mxu0 %v2193
  %2258 = vmatmul.mubr.bf16.gmra.mrb[0].mxu0 %v1831
  %v2259 = vpop.f32.mrb[0].mxu0
  %v2260 = vadd.f32 %v2075, %v2259
  %v2261 = vpop.f32.mrb[0].mxu0
  %v2262 = vadd.f32 %v2077, %v2261
  %v2263 = vpop.f32.mrb[0].mxu0
  %v2264 = vadd.f32 %v2079, %v2263
  %v2265 = vpop.f32.mrb[0].mxu0
  %v2266 = vadd.f32 %v2081, %v2265
  %2267 = vdwg.mxu0
  %v2268 = vld [vmem:[%s1775] sm:$0xff]
  %v2269 = vld [vmem:[%s1775 + $0x8] sm:$0xff]
  %v2270 = vld [vmem:[%s1775 + $0x10] sm:$0xff]
  %v2271 = vld [vmem:[%s1775 + $0x18] sm:$0xff]
  %v2272 = vld [vmem:[%s1775 + $0x20] sm:$0xff]
  %v2273 = vld [vmem:[%s1775 + $0x28] sm:$0xff]
  %v2274 = vld [vmem:[%s1775 + $0x30] sm:$0xff]
  %v2275 = vld [vmem:[%s1775 + $0x38] sm:$0xff]
  %v2276 = vld [vmem:[%s1775 + $0x40] sm:$0xff]
  %v2277 = vld [vmem:[%s1775 + $0x48] sm:$0xff]
  %v2278 = vld [vmem:[%s1775 + $0x50] sm:$0xff]
  %v2279 = vld [vmem:[%s1775 + $0x58] sm:$0xff]
  %v2280 = vld [vmem:[%s1775 + $0x60] sm:$0xff]
  %v2281 = vld [vmem:[%s1775 + $0x68] sm:$0xff]
  %v2282 = vld [vmem:[%s1775 + $0x70] sm:$0xff]
  %v2283 = vld [vmem:[%s1775 + $0x78] sm:$0xff]
  %v2284 = vpack.c.bf16 %v2270, %v2268
  %v2285 = vpack.c.bf16 %v2271, %v2269
  %v2286 = vpack.c.bf16 %v2274, %v2272
  %v2287 = vpack.c.bf16 %v2275, %v2273
  %v2288 = vpack.c.bf16 %v2278, %v2276
  %v2289 = vpack.c.bf16 %v2279, %v2277
  %v2290 = vpack.c.bf16 %v2282, %v2280
  %v2291 = vpack.c.bf16 %v2283, %v2281
  %s2292 = scalar_lea.vmem %s12, 320
  %v2293 = vld [vmem:[%s2292] sm:$0xff]
  %v2294 = vld [vmem:[%s2292 + $0x8] sm:$0xff]
  %v2295 = vld [vmem:[%s2292 + $0x10] sm:$0xff]
  %v2296 = vld [vmem:[%s2292 + $0x18] sm:$0xff]
  %v2297 = vld [vmem:[%s2292 + $0x20] sm:$0xff]
  %v2298 = vld [vmem:[%s2292 + $0x28] sm:$0xff]
  %v2299 = vld [vmem:[%s2292 + $0x30] sm:$0xff]
  %v2300 = vld [vmem:[%s2292 + $0x38] sm:$0xff]
  %v2301 = vld [vmem:[%s2292 + $0x40] sm:$0xff]
  %v2302 = vld [vmem:[%s2292 + $0x48] sm:$0xff]
  %v2303 = vld [vmem:[%s2292 + $0x50] sm:$0xff]
  %v2304 = vld [vmem:[%s2292 + $0x58] sm:$0xff]
  %v2305 = vld [vmem:[%s2292 + $0x60] sm:$0xff]
  %v2306 = vld [vmem:[%s2292 + $0x68] sm:$0xff]
  %v2307 = vld [vmem:[%s2292 + $0x70] sm:$0xff]
  %v2308 = vld [vmem:[%s2292 + $0x78] sm:$0xff]
  %v2309 = vld [vmem:[%s2292 + $0x80] sm:$0xff]
  %v2310 = vld [vmem:[%s2292 + $0x88] sm:$0xff]
  %v2311 = vld [vmem:[%s2292 + $0x90] sm:$0xff]
  %v2312 = vld [vmem:[%s2292 + $0x98] sm:$0xff]
  %v2333 = vunpack.c.l.b16 %v2293
  %v2334 = vunpack.c.h.b16 %v2293
  %v2335 = vunpack.c.l.b16 %v2294
  %v2336 = vunpack.c.h.b16 %v2294
  %v2337 = vunpack.c.l.b16 %v2295
  %v2338 = vunpack.c.h.b16 %v2295
  %v2339 = vunpack.c.l.b16 %v2296
  %v2340 = vunpack.c.h.b16 %v2296
  %v2341 = vunpack.c.l.b16 %v2297
  %v2342 = vunpack.c.h.b16 %v2297
  %v2343 = vunpack.c.l.b16 %v2298
  %v2344 = vunpack.c.h.b16 %v2298
  %v2345 = vunpack.c.l.b16 %v2299
  %v2346 = vunpack.c.h.b16 %v2299
  %v2347 = vunpack.c.l.b16 %v2300
  %v2348 = vunpack.c.h.b16 %v2300
  %v2349 = vunpack.c.l.b16 %v2301
  %v2350 = vunpack.c.h.b16 %v2301
  %v2351 = vunpack.c.l.b16 %v2302
  %v2352 = vunpack.c.h.b16 %v2302
  %v2353 = vunpack.c.l.b16 %v2303
  %v2354 = vunpack.c.h.b16 %v2303
  %v2355 = vunpack.c.l.b16 %v2304
  %v2356 = vunpack.c.h.b16 %v2304
  %v2357 = vunpack.c.l.b16 %v2305
  %v2358 = vunpack.c.h.b16 %v2305
  %v2359 = vunpack.c.l.b16 %v2306
  %v2360 = vunpack.c.h.b16 %v2306
  %v2361 = vunpack.c.l.b16 %v2307
  %v2362 = vunpack.c.h.b16 %v2307
  %v2363 = vunpack.c.l.b16 %v2308
  %v2364 = vunpack.c.h.b16 %v2308
  %v2365 = vunpack.c.l.b16 %v2309
  %v2366 = vunpack.c.h.b16 %v2309
  %v2367 = vunpack.c.l.b16 %v2310
  %v2368 = vunpack.c.h.b16 %v2310
  %v2369 = vunpack.c.l.b16 %v2311
  %v2370 = vunpack.c.h.b16 %v2311
  %v2371 = vunpack.c.l.b16 %v2312
  %v2372 = vunpack.c.h.b16 %v2312
  %v2373 = vpack.c.b16 %v2335, %v2333
  %v2374 = vpack.c.b16 %v2336, %v2334
  %v2375 = vpack.c.b16 %v2339, %v2337
  %v2376 = vpack.c.b16 %v2340, %v2338
  %v2377 = vpack.c.b16 %v2343, %v2341
  %v2378 = vpack.c.b16 %v2344, %v2342
  %v2379 = vpack.c.b16 %v2347, %v2345
  %v2380 = vpack.c.b16 %v2348, %v2346
  %v2381 = vpack.c.b16 %v2351, %v2349
  %v2382 = vpack.c.b16 %v2352, %v2350
  %v2383 = vpack.c.b16 %v2355, %v2353
  %v2384 = vpack.c.b16 %v2356, %v2354
  %v2385 = vpack.c.b16 %v2359, %v2357
  %v2386 = vpack.c.b16 %v2360, %v2358
  %v2387 = vpack.c.b16 %v2363, %v2361
  %v2388 = vpack.c.b16 %v2364, %v2362
  %v2389 = vpack.c.b16 %v2367, %v2365
  %v2390 = vpack.c.b16 %v2368, %v2366
  %v2391 = vpack.c.b16 %v2371, %v2369
  %v2392 = vpack.c.b16 %v2372, %v2370
  %v2414 = vsel %vm115, %v2285, 0
  %v2417 = vsel %vm115, %v2287, 0
  %v2420 = vsel %vm115, %v2289, 0
  %v2423 = vsel %vm115, %v2291, 0
  %2425 = vmatprep.subr.bf16.mxu0 %v2374
  %2426 = vmatpush1.bf16.msra.mxu0 %v2373
  %2427 = vmatprep.subr.bf16.mxu0 %v2376
  %2428 = vmatpush1.bf16.msra.mxu0 %v2375
  %2429 = vmatprep.subr.bf16.mxu0 %v2378
  %2430 = vmatpush1.bf16.msra.mxu0 %v2377
  %2431 = vmatprep.subr.bf16.mxu0 %v2380
  %2432 = vmatpush1.bf16.msra.mxu0 %v2379
  %2433 = vmatprep.subr.bf16.mxu0 %v2382
  %2434 = vmatpush1.bf16.msra.mxu0 %v2381
  %2435 = vmatprep.subr.bf16.mxu0 %v2384
  %2436 = vmatpush1.bf16.msra.mxu0 %v2383
  %2437 = vmatprep.subr.bf16.mxu0 %v2386
  %2438 = vmatpush1.bf16.msra.mxu0 %v2385
  %2439 = vmatprep.subr.bf16.mxu0 %v2388
  %2440 = vmatpush1.bf16.msra.mxu0 %v2387
  %2441 = vmatprep.subr.bf16.mxu0 %v2390
  %2442 = vmatpush1.bf16.msra.mxu0 %v2389
  %2443 = vmatprep.subr.bf16.mxu0 %v2392
  %2444 = vmatpush1.bf16.msra.mxu0 %v2391
  %2445 = vmatprep.subr.bf16.mxu0 0
  %2446 = vmatpush1.bf16.msra.mxu0 0
  %2447 = vmatprep.subr.bf16.mxu0 0
  %2448 = vmatpush1.bf16.msra.mxu0 0
  %2449 = vmatprep.subr.bf16.mxu0 0
  %2450 = vmatpush1.bf16.msra.mxu0 0
  %2451 = vmatprep.subr.bf16.mxu0 0
  %2452 = vmatpush1.bf16.msra.mxu0 0
  %2453 = vmatprep.subr.bf16.mxu0 0
  %2454 = vmatpush1.bf16.msra.mxu0 0
  %2455 = vmatprep.subr.bf16.mxu0 0
  %2456 = vmatpush1.bf16.msra.mxu0 0
  %2457 = vmatprep.mubr.bf16.mxu0 %v2414
  %2458 = vmatmul.mubr.bf16.gmra.mrb[0].mxu0 %v2284
  %v2459 = vpop.f32.mrb[0].mxu0
  %v2460 = vadd.f32 0.0, %v2459
  %v2461 = vpop.f32.mrb[0].mxu0
  %v2462 = vadd.f32 0.0, %v2461
  %v2463 = vpop.f32.mrb[0].mxu0
  %v2464 = vadd.f32 0.0, %v2463
  %v2465 = vpop.f32.mrb[0].mxu0
  %v2466 = vadd.f32 0.0, %v2465
  %2467 = vmatprep.mubr.bf16.mxu0 %v2417
  %2468 = vmatmul.mubr.bf16.gmra.mrb[0].mxu0 %v2286
  %v2469 = vpop.f32.mrb[0].mxu0
  %v2470 = vadd.f32 0.0, %v2469
  %v2471 = vpop.f32.mrb[0].mxu0
  %v2472 = vadd.f32 0.0, %v2471
  %v2473 = vpop.f32.mrb[0].mxu0
  %v2474 = vadd.f32 0.0, %v2473
  %v2475 = vpop.f32.mrb[0].mxu0
  %v2476 = vadd.f32 0.0, %v2475
  %2477 = vmatprep.mubr.bf16.mxu0 %v2420
  %2478 = vmatmul.mubr.bf16.gmra.mrb[0].mxu0 %v2288
  %v2479 = vpop.f32.mrb[0].mxu0
  %v2480 = vadd.f32 0.0, %v2479
  %v2481 = vpop.f32.mrb[0].mxu0
  %v2482 = vadd.f32 0.0, %v2481
  %v2483 = vpop.f32.mrb[0].mxu0
  %v2484 = vadd.f32 0.0, %v2483
  %v2485 = vpop.f32.mrb[0].mxu0
  %v2486 = vadd.f32 0.0, %v2485
  %2487 = vmatprep.mubr.bf16.mxu0 %v2423
  %2488 = vmatmul.mubr.bf16.gmra.mrb[0].mxu0 %v2290
  %v2489 = vpop.f32.mrb[0].mxu0
  %v2490 = vadd.f32 0.0, %v2489
  %v2491 = vpop.f32.mrb[0].mxu0
  %v2492 = vadd.f32 0.0, %v2491
  %v2493 = vpop.f32.mrb[0].mxu0
  %v2494 = vadd.f32 0.0, %v2493
  %v2495 = vpop.f32.mrb[0].mxu0
  %v2496 = vadd.f32 0.0, %v2495
  %2497 = vdwg.mxu0
  %v2498 = vadd.f32 %v2230, %v2460
  %v2499 = vadd.f32 %v2232, %v2462
  %v2500 = vadd.f32 %v2234, %v2464
  %v2501 = vadd.f32 %v2236, %v2466
  %v2502 = vadd.f32 %v2240, %v2470
  %v2503 = vadd.f32 %v2242, %v2472
  %v2504 = vadd.f32 %v2244, %v2474
  %v2505 = vadd.f32 %v2246, %v2476
  %v2506 = vadd.f32 %v2250, %v2480
  %v2507 = vadd.f32 %v2252, %v2482
  %v2508 = vadd.f32 %v2254, %v2484
  %v2509 = vadd.f32 %v2256, %v2486
  %v2510 = vadd.f32 %v2260, %v2490
  %v2511 = vadd.f32 %v2262, %v2492
  %v2512 = vadd.f32 %v2264, %v2494
  %v2513 = vadd.f32 %v2266, %v2496
  %v2514 = vld [vmem:[%s1792] sm:$0xff]
  %v2515 = vld [vmem:[%s1792 + $0x8] sm:$0xff]
  %v2516 = vld [vmem:[%s1792 + $0x10] sm:$0xff]
  %v2517 = vld [vmem:[%s1792 + $0x18] sm:$0xff]
  %v2518 = vld [vmem:[%s1792 + $0x20] sm:$0xff]
  %v2519 = vld [vmem:[%s1792 + $0x28] sm:$0xff]
  %v2520 = vld [vmem:[%s1792 + $0x30] sm:$0xff]
  %v2521 = vld [vmem:[%s1792 + $0x38] sm:$0xff]
  %v2522 = vld [vmem:[%s1792 + $0x40] sm:$0xff]
  %v2523 = vld [vmem:[%s1792 + $0x48] sm:$0xff]
  %v2524 = vld [vmem:[%s1792 + $0x50] sm:$0xff]
  %v2525 = vld [vmem:[%s1792 + $0x58] sm:$0xff]
  %v2526 = vld [vmem:[%s1792 + $0x60] sm:$0xff]
  %v2527 = vld [vmem:[%s1792 + $0x68] sm:$0xff]
  %v2528 = vld [vmem:[%s1792 + $0x70] sm:$0xff]
  %v2529 = vld [vmem:[%s1792 + $0x78] sm:$0xff]
  %v2530 = vpack.c.bf16 %v2516, %v2514
  %v2531 = vpack.c.bf16 %v2517, %v2515
  %v2532 = vpack.c.bf16 %v2520, %v2518
  %v2533 = vpack.c.bf16 %v2521, %v2519
  %v2534 = vpack.c.bf16 %v2524, %v2522
  %v2535 = vpack.c.bf16 %v2525, %v2523
  %v2536 = vpack.c.bf16 %v2528, %v2526
  %v2537 = vpack.c.bf16 %v2529, %v2527
  %s2538 = scalar_lea.vmem %s12, 480
  %v2539 = vld [vmem:[%s2538] sm:$0xff]
  %v2540 = vld [vmem:[%s2538 + $0x8] sm:$0xff]
  %v2541 = vld [vmem:[%s2538 + $0x10] sm:$0xff]
  %v2542 = vld [vmem:[%s2538 + $0x18] sm:$0xff]
  %v2543 = vld [vmem:[%s2538 + $0x20] sm:$0xff]
  %v2544 = vld [vmem:[%s2538 + $0x28] sm:$0xff]
  %v2545 = vld [vmem:[%s2538 + $0x30] sm:$0xff]
  %v2546 = vld [vmem:[%s2538 + $0x38] sm:$0xff]
  %v2547 = vld [vmem:[%s2538 + $0x40] sm:$0xff]
  %v2548 = vld [vmem:[%s2538 + $0x48] sm:$0xff]
  %v2549 = vld [vmem:[%s2538 + $0x50] sm:$0xff]
  %v2550 = vld [vmem:[%s2538 + $0x58] sm:$0xff]
  %v2551 = vld [vmem:[%s2538 + $0x60] sm:$0xff]
  %v2552 = vld [vmem:[%s2538 + $0x68] sm:$0xff]
  %v2553 = vld [vmem:[%s2538 + $0x70] sm:$0xff]
  %v2554 = vld [vmem:[%s2538 + $0x78] sm:$0xff]
  %v2555 = vld [vmem:[%s2538 + $0x80] sm:$0xff]
  %v2556 = vld [vmem:[%s2538 + $0x88] sm:$0xff]
  %v2557 = vld [vmem:[%s2538 + $0x90] sm:$0xff]
  %v2558 = vld [vmem:[%s2538 + $0x98] sm:$0xff]
  %v2579 = vunpack.c.l.b16 %v2539
  %v2580 = vunpack.c.h.b16 %v2539
  %v2581 = vunpack.c.l.b16 %v2540
  %v2582 = vunpack.c.h.b16 %v2540
  %v2583 = vunpack.c.l.b16 %v2541
  %v2584 = vunpack.c.h.b16 %v2541
  %v2585 = vunpack.c.l.b16 %v2542
  %v2586 = vunpack.c.h.b16 %v2542
  %v2587 = vunpack.c.l.b16 %v2543
  %v2588 = vunpack.c.h.b16 %v2543
  %v2589 = vunpack.c.l.b16 %v2544
  %v2590 = vunpack.c.h.b16 %v2544
  %v2591 = vunpack.c.l.b16 %v2545
  %v2592 = vunpack.c.h.b16 %v2545
  %v2593 = vunpack.c.l.b16 %v2546
  %v2594 = vunpack.c.h.b16 %v2546
  %v2595 = vunpack.c.l.b16 %v2547
  %v2596 = vunpack.c.h.b16 %v2547
  %v2597 = vunpack.c.l.b16 %v2548
  %v2598 = vunpack.c.h.b16 %v2548
  %v2599 = vunpack.c.l.b16 %v2549
  %v2600 = vunpack.c.h.b16 %v2549
  %v2601 = vunpack.c.l.b16 %v2550
  %v2602 = vunpack.c.h.b16 %v2550
  %v2603 = vunpack.c.l.b16 %v2551
  %v2604 = vunpack.c.h.b16 %v2551
  %v2605 = vunpack.c.l.b16 %v2552
  %v2606 = vunpack.c.h.b16 %v2552
  %v2607 = vunpack.c.l.b16 %v2553
  %v2608 = vunpack.c.h.b16 %v2553
  %v2609 = vunpack.c.l.b16 %v2554
  %v2610 = vunpack.c.h.b16 %v2554
  %v2611 = vunpack.c.l.b16 %v2555
  %v2612 = vunpack.c.h.b16 %v2555
  %v2613 = vunpack.c.l.b16 %v2556
  %v2614 = vunpack.c.h.b16 %v2556
  %v2615 = vunpack.c.l.b16 %v2557
  %v2616 = vunpack.c.h.b16 %v2557
  %v2617 = vunpack.c.l.b16 %v2558
  %v2618 = vunpack.c.h.b16 %v2558
  %v2619 = vpack.c.b16 %v2581, %v2579
  %v2620 = vpack.c.b16 %v2582, %v2580
  %v2621 = vpack.c.b16 %v2585, %v2583
  %v2622 = vpack.c.b16 %v2586, %v2584
  %v2623 = vpack.c.b16 %v2589, %v2587
  %v2624 = vpack.c.b16 %v2590, %v2588
  %v2625 = vpack.c.b16 %v2593, %v2591
  %v2626 = vpack.c.b16 %v2594, %v2592
  %v2627 = vpack.c.b16 %v2597, %v2595
  %v2628 = vpack.c.b16 %v2598, %v2596
  %v2629 = vpack.c.b16 %v2601, %v2599
  %v2630 = vpack.c.b16 %v2602, %v2600
  %v2631 = vpack.c.b16 %v2605, %v2603
  %v2632 = vpack.c.b16 %v2606, %v2604
  %v2633 = vpack.c.b16 %v2609, %v2607
  %v2634 = vpack.c.b16 %v2610, %v2608
  %v2635 = vpack.c.b16 %v2613, %v2611
  %v2636 = vpack.c.b16 %v2614, %v2612
  %v2637 = vpack.c.b16 %v2617, %v2615
  %v2638 = vpack.c.b16 %v2618, %v2616
  %v2660 = vsel %vm115, %v2531, 0
  %v2663 = vsel %vm115, %v2533, 0
  %v2666 = vsel %vm115, %v2535, 0
  %v2669 = vsel %vm115, %v2537, 0
  %2671 = vmatprep.subr.bf16.mxu0 %v2620
  %2672 = vmatpush1.bf16.msra.mxu0 %v2619
  %2673 = vmatprep.subr.bf16.mxu0 %v2622
  %2674 = vmatpush1.bf16.msra.mxu0 %v2621
  %2675 = vmatprep.subr.bf16.mxu0 %v2624
  %2676 = vmatpush1.bf16.msra.mxu0 %v2623
  %2677 = vmatprep.subr.bf16.mxu0 %v2626
  %2678 = vmatpush1.bf16.msra.mxu0 %v2625
  %2679 = vmatprep.subr.bf16.mxu0 %v2628
  %2680 = vmatpush1.bf16.msra.mxu0 %v2627
  %2681 = vmatprep.subr.bf16.mxu0 %v2630
  %2682 = vmatpush1.bf16.msra.mxu0 %v2629
  %2683 = vmatprep.subr.bf16.mxu0 %v2632
  %2684 = vmatpush1.bf16.msra.mxu0 %v2631
  %2685 = vmatprep.subr.bf16.mxu0 %v2634
  %2686 = vmatpush1.bf16.msra.mxu0 %v2633
  %2687 = vmatprep.subr.bf16.mxu0 %v2636
  %2688 = vmatpush1.bf16.msra.mxu0 %v2635
  %2689 = vmatprep.subr.bf16.mxu0 %v2638
  %2690 = vmatpush1.bf16.msra.mxu0 %v2637
  %2691 = vmatprep.subr.bf16.mxu0 0
  %2692 = vmatpush1.bf16.msra.mxu0 0
  %2693 = vmatprep.subr.bf16.mxu0 0
  %2694 = vmatpush1.bf16.msra.mxu0 0
  %2695 = vmatprep.subr.bf16.mxu0 0
  %2696 = vmatpush1.bf16.msra.mxu0 0
  %2697 = vmatprep.subr.bf16.mxu0 0
  %2698 = vmatpush1.bf16.msra.mxu0 0
  %2699 = vmatprep.subr.bf16.mxu0 0
  %2700 = vmatpush1.bf16.msra.mxu0 0
  %2701 = vmatprep.subr.bf16.mxu0 0
  %2702 = vmatpush1.bf16.msra.mxu0 0
  %2703 = vmatprep.mubr.bf16.mxu0 %v2660
  %2704 = vmatmul.mubr.bf16.gmra.mrb[0].mxu0 %v2530
  %v2705 = vpop.f32.mrb[0].mxu0
  %v2706 = vadd.f32 0.0, %v2705
  %v2707 = vpop.f32.mrb[0].mxu0
  %v2708 = vadd.f32 0.0, %v2707
  %v2709 = vpop.f32.mrb[0].mxu0
  %v2710 = vadd.f32 0.0, %v2709
  %v2711 = vpop.f32.mrb[0].mxu0
  %v2712 = vadd.f32 0.0, %v2711
  %2713 = vmatprep.mubr.bf16.mxu0 %v2663
  %2714 = vmatmul.mubr.bf16.gmra.mrb[0].mxu0 %v2532
  %v2715 = vpop.f32.mrb[0].mxu0
  %v2716 = vadd.f32 0.0, %v2715
  %v2717 = vpop.f32.mrb[0].mxu0
  %v2718 = vadd.f32 0.0, %v2717
  %v2719 = vpop.f32.mrb[0].mxu0
  %v2720 = vadd.f32 0.0, %v2719
  %v2721 = vpop.f32.mrb[0].mxu0
  %v2722 = vadd.f32 0.0, %v2721
  %2723 = vmatprep.mubr.bf16.mxu0 %v2666
  %2724 = vmatmul.mubr.bf16.gmra.mrb[0].mxu0 %v2534
  %v2725 = vpop.f32.mrb[0].mxu0
  %v2726 = vadd.f32 0.0, %v2725
  %v2727 = vpop.f32.mrb[0].mxu0
  %v2728 = vadd.f32 0.0, %v2727
  %v2729 = vpop.f32.mrb[0].mxu0
  %v2730 = vadd.f32 0.0, %v2729
  %v2731 = vpop.f32.mrb[0].mxu0
  %v2732 = vadd.f32 0.0, %v2731
  %2733 = vmatprep.mubr.bf16.mxu0 %v2669
  %2734 = vmatmul.mubr.bf16.gmra.mrb[0].mxu0 %v2536
  %v2735 = vpop.f32.mrb[0].mxu0
  %v2736 = vadd.f32 0.0, %v2735
  %v2737 = vpop.f32.mrb[0].mxu0
  %v2738 = vadd.f32 0.0, %v2737
  %v2739 = vpop.f32.mrb[0].mxu0
  %v2740 = vadd.f32 0.0, %v2739
  %v2741 = vpop.f32.mrb[0].mxu0
  %v2742 = vadd.f32 0.0, %v2741
  %2743 = vdwg.mxu0
  %v2744 = vadd.f32 %v2498, %v2706
  %v2745 = vadd.f32 %v2499, %v2708
  %v2746 = vadd.f32 %v2500, %v2710
  %v2747 = vadd.f32 %v2501, %v2712
  %v2748 = vadd.f32 %v2502, %v2716
  %v2749 = vadd.f32 %v2503, %v2718
  %v2750 = vadd.f32 %v2504, %v2720
  %v2751 = vadd.f32 %v2505, %v2722
  %v2752 = vadd.f32 %v2506, %v2726
  %v2753 = vadd.f32 %v2507, %v2728
  %v2754 = vadd.f32 %v2508, %v2730
  %v2755 = vadd.f32 %v2509, %v2732
  %v2756 = vadd.f32 %v2510, %v2736
  %v2757 = vadd.f32 %v2511, %v2738
  %v2758 = vadd.f32 %v2512, %v2740
  %v2759 = vadd.f32 %v2513, %v2742
  %s2760 = scalar_lea.vmem [#allocation2], 32
  %v2761 = vld [vmem:[%s2760] sm:$0xff]
  %v2762 = vld [vmem:[%s2760 + $0x8] sm:$0xff]
  %v2763 = vld [vmem:[%s2760 + $0x10] sm:$0xff]
  %v2764 = vld [vmem:[%s2760 + $0x18] sm:$0xff]
  %v2765 = vld [vmem:[%s2760 + $0x20] sm:$0xff]
  %v2766 = vld [vmem:[%s2760 + $0x28] sm:$0xff]
  %v2767 = vld [vmem:[%s2760 + $0x30] sm:$0xff]
  %v2768 = vld [vmem:[%s2760 + $0x38] sm:$0xff]
  %v2769 = vld [vmem:[%s2760 + $0x40] sm:$0xff]
  %v2770 = vld [vmem:[%s2760 + $0x48] sm:$0xff]
  %v2771 = vld [vmem:[%s2760 + $0x50] sm:$0xff]
  %v2772 = vld [vmem:[%s2760 + $0x58] sm:$0xff]
  %v2773 = vld [vmem:[%s2760 + $0x60] sm:$0xff]
  %v2774 = vld [vmem:[%s2760 + $0x68] sm:$0xff]
  %v2775 = vld [vmem:[%s2760 + $0x70] sm:$0xff]
  %v2776 = vld [vmem:[%s2760 + $0x78] sm:$0xff]
  %v2777 = vpack.c.bf16 %v2763, %v2761
  %v2778 = vpack.c.bf16 %v2764, %v2762
  %v2779 = vpack.c.bf16 %v2767, %v2765
  %v2780 = vpack.c.bf16 %v2768, %v2766
  %v2781 = vpack.c.bf16 %v2771, %v2769
  %v2782 = vpack.c.bf16 %v2772, %v2770
  %v2783 = vpack.c.bf16 %v2775, %v2773
  %v2784 = vpack.c.bf16 %v2776, %v2774
  %s2785 = scalar_lea.vmem %s12, 640
  %v2786 = vld [vmem:[%s2785] sm:$0xff]
  %v2787 = vld [vmem:[%s2785 + $0x8] sm:$0xff]
  %v2788 = vld [vmem:[%s2785 + $0x10] sm:$0xff]
  %v2789 = vld [vmem:[%s2785 + $0x18] sm:$0xff]
  %v2790 = vld [vmem:[%s2785 + $0x20] sm:$0xff]
  %v2791 = vld [vmem:[%s2785 + $0x28] sm:$0xff]
  %v2792 = vld [vmem:[%s2785 + $0x30] sm:$0xff]
  %v2793 = vld [vmem:[%s2785 + $0x38] sm:$0xff]
  %v2794 = vld [vmem:[%s2785 + $0x40] sm:$0xff]
  %v2795 = vld [vmem:[%s2785 + $0x48] sm:$0xff]
  %v2796 = vld [vmem:[%s2785 + $0x50] sm:$0xff]
  %v2797 = vld [vmem:[%s2785 + $0x58] sm:$0xff]
  %v2798 = vld [vmem:[%s2785 + $0x60] sm:$0xff]
  %v2799 = vld [vmem:[%s2785 + $0x68] sm:$0xff]
  %v2800 = vld [vmem:[%s2785 + $0x70] sm:$0xff]
  %v2801 = vld [vmem:[%s2785 + $0x78] sm:$0xff]
  %v2802 = vld [vmem:[%s2785 + $0x80] sm:$0xff]
  %v2803 = vld [vmem:[%s2785 + $0x88] sm:$0xff]
  %v2804 = vld [vmem:[%s2785 + $0x90] sm:$0xff]
  %v2805 = vld [vmem:[%s2785 + $0x98] sm:$0xff]
  %v2826 = vunpack.c.l.b16 %v2786
  %v2827 = vunpack.c.h.b16 %v2786
  %v2828 = vunpack.c.l.b16 %v2787
  %v2829 = vunpack.c.h.b16 %v2787
  %v2830 = vunpack.c.l.b16 %v2788
  %v2831 = vunpack.c.h.b16 %v2788
  %v2832 = vunpack.c.l.b16 %v2789
  %v2833 = vunpack.c.h.b16 %v2789
  %v2834 = vunpack.c.l.b16 %v2790
  %v2835 = vunpack.c.h.b16 %v2790
  %v2836 = vunpack.c.l.b16 %v2791
  %v2837 = vunpack.c.h.b16 %v2791
  %v2838 = vunpack.c.l.b16 %v2792
  %v2839 = vunpack.c.h.b16 %v2792
  %v2840 = vunpack.c.l.b16 %v2793
  %v2841 = vunpack.c.h.b16 %v2793
  %v2842 = vunpack.c.l.b16 %v2794
  %v2843 = vunpack.c.h.b16 %v2794
  %v2844 = vunpack.c.l.b16 %v2795
  %v2845 = vunpack.c.h.b16 %v2795
  %v2846 = vunpack.c.l.b16 %v2796
  %v2847 = vunpack.c.h.b16 %v2796
  %v2848 = vunpack.c.l.b16 %v2797
  %v2849 = vunpack.c.h.b16 %v2797
  %v2850 = vunpack.c.l.b16 %v2798
  %v2851 = vunpack.c.h.b16 %v2798
  %v2852 = vunpack.c.l.b16 %v2799
  %v2853 = vunpack.c.h.b16 %v2799
  %v2854 = vunpack.c.l.b16 %v2800
  %v2855 = vunpack.c.h.b16 %v2800
  %v2856 = vunpack.c.l.b16 %v2801
  %v2857 = vunpack.c.h.b16 %v2801
  %v2858 = vunpack.c.l.b16 %v2802
  %v2859 = vunpack.c.h.b16 %v2802
  %v2860 = vunpack.c.l.b16 %v2803
  %v2861 = vunpack.c.h.b16 %v2803
  %v2862 = vunpack.c.l.b16 %v2804
  %v2863 = vunpack.c.h.b16 %v2804
  %v2864 = vunpack.c.l.b16 %v2805
  %v2865 = vunpack.c.h.b16 %v2805
  %v2866 = vpack.c.b16 %v2828, %v2826
  %v2867 = vpack.c.b16 %v2829, %v2827
  %v2868 = vpack.c.b16 %v2832, %v2830
  %v2869 = vpack.c.b16 %v2833, %v2831
  %v2870 = vpack.c.b16 %v2836, %v2834
  %v2871 = vpack.c.b16 %v2837, %v2835
  %v2872 = vpack.c.b16 %v2840, %v2838
  %v2873 = vpack.c.b16 %v2841, %v2839
  %v2874 = vpack.c.b16 %v2844, %v2842
  %v2875 = vpack.c.b16 %v2845, %v2843
  %v2876 = vpack.c.b16 %v2848, %v2846
  %v2877 = vpack.c.b16 %v2849, %v2847
  %v2878 = vpack.c.b16 %v2852, %v2850
  %v2879 = vpack.c.b16 %v2853, %v2851
  %v2880 = vpack.c.b16 %v2856, %v2854
  %v2881 = vpack.c.b16 %v2857, %v2855
  %v2882 = vpack.c.b16 %v2860, %v2858
  %v2883 = vpack.c.b16 %v2861, %v2859
  %v2884 = vpack.c.b16 %v2864, %v2862
  %v2885 = vpack.c.b16 %v2865, %v2863
  %v2907 = vsel %vm115, %v2778, 0
  %v2910 = vsel %vm115, %v2780, 0
  %v2913 = vsel %vm115, %v2782, 0
  %v2916 = vsel %vm115, %v2784, 0
  %2918 = vmatprep.subr.bf16.mxu0 %v2867
  %2919 = vmatpush1.bf16.msra.mxu0 %v2866
  %2920 = vmatprep.subr.bf16.mxu0 %v2869
  %2921 = vmatpush1.bf16.msra.mxu0 %v2868
  %2922 = vmatprep.subr.bf16.mxu0 %v2871
  %2923 = vmatpush1.bf16.msra.mxu0 %v2870
  %2924 = vmatprep.subr.bf16.mxu0 %v2873
  %2925 = vmatpush1.bf16.msra.mxu0 %v2872
  %2926 = vmatprep.subr.bf16.mxu0 %v2875
  %2927 = vmatpush1.bf16.msra.mxu0 %v2874
  %2928 = vmatprep.subr.bf16.mxu0 %v2877
  %2929 = vmatpush1.bf16.msra.mxu0 %v2876
  %2930 = vmatprep.subr.bf16.mxu0 %v2879
  %2931 = vmatpush1.bf16.msra.mxu0 %v2878
  %2932 = vmatprep.subr.bf16.mxu0 %v2881
  %2933 = vmatpush1.bf16.msra.mxu0 %v2880
  %2934 = vmatprep.subr.bf16.mxu0 %v2883
  %2935 = vmatpush1.bf16.msra.mxu0 %v2882
  %2936 = vmatprep.subr.bf16.mxu0 %v2885
  %2937 = vmatpush1.bf16.msra.mxu0 %v2884
  %2938 = vmatprep.subr.bf16.mxu0 0
  %2939 = vmatpush1.bf16.msra.mxu0 0
  %2940 = vmatprep.subr.bf16.mxu0 0
  %2941 = vmatpush1.bf16.msra.mxu0 0
  %2942 = vmatprep.subr.bf16.mxu0 0
  %2943 = vmatpush1.bf16.msra.mxu0 0
  %2944 = vmatprep.subr.bf16.mxu0 0
  %2945 = vmatpush1.bf16.msra.mxu0 0
  %2946 = vmatprep.subr.bf16.mxu0 0
  %2947 = vmatpush1.bf16.msra.mxu0 0
  %2948 = vmatprep.subr.bf16.mxu0 0
  %2949 = vmatpush1.bf16.msra.mxu0 0
  %2950 = vmatprep.mubr.bf16.mxu0 %v2907
  %2951 = vmatmul.mubr.bf16.gmra.mrb[0].mxu0 %v2777
  %v2952 = vpop.f32.mrb[0].mxu0
  %v2953 = vadd.f32 0.0, %v2952
  %v2954 = vpop.f32.mrb[0].mxu0
  %v2955 = vadd.f32 0.0, %v2954
  %v2956 = vpop.f32.mrb[0].mxu0
  %v2957 = vadd.f32 0.0, %v2956
  %v2958 = vpop.f32.mrb[0].mxu0
  %v2959 = vadd.f32 0.0, %v2958
  %2960 = vmatprep.mubr.bf16.mxu0 %v2910
  %2961 = vmatmul.mubr.bf16.gmra.mrb[0].mxu0 %v2779
  %v2962 = vpop.f32.mrb[0].mxu0
  %v2963 = vadd.f32 0.0, %v2962
  %v2964 = vpop.f32.mrb[0].mxu0
  %v2965 = vadd.f32 0.0, %v2964
  %v2966 = vpop.f32.mrb[0].mxu0
  %v2967 = vadd.f32 0.0, %v2966
  %v2968 = vpop.f32.mrb[0].mxu0
  %v2969 = vadd.f32 0.0, %v2968
  %2970 = vmatprep.mubr.bf16.mxu0 %v2913
  %2971 = vmatmul.mubr.bf16.gmra.mrb[0].mxu0 %v2781
  %v2972 = vpop.f32.mrb[0].mxu0
  %v2973 = vadd.f32 0.0, %v2972
  %v2974 = vpop.f32.mrb[0].mxu0
  %v2975 = vadd.f32 0.0, %v2974
  %v2976 = vpop.f32.mrb[0].mxu0
  %v2977 = vadd.f32 0.0, %v2976
  %v2978 = vpop.f32.mrb[0].mxu0
  %v2979 = vadd.f32 0.0, %v2978
  %2980 = vmatprep.mubr.bf16.mxu0 %v2916
  %2981 = vmatmul.mubr.bf16.gmra.mrb[0].mxu0 %v2783
  %v2982 = vpop.f32.mrb[0].mxu0
  %v2983 = vadd.f32 0.0, %v2982
  %v2984 = vpop.f32.mrb[0].mxu0
  %v2985 = vadd.f32 0.0, %v2984
  %v2986 = vpop.f32.mrb[0].mxu0
  %v2987 = vadd.f32 0.0, %v2986
  %v2988 = vpop.f32.mrb[0].mxu0
  %v2989 = vadd.f32 0.0, %v2988
  %2990 = vdwg.mxu0
  %v2991 = vadd.f32 %v2744, %v2953
  %v2992 = vadd.f32 %v2745, %v2955
  %v2993 = vadd.f32 %v2746, %v2957
  %v2994 = vadd.f32 %v2747, %v2959
  %v2995 = vadd.f32 %v2748, %v2963
  %v2996 = vadd.f32 %v2749, %v2965
  %v2997 = vadd.f32 %v2750, %v2967
  %v2998 = vadd.f32 %v2751, %v2969
  %v2999 = vadd.f32 %v2752, %v2973
  %v3000 = vadd.f32 %v2753, %v2975
  %v3001 = vadd.f32 %v2754, %v2977
  %v3002 = vadd.f32 %v2755, %v2979
  %v3003 = vadd.f32 %v2756, %v2983
  %v3004 = vadd.f32 %v2757, %v2985
  %v3005 = vadd.f32 %v2758, %v2987
  %v3006 = vadd.f32 %v2759, %v2989
  %v3007 = vld [vmem:[%s13] sm:$0x3]
  %v3009 = vlaneseq
  %v3010 = vshrl.u32 %v3009, 7
  %v3011 = vsub.s32 0, %v3010
  %v3012 = vrot.slane %v3007, %v3011
  %v3013 = vlaneseq
  %v3014 = vshrl.u32 %v3013, 7
  %v3015 = vsub.s32 1, %v3014
  %v3016 = vrot.slane %v3007, %v3015
  %v3019 = vadd.f32 %v2991, %v3012
  %v3020 = vadd.f32 %v2992, %v3016
  %v3021 = vadd.f32 %v2993, %v3012
  %v3022 = vadd.f32 %v2994, %v3016
  %v3023 = vadd.f32 %v2995, %v3012
  %v3024 = vadd.f32 %v2996, %v3016
  %v3025 = vadd.f32 %v2997, %v3012
  %v3026 = vadd.f32 %v2998, %v3016
  %v3027 = vadd.f32 %v2999, %v3012
  %v3028 = vadd.f32 %v3000, %v3016
  %v3029 = vadd.f32 %v3001, %v3012
  %v3030 = vadd.f32 %v3002, %v3016
  %v3031 = vadd.f32 %v3003, %v3012
  %v3032 = vadd.f32 %v3004, %v3016
  %v3033 = vadd.f32 %v3005, %v3012
  %v3034 = vadd.f32 %v3006, %v3016
  %vm3035 = vcmp.gt.f32.partialorder %v3019, 0.0
  %vm3036 = vcmp.gt.f32.partialorder %v3020, 0.0
  %vm3037 = vcmp.gt.f32.partialorder %v3021, 0.0
  %vm3038 = vcmp.gt.f32.partialorder %v3022, 0.0
  %vm3039 = vcmp.gt.f32.partialorder %v3023, 0.0
  %vm3040 = vcmp.gt.f32.partialorder %v3024, 0.0
  %vm3041 = vcmp.gt.f32.partialorder %v3025, 0.0
  %vm3042 = vcmp.gt.f32.partialorder %v3026, 0.0
  %vm3043 = vcmp.gt.f32.partialorder %v3027, 0.0
  %vm3044 = vcmp.gt.f32.partialorder %v3028, 0.0
  %vm3045 = vcmp.gt.f32.partialorder %v3029, 0.0
  %vm3046 = vcmp.gt.f32.partialorder %v3030, 0.0
  %vm3047 = vcmp.gt.f32.partialorder %v3031, 0.0
  %vm3048 = vcmp.gt.f32.partialorder %v3032, 0.0
  %vm3049 = vcmp.gt.f32.partialorder %v3033, 0.0
  %vm3050 = vcmp.gt.f32.partialorder %v3034, 0.0
  %v3051 = vmin.f32 %v3019, 0.0
  %v3052 = vmin.f32 %v3020, 0.0
  %v3053 = vmin.f32 %v3021, 0.0
  %v3054 = vmin.f32 %v3022, 0.0
  %v3055 = vmin.f32 %v3023, 0.0
  %v3056 = vmin.f32 %v3024, 0.0
  %v3057 = vmin.f32 %v3025, 0.0
  %v3058 = vmin.f32 %v3026, 0.0
  %v3059 = vmin.f32 %v3027, 0.0
  %v3060 = vmin.f32 %v3028, 0.0
  %v3061 = vmin.f32 %v3029, 0.0
  %v3062 = vmin.f32 %v3030, 0.0
  %v3063 = vmin.f32 %v3031, 0.0
  %v3064 = vmin.f32 %v3032, 0.0
  %v3065 = vmin.f32 %v3033, 0.0
  %v3066 = vmin.f32 %v3034, 0.0
  %v3067 = vmul.f32 %v3051, 1.442695
  %v3068 = vpow.pop %v3067
  %v3069 = vmul.f32 %v3052, 1.442695
  %v3070 = vpow.pop %v3069
  %v3071 = vmul.f32 %v3053, 1.442695
  %v3072 = vpow.pop %v3071
  %v3073 = vmul.f32 %v3054, 1.442695
  %v3074 = vpow.pop %v3073
  %v3075 = vmul.f32 %v3055, 1.442695
  %v3076 = vpow.pop %v3075
  %v3077 = vmul.f32 %v3056, 1.442695
  %v3078 = vpow.pop %v3077
  %v3079 = vmul.f32 %v3057, 1.442695
  %v3080 = vpow.pop %v3079
  %v3081 = vmul.f32 %v3058, 1.442695
  %v3082 = vpow.pop %v3081
  %v3083 = vmul.f32 %v3059, 1.442695
  %v3084 = vpow.pop %v3083
  %v3085 = vmul.f32 %v3060, 1.442695
  %v3086 = vpow.pop %v3085
  %v3087 = vmul.f32 %v3061, 1.442695
  %v3088 = vpow.pop %v3087
  %v3089 = vmul.f32 %v3062, 1.442695
  %v3090 = vpow.pop %v3089
  %v3091 = vmul.f32 %v3063, 1.442695
  %v3092 = vpow.pop %v3091
  %v3093 = vmul.f32 %v3064, 1.442695
  %v3094 = vpow.pop %v3093
  %v3095 = vmul.f32 %v3065, 1.442695
  %v3096 = vpow.pop %v3095
  %v3097 = vmul.f32 %v3066, 1.442695
  %v3098 = vpow.pop %v3097
  %v3099 = vsub.f32 %v3068, 1.0
  %v3100 = vsub.f32 %v3070, 1.0
  %v3101 = vsub.f32 %v3072, 1.0
  %v3102 = vsub.f32 %v3074, 1.0
  %v3103 = vsub.f32 %v3076, 1.0
  %v3104 = vsub.f32 %v3078, 1.0
  %v3105 = vsub.f32 %v3080, 1.0
  %v3106 = vsub.f32 %v3082, 1.0
  %v3107 = vsub.f32 %v3084, 1.0
  %v3108 = vsub.f32 %v3086, 1.0
  %v3109 = vsub.f32 %v3088, 1.0
  %v3110 = vsub.f32 %v3090, 1.0
  %v3111 = vsub.f32 %v3092, 1.0
  %v3112 = vsub.f32 %v3094, 1.0
  %v3113 = vsub.f32 %v3096, 1.0
  %v3114 = vsub.f32 %v3098, 1.0
  %v3115 = vsel %vm3035, %v3019, %v3099
  %v3116 = vsel %vm3036, %v3020, %v3100
  %v3117 = vsel %vm3037, %v3021, %v3101
  %v3118 = vsel %vm3038, %v3022, %v3102
  %v3119 = vsel %vm3039, %v3023, %v3103
  %v3120 = vsel %vm3040, %v3024, %v3104
  %v3121 = vsel %vm3041, %v3025, %v3105
  %v3122 = vsel %vm3042, %v3026, %v3106
  %v3123 = vsel %vm3043, %v3027, %v3107
  %v3124 = vsel %vm3044, %v3028, %v3108
  %v3125 = vsel %vm3045, %v3029, %v3109
  %v3126 = vsel %vm3046, %v3030, %v3110
  %v3127 = vsel %vm3047, %v3031, %v3111
  %v3128 = vsel %vm3048, %v3032, %v3112
  %v3129 = vsel %vm3049, %v3033, %v3113
  %v3130 = vsel %vm3050, %v3034, %v3114
  %3131 = vst [vmem:[#allocation5] sm:$0xff] %v3115
  %3132 = vst.msk [vmem:[#allocation5 + $0x8] sm:$0xff] %vm115, %v3116
  %3133 = vst [vmem:[#allocation5 + $0x10] sm:$0xff] %v3119
  %3134 = vst.msk [vmem:[#allocation5 + $0x18] sm:$0xff] %vm115, %v3120
  %3135 = vst [vmem:[#allocation5 + $0x20] sm:$0xff] %v3123
  %3136 = vst.msk [vmem:[#allocation5 + $0x28] sm:$0xff] %vm115, %v3124
  %3137 = vst [vmem:[#allocation5 + $0x30] sm:$0xff] %v3127
  %3138 = vst.msk [vmem:[#allocation5 + $0x38] sm:$0xff] %vm115, %v3128
  %s3139 = scalar_lea.vmem [#allocation4], 16
  %3140 = vst [vmem:[%s3139] sm:$0xff] %v3117
  %3141 = vst.msk [vmem:[%s3139 + $0x8] sm:$0xff] %vm115, %v3118
  %3142 = vst [vmem:[%s3139 + $0x10] sm:$0xff] %v3121
  %3143 = vst.msk [vmem:[%s3139 + $0x18] sm:$0xff] %vm115, %v3122
  %3144 = vst [vmem:[%s3139 + $0x20] sm:$0xff] %v3125
  %3145 = vst.msk [vmem:[%s3139 + $0x28] sm:$0xff] %vm115, %v3126
  %3146 = vst [vmem:[%s3139 + $0x30] sm:$0xff] %v3129
  %3147 = vst.msk [vmem:[%s3139 + $0x38] sm:$0xff] %vm115, %v3130
  %v3148 = vld [vmem:[#allocation4] sm:$0xff]
  %v3149 = vld [vmem:[#allocation4 + $0x8] sm:$0xff]
  %v3150 = vld [vmem:[#allocation4 + $0x10] sm:$0xff]
  %v3151 = vld [vmem:[#allocation4 + $0x18] sm:$0xff]
  %v3152 = vld [vmem:[#allocation4 + $0x20] sm:$0xff]
  %v3153 = vld [vmem:[#allocation4 + $0x28] sm:$0xff]
  %v3154 = vld [vmem:[#allocation4 + $0x30] sm:$0xff]
  %v3155 = vld [vmem:[#allocation4 + $0x38] sm:$0xff]
  %v3156 = vpack.c.bf16 %v3150, %v3148
  %v3157 = vpack.c.bf16 %v3151, %v3149
  %v3158 = vpack.c.bf16 %v3154, %v3152
  %v3159 = vpack.c.bf16 %v3155, %v3153
  %v3160 = vld [vmem:[%s14] sm:$0xf]
  %v3161 = vld [vmem:[%s14 + $0x4] sm:$0xf]
  %v3162 = vld [vmem:[%s14 + $0x8] sm:$0xf]
  %v3163 = vld [vmem:[%s14 + $0xc] sm:$0xf]
  %v3164 = vld [vmem:[%s14 + $0x10] sm:$0xf]
  %v3165 = vld [vmem:[%s14 + $0x14] sm:$0xf]
  %v3166 = vld [vmem:[%s14 + $0x18] sm:$0xf]
  %v3167 = vld [vmem:[%s14 + $0x1c] sm:$0xf]
  %v3168 = vld [vmem:[%s14 + $0x20] sm:$0xf]
  %v3169 = vld [vmem:[%s14 + $0x24] sm:$0xf]
  %v3170 = vld [vmem:[%s14 + $0x28] sm:$0xf]
  %v3171 = vld [vmem:[%s14 + $0x2c] sm:$0xf]
  %v3172 = vld [vmem:[%s14 + $0x30] sm:$0xf]
  %v3173 = vld [vmem:[%s14 + $0x34] sm:$0xf]
  %v3174 = vld [vmem:[%s14 + $0x38] sm:$0xf]
  %v3175 = vld [vmem:[%s14 + $0x3c] sm:$0xf]
  %v3176 = vld [vmem:[%s14 + $0x40] sm:$0xf]
  %v3177 = vld [vmem:[%s14 + $0x44] sm:$0xf]
  %v3178 = vld [vmem:[%s14 + $0x48] sm:$0xf]
  %v3179 = vld [vmem:[%s14 + $0x4c] sm:$0xf]
  %v3180 = vld [vmem:[#allocation5] sm:$0xff]
  %v3181 = vld [vmem:[#allocation5 + $0x8] sm:$0xff]
  %v3182 = vld [vmem:[#allocation5 + $0x10] sm:$0xff]
  %v3183 = vld [vmem:[#allocation5 + $0x18] sm:$0xff]
  %v3184 = vld [vmem:[#allocation5 + $0x20] sm:$0xff]
  %v3185 = vld [vmem:[#allocation5 + $0x28] sm:$0xff]
  %v3186 = vld [vmem:[#allocation5 + $0x30] sm:$0xff]
  %v3187 = vld [vmem:[#allocation5 + $0x38] sm:$0xff]
  %v3188 = vpack.c.bf16 %v3182, %v3180
  %v3189 = vpack.c.bf16 %v3183, %v3181
  %v3190 = vpack.c.bf16 %v3186, %v3184
  %v3191 = vpack.c.bf16 %v3187, %v3185
  %s3192 = scalar_lea.vmem %s14, 80
  %v3193 = vld [vmem:[%s3192] sm:$0xf]
  %v3194 = vld [vmem:[%s3192 + $0x4] sm:$0xf]
  %v3195 = vld [vmem:[%s3192 + $0x8] sm:$0xf]
  %v3196 = vld [vmem:[%s3192 + $0xc] sm:$0xf]
  %v3197 = vld [vmem:[%s3192 + $0x10] sm:$0xf]
  %v3198 = vld [vmem:[%s3192 + $0x14] sm:$0xf]
  %v3199 = vld [vmem:[%s3192 + $0x18] sm:$0xf]
  %v3200 = vld [vmem:[%s3192 + $0x1c] sm:$0xf]
  %v3201 = vld [vmem:[%s3192 + $0x20] sm:$0xf]
  %v3202 = vld [vmem:[%s3192 + $0x24] sm:$0xf]
  %v3203 = vld [vmem:[%s3192 + $0x28] sm:$0xf]
  %v3204 = vld [vmem:[%s3192 + $0x2c] sm:$0xf]
  %v3205 = vld [vmem:[%s3192 + $0x30] sm:$0xf]
  %v3206 = vld [vmem:[%s3192 + $0x34] sm:$0xf]
  %v3207 = vld [vmem:[%s3192 + $0x38] sm:$0xf]
  %v3208 = vld [vmem:[%s3192 + $0x3c] sm:$0xf]
  %v3209 = vld [vmem:[%s3192 + $0x40] sm:$0xf]
  %v3210 = vld [vmem:[%s3192 + $0x44] sm:$0xf]
  %v3211 = vld [vmem:[%s3192 + $0x48] sm:$0xf]
  %v3212 = vld [vmem:[%s3192 + $0x4c] sm:$0xf]
  %v3233 = vunpack.c.l.b16 %v3193
  %v3234 = vunpack.c.l.b16 %v3194
  %v3235 = vunpack.c.l.b16 %v3195
  %v3236 = vunpack.c.l.b16 %v3196
  %v3237 = vunpack.c.l.b16 %v3197
  %v3238 = vunpack.c.l.b16 %v3198
  %v3239 = vunpack.c.l.b16 %v3199
  %v3240 = vunpack.c.l.b16 %v3200
  %v3241 = vunpack.c.l.b16 %v3201
  %v3242 = vunpack.c.l.b16 %v3202
  %v3243 = vunpack.c.l.b16 %v3203
  %v3244 = vunpack.c.l.b16 %v3204
  %v3245 = vunpack.c.l.b16 %v3205
  %v3246 = vunpack.c.l.b16 %v3206
  %v3247 = vunpack.c.l.b16 %v3207
  %v3248 = vunpack.c.l.b16 %v3208
  %v3249 = vunpack.c.l.b16 %v3209
  %v3250 = vunpack.c.l.b16 %v3210
  %v3251 = vunpack.c.l.b16 %v3211
  %v3252 = vunpack.c.l.b16 %v3212
  %v3253 = vpack.c.b16 %v3234, %v3233
  %v3254 = vpack.c.b16 %v3236, %v3235
  %v3255 = vpack.c.b16 %v3238, %v3237
  %v3256 = vpack.c.b16 %v3240, %v3239
  %v3257 = vpack.c.b16 %v3242, %v3241
  %v3258 = vpack.c.b16 %v3244, %v3243
  %v3259 = vpack.c.b16 %v3246, %v3245
  %v3260 = vpack.c.b16 %v3248, %v3247
  %v3261 = vpack.c.b16 %v3250, %v3249
  %v3262 = vpack.c.b16 %v3252, %v3251
  %v3274 = vsel %vm115, %v3189, 0
  %v3277 = vsel %vm115, %v3191, 0
  %3279 = vmatprep.subr.bf16.mxu0 0
  %3280 = vmatpush1.bf16.msra.mxu0 %v3253
  %3281 = vmatprep.subr.bf16.mxu0 0
  %3282 = vmatpush1.bf16.msra.mxu0 %v3254
  %3283 = vmatprep.subr.bf16.mxu0 0
  %3284 = vmatpush1.bf16.msra.mxu0 %v3255
  %3285 = vmatprep.subr.bf16.mxu0 0
  %3286 = vmatpush1.bf16.msra.mxu0 %v3256
  %3287 = vmatprep.subr.bf16.mxu0 0
  %3288 = vmatpush1.bf16.msra.mxu0 %v3257
  %3289 = vmatprep.subr.bf16.mxu0 0
  %3290 = vmatpush1.bf16.msra.mxu0 %v3258
  %3291 = vmatprep.subr.bf16.mxu0 0
  %3292 = vmatpush1.bf16.msra.mxu0 %v3259
  %3293 = vmatprep.subr.bf16.mxu0 0
  %3294 = vmatpush1.bf16.msra.mxu0 %v3260
  %3295 = vmatprep.subr.bf16.mxu0 0
  %3296 = vmatpush1.bf16.msra.mxu0 %v3261
  %3297 = vmatprep.subr.bf16.mxu0 0
  %3298 = vmatpush1.bf16.msra.mxu0 %v3262
  %3299 = vmatprep.subr.bf16.mxu0 0
  %3300 = vmatpush1.bf16.msra.mxu0 0
  %3301 = vmatprep.subr.bf16.mxu0 0
  %3302 = vmatpush1.bf16.msra.mxu0 0
  %3303 = vmatprep.subr.bf16.mxu0 0
  %3304 = vmatpush1.bf16.msra.mxu0 0
  %3305 = vmatprep.subr.bf16.mxu0 0
  %3306 = vmatpush1.bf16.msra.mxu0 0
  %3307 = vmatprep.subr.bf16.mxu0 0
  %3308 = vmatpush1.bf16.msra.mxu0 0
  %3309 = vmatprep.subr.bf16.mxu0 0
  %3310 = vmatpush1.bf16.msra.mxu0 0
  %3311 = vmatprep.mubr.bf16.mxu0 %v3274
  %3312 = vmatmul.mubr.bf16.gmra.mrb[0].mxu0 %v3188
  %v3313 = vpop.f32.mrb[0].mxu0
  %v3314 = vadd.f32 0.0, %v3313
  %v3315 = vpop.f32.mrb[0].mxu0
  %v3316 = vpop.f32.mrb[0].mxu0
  %v3317 = vadd.f32 0.0, %v3316
  %v3318 = vpop.f32.mrb[0].mxu0
  %3319 = vmatprep.mubr.bf16.mxu0 %v3277
  %3320 = vmatmul.mubr.bf16.gmra.mrb[0].mxu0 %v3190
  %v3321 = vpop.f32.mrb[0].mxu0
  %v3322 = vadd.f32 0.0, %v3321
  %v3323 = vpop.f32.mrb[0].mxu0
  %v3324 = vpop.f32.mrb[0].mxu0
  %v3325 = vadd.f32 0.0, %v3324
  %v3326 = vpop.f32.mrb[0].mxu0
  %3327 = vdwg.mxu0
  %v3348 = vunpack.c.l.b16 %v3160
  %v3349 = vunpack.c.l.b16 %v3161
  %v3350 = vunpack.c.l.b16 %v3162
  %v3351 = vunpack.c.l.b16 %v3163
  %v3352 = vunpack.c.l.b16 %v3164
  %v3353 = vunpack.c.l.b16 %v3165
  %v3354 = vunpack.c.l.b16 %v3166
  %v3355 = vunpack.c.l.b16 %v3167
  %v3356 = vunpack.c.l.b16 %v3168
  %v3357 = vunpack.c.l.b16 %v3169
  %v3358 = vunpack.c.l.b16 %v3170
  %v3359 = vunpack.c.l.b16 %v3171
  %v3360 = vunpack.c.l.b16 %v3172
  %v3361 = vunpack.c.l.b16 %v3173
  %v3362 = vunpack.c.l.b16 %v3174
  %v3363 = vunpack.c.l.b16 %v3175
  %v3364 = vunpack.c.l.b16 %v3176
  %v3365 = vunpack.c.l.b16 %v3177
  %v3366 = vunpack.c.l.b16 %v3178
  %v3367 = vunpack.c.l.b16 %v3179
  %v3368 = vpack.c.b16 %v3349, %v3348
  %v3369 = vpack.c.b16 %v3351, %v3350
  %v3370 = vpack.c.b16 %v3353, %v3352
  %v3371 = vpack.c.b16 %v3355, %v3354
  %v3372 = vpack.c.b16 %v3357, %v3356
  %v3373 = vpack.c.b16 %v3359, %v3358
  %v3374 = vpack.c.b16 %v3361, %v3360
  %v3375 = vpack.c.b16 %v3363, %v3362
  %v3376 = vpack.c.b16 %v3365, %v3364
  %v3377 = vpack.c.b16 %v3367, %v3366
  %v3389 = vsel %vm115, %v3157, 0
  %v3392 = vsel %vm115, %v3159, 0
  %3394 = vmatprep.subr.bf16.mxu0 0
  %3395 = vmatpush1.bf16.msra.mxu0 %v3368
  %3396 = vmatprep.subr.bf16.mxu0 0
  %3397 = vmatpush1.bf16.msra.mxu0 %v3369
  %3398 = vmatprep.subr.bf16.mxu0 0
  %3399 = vmatpush1.bf16.msra.mxu0 %v3370
  %3400 = vmatprep.subr.bf16.mxu0 0
  %3401 = vmatpush1.bf16.msra.mxu0 %v3371
  %3402 = vmatprep.subr.bf16.mxu0 0
  %3403 = vmatpush1.bf16.msra.mxu0 %v3372
  %3404 = vmatprep.subr.bf16.mxu0 0
  %3405 = vmatpush1.bf16.msra.mxu0 %v3373
  %3406 = vmatprep.subr.bf16.mxu0 0
  %3407 = vmatpush1.bf16.msra.mxu0 %v3374
  %3408 = vmatprep.subr.bf16.mxu0 0
  %3409 = vmatpush1.bf16.msra.mxu0 %v3375
  %3410 = vmatprep.subr.bf16.mxu0 0
  %3411 = vmatpush1.bf16.msra.mxu0 %v3376
  %3412 = vmatprep.subr.bf16.mxu0 0
  %3413 = vmatpush1.bf16.msra.mxu0 %v3377
  %3414 = vmatprep.subr.bf16.mxu0 0
  %3415 = vmatpush1.bf16.msra.mxu0 0
  %3416 = vmatprep.subr.bf16.mxu0 0
  %3417 = vmatpush1.bf16.msra.mxu0 0
  %3418 = vmatprep.subr.bf16.mxu0 0
  %3419 = vmatpush1.bf16.msra.mxu0 0
  %3420 = vmatprep.subr.bf16.mxu0 0
  %3421 = vmatpush1.bf16.msra.mxu0 0
  %3422 = vmatprep.subr.bf16.mxu0 0
  %3423 = vmatpush1.bf16.msra.mxu0 0
  %3424 = vmatprep.subr.bf16.mxu0 0
  %3425 = vmatpush1.bf16.msra.mxu0 0
  %3426 = vmatprep.mubr.bf16.mxu0 %v3389
  %3427 = vmatmul.mubr.bf16.gmra.mrb[0].mxu0 %v3156
  %v3428 = vpop.f32.mrb[0].mxu0
  %v3429 = vadd.f32 %v3314, %v3428
  %v3430 = vpop.f32.mrb[0].mxu0
  %v3431 = vpop.f32.mrb[0].mxu0
  %v3432 = vadd.f32 %v3317, %v3431
  %v3433 = vpop.f32.mrb[0].mxu0
  %3434 = vmatprep.mubr.bf16.mxu0 %v3392
  %3435 = vmatmul.mubr.bf16.gmra.mrb[0].mxu0 %v3158
  %v3436 = vpop.f32.mrb[0].mxu0
  %v3437 = vadd.f32 %v3322, %v3436
  %v3438 = vpop.f32.mrb[0].mxu0
  %v3439 = vpop.f32.mrb[0].mxu0
  %v3440 = vadd.f32 %v3325, %v3439
  %v3441 = vpop.f32.mrb[0].mxu0
  %3442 = vdwg.mxu0
  %v3443 = vld [vmem:[%s3139] sm:$0xff]
  %v3444 = vld [vmem:[%s3139 + $0x8] sm:$0xff]
  %v3445 = vld [vmem:[%s3139 + $0x10] sm:$0xff]
  %v3446 = vld [vmem:[%s3139 + $0x18] sm:$0xff]
  %v3447 = vld [vmem:[%s3139 + $0x20] sm:$0xff]
  %v3448 = vld [vmem:[%s3139 + $0x28] sm:$0xff]
  %v3449 = vld [vmem:[%s3139 + $0x30] sm:$0xff]
  %v3450 = vld [vmem:[%s3139 + $0x38] sm:$0xff]
  %v3451 = vpack.c.bf16 %v3445, %v3443
  %v3452 = vpack.c.bf16 %v3446, %v3444
  %v3453 = vpack.c.bf16 %v3449, %v3447
  %v3454 = vpack.c.bf16 %v3450, %v3448
  %s3455 = scalar_lea.vmem %s14, 160
  %v3456 = vld [vmem:[%s3455] sm:$0xf]
  %v3457 = vld [vmem:[%s3455 + $0x4] sm:$0xf]
  %v3458 = vld [vmem:[%s3455 + $0x8] sm:$0xf]
  %v3459 = vld [vmem:[%s3455 + $0xc] sm:$0xf]
  %v3460 = vld [vmem:[%s3455 + $0x10] sm:$0xf]
  %v3461 = vld [vmem:[%s3455 + $0x14] sm:$0xf]
  %v3462 = vld [vmem:[%s3455 + $0x18] sm:$0xf]
  %v3463 = vld [vmem:[%s3455 + $0x1c] sm:$0xf]
  %v3464 = vld [vmem:[%s3455 + $0x20] sm:$0xf]
  %v3465 = vld [vmem:[%s3455 + $0x24] sm:$0xf]
  %v3466 = vld [vmem:[%s3455 + $0x28] sm:$0xf]
  %v3467 = vld [vmem:[%s3455 + $0x2c] sm:$0xf]
  %v3468 = vld [vmem:[%s3455 + $0x30] sm:$0xf]
  %v3469 = vld [vmem:[%s3455 + $0x34] sm:$0xf]
  %v3470 = vld [vmem:[%s3455 + $0x38] sm:$0xf]
  %v3471 = vld [vmem:[%s3455 + $0x3c] sm:$0xf]
  %v3472 = vld [vmem:[%s3455 + $0x40] sm:$0xf]
  %v3473 = vld [vmem:[%s3455 + $0x44] sm:$0xf]
  %v3474 = vld [vmem:[%s3455 + $0x48] sm:$0xf]
  %v3475 = vld [vmem:[%s3455 + $0x4c] sm:$0xf]
  %v3496 = vunpack.c.l.b16 %v3456
  %v3497 = vunpack.c.l.b16 %v3457
  %v3498 = vunpack.c.l.b16 %v3458
  %v3499 = vunpack.c.l.b16 %v3459
  %v3500 = vunpack.c.l.b16 %v3460
  %v3501 = vunpack.c.l.b16 %v3461
  %v3502 = vunpack.c.l.b16 %v3462
  %v3503 = vunpack.c.l.b16 %v3463
  %v3504 = vunpack.c.l.b16 %v3464
  %v3505 = vunpack.c.l.b16 %v3465
  %v3506 = vunpack.c.l.b16 %v3466
  %v3507 = vunpack.c.l.b16 %v3467
  %v3508 = vunpack.c.l.b16 %v3468
  %v3509 = vunpack.c.l.b16 %v3469
  %v3510 = vunpack.c.l.b16 %v3470
  %v3511 = vunpack.c.l.b16 %v3471
  %v3512 = vunpack.c.l.b16 %v3472
  %v3513 = vunpack.c.l.b16 %v3473
  %v3514 = vunpack.c.l.b16 %v3474
  %v3515 = vunpack.c.l.b16 %v3475
  %v3516 = vpack.c.b16 %v3497, %v3496
  %v3517 = vpack.c.b16 %v3499, %v3498
  %v3518 = vpack.c.b16 %v3501, %v3500
  %v3519 = vpack.c.b16 %v3503, %v3502
  %v3520 = vpack.c.b16 %v3505, %v3504
  %v3521 = vpack.c.b16 %v3507, %v3506
  %v3522 = vpack.c.b16 %v3509, %v3508
  %v3523 = vpack.c.b16 %v3511, %v3510
  %v3524 = vpack.c.b16 %v3513, %v3512
  %v3525 = vpack.c.b16 %v3515, %v3514
  %v3537 = vsel %vm115, %v3452, 0
  %v3540 = vsel %vm115, %v3454, 0
  %3542 = vmatprep.subr.bf16.mxu0 0
  %3543 = vmatpush1.bf16.msra.mxu0 %v3516
  %3544 = vmatprep.subr.bf16.mxu0 0
  %3545 = vmatpush1.bf16.msra.mxu0 %v3517
  %3546 = vmatprep.subr.bf16.mxu0 0
  %3547 = vmatpush1.bf16.msra.mxu0 %v3518
  %3548 = vmatprep.subr.bf16.mxu0 0
  %3549 = vmatpush1.bf16.msra.mxu0 %v3519
  %3550 = vmatprep.subr.bf16.mxu0 0
  %3551 = vmatpush1.bf16.msra.mxu0 %v3520
  %3552 = vmatprep.subr.bf16.mxu0 0
  %3553 = vmatpush1.bf16.msra.mxu0 %v3521
  %3554 = vmatprep.subr.bf16.mxu0 0
  %3555 = vmatpush1.bf16.msra.mxu0 %v3522
  %3556 = vmatprep.subr.bf16.mxu0 0
  %3557 = vmatpush1.bf16.msra.mxu0 %v3523
  %3558 = vmatprep.subr.bf16.mxu0 0
  %3559 = vmatpush1.bf16.msra.mxu0 %v3524
  %3560 = vmatprep.subr.bf16.mxu0 0
  %3561 = vmatpush1.bf16.msra.mxu0 %v3525
  %3562 = vmatprep.subr.bf16.mxu0 0
  %3563 = vmatpush1.bf16.msra.mxu0 0
  %3564 = vmatprep.subr.bf16.mxu0 0
  %3565 = vmatpush1.bf16.msra.mxu0 0
  %3566 = vmatprep.subr.bf16.mxu0 0
  %3567 = vmatpush1.bf16.msra.mxu0 0
  %3568 = vmatprep.subr.bf16.mxu0 0
  %3569 = vmatpush1.bf16.msra.mxu0 0
  %3570 = vmatprep.subr.bf16.mxu0 0
  %3571 = vmatpush1.bf16.msra.mxu0 0
  %3572 = vmatprep.subr.bf16.mxu0 0
  %3573 = vmatpush1.bf16.msra.mxu0 0
  %3574 = vmatprep.mubr.bf16.mxu0 %v3537
  %3575 = vmatmul.mubr.bf16.gmra.mrb[0].mxu0 %v3451
  %v3576 = vpop.f32.mrb[0].mxu0
  %v3577 = vadd.f32 0.0, %v3576
  %v3578 = vpop.f32.mrb[0].mxu0
  %v3579 = vpop.f32.mrb[0].mxu0
  %v3580 = vadd.f32 0.0, %v3579
  %v3581 = vpop.f32.mrb[0].mxu0
  %3582 = vmatprep.mubr.bf16.mxu0 %v3540
  %3583 = vmatmul.mubr.bf16.gmra.mrb[0].mxu0 %v3453
  %v3584 = vpop.f32.mrb[0].mxu0
  %v3585 = vadd.f32 0.0, %v3584
  %v3586 = vpop.f32.mrb[0].mxu0
  %v3587 = vpop.f32.mrb[0].mxu0
  %v3588 = vadd.f32 0.0, %v3587
  %v3589 = vpop.f32.mrb[0].mxu0
  %3590 = vdwg.mxu0
  %v3591 = vadd.f32 %v3429, %v3577
  %v3592 = vadd.f32 %v3432, %v3580
  %v3593 = vadd.f32 %v3437, %v3585
  %v3594 = vadd.f32 %v3440, %v3588
  %v3595 = vld [vmem:[%s15] sm:$0x1]
  %v3597 = vlaneseq
  %v3598 = vshrl.u32 %v3597, 7
  %v3599 = vsub.s32 0, %v3598
  %v3600 = vrot.slane %v3595, %v3599
  %v3602 = vadd.f32 %v3591, %v3600
  %v3603 = vadd.f32 %v3592, %v3600
  %v3604 = vadd.f32 %v3593, %v3600
  %v3605 = vadd.f32 %v3594, %v3600
  %vm3606 = vcmp.gt.f32.partialorder %v3602, 0.0
  %vm3607 = vcmp.gt.f32.partialorder %v3603, 0.0
  %vm3608 = vcmp.gt.f32.partialorder %v3604, 0.0
  %vm3609 = vcmp.gt.f32.partialorder %v3605, 0.0
  %v3610 = vmin.f32 %v3602, 0.0
  %v3611 = vmin.f32 %v3603, 0.0
  %v3612 = vmin.f32 %v3604, 0.0
  %v3613 = vmin.f32 %v3605, 0.0
  %v3614 = vmul.f32 %v3610, 1.442695
  %v3615 = vpow.pop %v3614
  %v3616 = vmul.f32 %v3611, 1.442695
  %v3617 = vpow.pop %v3616
  %v3618 = vmul.f32 %v3612, 1.442695
  %v3619 = vpow.pop %v3618
  %v3620 = vmul.f32 %v3613, 1.442695
  %v3621 = vpow.pop %v3620
  %v3622 = vsub.f32 %v3615, 1.0
  %v3623 = vsub.f32 %v3617, 1.0
  %v3624 = vsub.f32 %v3619, 1.0
  %v3625 = vsub.f32 %v3621, 1.0
  %v3626 = vsel %vm3606, %v3602, %v3622
  %v3627 = vsel %vm3607, %v3603, %v3623
  %v3628 = vsel %vm3608, %v3604, %v3624
  %v3629 = vsel %vm3609, %v3605, %v3625
  %v3630 = vld [vmem:[%s17] sm:$0x1]
  %v3632 = vlaneseq
  %v3633 = vshrl.u32 %v3632, 7
  %v3634 = vsub.s32 0, %v3633
  %v3635 = vrot.slane %v3630, %v3634
  %v3637 = vadd.f32 %v3635, 0.0
  %v3638 = vpack.c.bf16 %v3626, %v3626
  %v3639 = vld [vmem:[%s16] sm:$0xf]
  %v3640 = vld [vmem:[%s16 + $0x4] sm:$0xf]
  %v3641 = vld [vmem:[%s16 + $0x8] sm:$0xf]
  %v3642 = vld [vmem:[%s16 + $0xc] sm:$0xf]
  %v3643 = vld [vmem:[%s16 + $0x10] sm:$0xf]
  %v3644 = vld [vmem:[%s16 + $0x14] sm:$0xf]
  %v3645 = vld [vmem:[%s16 + $0x18] sm:$0xf]
  %v3646 = vld [vmem:[%s16 + $0x1c] sm:$0xf]
  %v3647 = vld [vmem:[%s16 + $0x20] sm:$0xf]
  %v3648 = vld [vmem:[%s16 + $0x24] sm:$0xf]
  %v3649 = vld [vmem:[%s16 + $0x28] sm:$0xf]
  %v3650 = vld [vmem:[%s16 + $0x2c] sm:$0xf]
  %v3651 = vld [vmem:[%s16 + $0x30] sm:$0xf]
  %v3652 = vld [vmem:[%s16 + $0x34] sm:$0xf]
  %v3653 = vld [vmem:[%s16 + $0x38] sm:$0xf]
  %v3654 = vld [vmem:[%s16 + $0x3c] sm:$0xf]
  %v3671 = vunpack.c.l.b16 %v3639
  %v3672 = vunpack.c.l.b16 %v3640
  %v3673 = vunpack.c.l.b16 %v3641
  %v3674 = vunpack.c.l.b16 %v3642
  %v3675 = vunpack.c.l.b16 %v3643
  %v3676 = vunpack.c.l.b16 %v3644
  %v3677 = vunpack.c.l.b16 %v3645
  %v3678 = vunpack.c.l.b16 %v3646
  %v3679 = vunpack.c.l.b16 %v3647
  %v3680 = vunpack.c.l.b16 %v3648
  %v3681 = vunpack.c.l.b16 %v3649
  %v3682 = vunpack.c.l.b16 %v3650
  %v3683 = vunpack.c.l.b16 %v3651
  %v3684 = vunpack.c.l.b16 %v3652
  %v3685 = vunpack.c.l.b16 %v3653
  %v3686 = vunpack.c.l.b16 %v3654
  %v3687 = vpack.c.b16 %v3672, %v3671
  %v3688 = vpack.c.b16 %v3674, %v3673
  %v3689 = vpack.c.b16 %v3676, %v3675
  %v3690 = vpack.c.b16 %v3678, %v3677
  %v3691 = vpack.c.b16 %v3680, %v3679
  %v3692 = vpack.c.b16 %v3682, %v3681
  %v3693 = vpack.c.b16 %v3684, %v3683
  %v3694 = vpack.c.b16 %v3686, %v3685
  %3703 = vmatprep.subr.bf16.mxu0 0
  %3704 = vmatpush1.bf16.msra.mxu0 %v3687
  %3705 = vmatprep.subr.bf16.mxu0 0
  %3706 = vmatpush1.bf16.msra.mxu0 %v3688
  %3707 = vmatprep.subr.bf16.mxu0 0
  %3708 = vmatpush1.bf16.msra.mxu0 %v3689
  %3709 = vmatprep.subr.bf16.mxu0 0
  %3710 = vmatpush1.bf16.msra.mxu0 %v3690
  %3711 = vmatprep.subr.bf16.mxu0 0
  %3712 = vmatpush1.bf16.msra.mxu0 %v3691
  %3713 = vmatprep.subr.bf16.mxu0 0
  %3714 = vmatpush1.bf16.msra.mxu0 %v3692
  %3715 = vmatprep.subr.bf16.mxu0 0
  %3716 = vmatpush1.bf16.msra.mxu0 %v3693
  %3717 = vmatprep.subr.bf16.mxu0 0
  %3718 = vmatpush1.bf16.msra.mxu0 %v3694
  %3719 = vmatprep.subr.bf16.mxu0 0
  %3720 = vmatpush1.bf16.msra.mxu0 0
  %3721 = vmatprep.subr.bf16.mxu0 0
  %3722 = vmatpush1.bf16.msra.mxu0 0
  %3723 = vmatprep.subr.bf16.mxu0 0
  %3724 = vmatpush1.bf16.msra.mxu0 0
  %3725 = vmatprep.subr.bf16.mxu0 0
  %3726 = vmatpush1.bf16.msra.mxu0 0
  %3727 = vmatprep.subr.bf16.mxu0 0
  %3728 = vmatpush1.bf16.msra.mxu0 0
  %3729 = vmatprep.subr.bf16.mxu0 0
  %3730 = vmatpush1.bf16.msra.mxu0 0
  %3731 = vmatprep.subr.bf16.mxu0 0
  %3732 = vmatpush1.bf16.msra.mxu0 0
  %3733 = vmatprep.subr.bf16.mxu0 0
  %3734 = vmatpush1.bf16.msra.mxu0 0
  %3735 = vmatprep.mubr.bf16.mxu0 0
  %3736 = vmatmul.mubr.bf16.gmra.mrb[0].mxu0 %v3638
  %v3737 = vpop.f32.mrb[0].mxu0
  %v3738 = vadd.f32 0.0, %v3737
  %v3739 = vpop.f32.mrb[0].mxu0
  %v3740 = vpop.f32.mrb[0].mxu0
  %v3741 = vpop.f32.mrb[0].mxu0
  %3742 = vdwg.mxu0
  %v3743 = vadd.f32 %v3637, %v3738
  %v3744 = vpack.c.bf16 %v3627, %v3627
  %s3745 = scalar_lea.vmem %s16, 64
  %v3746 = vld [vmem:[%s3745] sm:$0xf]
  %v3747 = vld [vmem:[%s3745 + $0x4] sm:$0xf]
  %v3748 = vld [vmem:[%s3745 + $0x8] sm:$0xf]
  %v3749 = vld [vmem:[%s3745 + $0xc] sm:$0xf]
  %v3750 = vld [vmem:[%s3745 + $0x10] sm:$0xf]
  %v3751 = vld [vmem:[%s3745 + $0x14] sm:$0xf]
  %v3752 = vld [vmem:[%s3745 + $0x18] sm:$0xf]
  %v3753 = vld [vmem:[%s3745 + $0x1c] sm:$0xf]
  %v3754 = vld [vmem:[%s3745 + $0x20] sm:$0xf]
  %v3755 = vld [vmem:[%s3745 + $0x24] sm:$0xf]
  %v3756 = vld [vmem:[%s3745 + $0x28] sm:$0xf]
  %v3757 = vld [vmem:[%s3745 + $0x2c] sm:$0xf]
  %v3758 = vld [vmem:[%s3745 + $0x30] sm:$0xf]
  %v3759 = vld [vmem:[%s3745 + $0x34] sm:$0xf]
  %v3760 = vld [vmem:[%s3745 + $0x38] sm:$0xf]
  %v3761 = vld [vmem:[%s3745 + $0x3c] sm:$0xf]
  %v3778 = vunpack.c.l.b16 %v3746
  %v3779 = vunpack.c.l.b16 %v3747
  %v3780 = vunpack.c.l.b16 %v3748
  %v3781 = vunpack.c.l.b16 %v3749
  %v3782 = vunpack.c.l.b16 %v3750
  %v3783 = vunpack.c.l.b16 %v3751
  %v3784 = vunpack.c.l.b16 %v3752
  %v3785 = vunpack.c.l.b16 %v3753
  %v3786 = vunpack.c.l.b16 %v3754
  %v3787 = vunpack.c.l.b16 %v3755
  %v3788 = vunpack.c.l.b16 %v3756
  %v3789 = vunpack.c.l.b16 %v3757
  %v3790 = vunpack.c.l.b16 %v3758
  %v3791 = vunpack.c.l.b16 %v3759
  %v3792 = vunpack.c.l.b16 %v3760
  %v3793 = vunpack.c.l.b16 %v3761
  %v3794 = vpack.c.b16 %v3779, %v3778
  %v3795 = vpack.c.b16 %v3781, %v3780
  %v3796 = vpack.c.b16 %v3783, %v3782
  %v3797 = vpack.c.b16 %v3785, %v3784
  %v3798 = vpack.c.b16 %v3787, %v3786
  %v3799 = vpack.c.b16 %v3789, %v3788
  %v3800 = vpack.c.b16 %v3791, %v3790
  %v3801 = vpack.c.b16 %v3793, %v3792
  %3810 = vmatprep.subr.bf16.mxu0 0
  %3811 = vmatpush1.bf16.msra.mxu0 %v3794
  %3812 = vmatprep.subr.bf16.mxu0 0
  %3813 = vmatpush1.bf16.msra.mxu0 %v3795
  %3814 = vmatprep.subr.bf16.mxu0 0
  %3815 = vmatpush1.bf16.msra.mxu0 %v3796
  %3816 = vmatprep.subr.bf16.mxu0 0
  %3817 = vmatpush1.bf16.msra.mxu0 %v3797
  %3818 = vmatprep.subr.bf16.mxu0 0
  %3819 = vmatpush1.bf16.msra.mxu0 %v3798
  %3820 = vmatprep.subr.bf16.mxu0 0
  %3821 = vmatpush1.bf16.msra.mxu0 %v3799
  %3822 = vmatprep.subr.bf16.mxu0 0
  %3823 = vmatpush1.bf16.msra.mxu0 %v3800
  %3824 = vmatprep.subr.bf16.mxu0 0
  %3825 = vmatpush1.bf16.msra.mxu0 %v3801
  %3826 = vmatprep.subr.bf16.mxu0 0
  %3827 = vmatpush1.bf16.msra.mxu0 0
  %3828 = vmatprep.subr.bf16.mxu0 0
  %3829 = vmatpush1.bf16.msra.mxu0 0
  %3830 = vmatprep.subr.bf16.mxu0 0
  %3831 = vmatpush1.bf16.msra.mxu0 0
  %3832 = vmatprep.subr.bf16.mxu0 0
  %3833 = vmatpush1.bf16.msra.mxu0 0
  %3834 = vmatprep.subr.bf16.mxu0 0
  %3835 = vmatpush1.bf16.msra.mxu0 0
  %3836 = vmatprep.subr.bf16.mxu0 0
  %3837 = vmatpush1.bf16.msra.mxu0 0
  %3838 = vmatprep.subr.bf16.mxu0 0
  %3839 = vmatpush1.bf16.msra.mxu0 0
  %3840 = vmatprep.subr.bf16.mxu0 0
  %3841 = vmatpush1.bf16.msra.mxu0 0
  %3842 = vmatprep.mubr.bf16.mxu0 0
  %3843 = vmatmul.mubr.bf16.gmra.mrb[0].mxu0 %v3744
  %v3844 = vpop.f32.mrb[0].mxu0
  %v3845 = vadd.f32 0.0, %v3844
  %v3846 = vpop.f32.mrb[0].mxu0
  %v3847 = vpop.f32.mrb[0].mxu0
  %v3848 = vpop.f32.mrb[0].mxu0
  %3849 = vdwg.mxu0
  %v3850 = vadd.f32 %v3743, %v3845
  %v3851 = vpack.c.bf16 %v3628, %v3628
  %s3852 = scalar_lea.vmem %s16, 128
  %v3853 = vld [vmem:[%s3852] sm:$0xf]
  %v3854 = vld [vmem:[%s3852 + $0x4] sm:$0xf]
  %v3855 = vld [vmem:[%s3852 + $0x8] sm:$0xf]
  %v3856 = vld [vmem:[%s3852 + $0xc] sm:$0xf]
  %v3857 = vld [vmem:[%s3852 + $0x10] sm:$0xf]
  %v3858 = vld [vmem:[%s3852 + $0x14] sm:$0xf]
  %v3859 = vld [vmem:[%s3852 + $0x18] sm:$0xf]
  %v3860 = vld [vmem:[%s3852 + $0x1c] sm:$0xf]
  %v3861 = vld [vmem:[%s3852 + $0x20] sm:$0xf]
  %v3862 = vld [vmem:[%s3852 + $0x24] sm:$0xf]
  %v3863 = vld [vmem:[%s3852 + $0x28] sm:$0xf]
  %v3864 = vld [vmem:[%s3852 + $0x2c] sm:$0xf]
  %v3865 = vld [vmem:[%s3852 + $0x30] sm:$0xf]
  %v3866 = vld [vmem:[%s3852 + $0x34] sm:$0xf]
  %v3867 = vld [vmem:[%s3852 + $0x38] sm:$0xf]
  %v3868 = vld [vmem:[%s3852 + $0x3c] sm:$0xf]
  %v3885 = vunpack.c.l.b16 %v3853
  %v3886 = vunpack.c.l.b16 %v3854
  %v3887 = vunpack.c.l.b16 %v3855
  %v3888 = vunpack.c.l.b16 %v3856
  %v3889 = vunpack.c.l.b16 %v3857
  %v3890 = vunpack.c.l.b16 %v3858
  %v3891 = vunpack.c.l.b16 %v3859
  %v3892 = vunpack.c.l.b16 %v3860
  %v3893 = vunpack.c.l.b16 %v3861
  %v3894 = vunpack.c.l.b16 %v3862
  %v3895 = vunpack.c.l.b16 %v3863
  %v3896 = vunpack.c.l.b16 %v3864
  %v3897 = vunpack.c.l.b16 %v3865
  %v3898 = vunpack.c.l.b16 %v3866
  %v3899 = vunpack.c.l.b16 %v3867
  %v3900 = vunpack.c.l.b16 %v3868
  %v3901 = vpack.c.b16 %v3886, %v3885
  %v3902 = vpack.c.b16 %v3888, %v3887
  %v3903 = vpack.c.b16 %v3890, %v3889
  %v3904 = vpack.c.b16 %v3892, %v3891
  %v3905 = vpack.c.b16 %v3894, %v3893
  %v3906 = vpack.c.b16 %v3896, %v3895
  %v3907 = vpack.c.b16 %v3898, %v3897
  %v3908 = vpack.c.b16 %v3900, %v3899
  %3917 = vmatprep.subr.bf16.mxu0 0
  %3918 = vmatpush1.bf16.msra.mxu0 %v3901
  %3919 = vmatprep.subr.bf16.mxu0 0
  %3920 = vmatpush1.bf16.msra.mxu0 %v3902
  %3921 = vmatprep.subr.bf16.mxu0 0
  %3922 = vmatpush1.bf16.msra.mxu0 %v3903
  %3923 = vmatprep.subr.bf16.mxu0 0
  %3924 = vmatpush1.bf16.msra.mxu0 %v3904
  %3925 = vmatprep.subr.bf16.mxu0 0
  %3926 = vmatpush1.bf16.msra.mxu0 %v3905
  %3927 = vmatprep.subr.bf16.mxu0 0
  %3928 = vmatpush1.bf16.msra.mxu0 %v3906
  %3929 = vmatprep.subr.bf16.mxu0 0
  %3930 = vmatpush1.bf16.msra.mxu0 %v3907
  %3931 = vmatprep.subr.bf16.mxu0 0
  %3932 = vmatpush1.bf16.msra.mxu0 %v3908
  %3933 = vmatprep.subr.bf16.mxu0 0
  %3934 = vmatpush1.bf16.msra.mxu0 0
  %3935 = vmatprep.subr.bf16.mxu0 0
  %3936 = vmatpush1.bf16.msra.mxu0 0
  %3937 = vmatprep.subr.bf16.mxu0 0
  %3938 = vmatpush1.bf16.msra.mxu0 0
  %3939 = vmatprep.subr.bf16.mxu0 0
  %3940 = vmatpush1.bf16.msra.mxu0 0
  %3941 = vmatprep.subr.bf16.mxu0 0
  %3942 = vmatpush1.bf16.msra.mxu0 0
  %3943 = vmatprep.subr.bf16.mxu0 0
  %3944 = vmatpush1.bf16.msra.mxu0 0
  %3945 = vmatprep.subr.bf16.mxu0 0
  %3946 = vmatpush1.bf16.msra.mxu0 0
  %3947 = vmatprep.subr.bf16.mxu0 0
  %3948 = vmatpush1.bf16.msra.mxu0 0
  %3949 = vmatprep.mubr.bf16.mxu0 0
  %3950 = vmatmul.mubr.bf16.gmra.mrb[0].mxu0 %v3851
  %v3951 = vpop.f32.mrb[0].mxu0
  %v3952 = vadd.f32 0.0, %v3951
  %v3953 = vpop.f32.mrb[0].mxu0
  %v3954 = vpop.f32.mrb[0].mxu0
  %v3955 = vpop.f32.mrb[0].mxu0
  %3956 = vdwg.mxu0
  %v3957 = vadd.f32 %v3850, %v3952
  %v3958 = vpack.c.bf16 %v3629, %v3629
  %s3959 = scalar_lea.vmem %s16, 192
  %v3960 = vld [vmem:[%s3959] sm:$0xf]
  %v3961 = vld [vmem:[%s3959 + $0x4] sm:$0xf]
  %v3962 = vld [vmem:[%s3959 + $0x8] sm:$0xf]
  %v3963 = vld [vmem:[%s3959 + $0xc] sm:$0xf]
  %v3964 = vld [vmem:[%s3959 + $0x10] sm:$0xf]
  %v3965 = vld [vmem:[%s3959 + $0x14] sm:$0xf]
  %v3966 = vld [vmem:[%s3959 + $0x18] sm:$0xf]
  %v3967 = vld [vmem:[%s3959 + $0x1c] sm:$0xf]
  %v3968 = vld [vmem:[%s3959 + $0x20] sm:$0xf]
  %v3969 = vld [vmem:[%s3959 + $0x24] sm:$0xf]
  %v3970 = vld [vmem:[%s3959 + $0x28] sm:$0xf]
  %v3971 = vld [vmem:[%s3959 + $0x2c] sm:$0xf]
  %v3972 = vld [vmem:[%s3959 + $0x30] sm:$0xf]
  %v3973 = vld [vmem:[%s3959 + $0x34] sm:$0xf]
  %v3974 = vld [vmem:[%s3959 + $0x38] sm:$0xf]
  %v3975 = vld [vmem:[%s3959 + $0x3c] sm:$0xf]
  %v3992 = vunpack.c.l.b16 %v3960
  %v3993 = vunpack.c.l.b16 %v3961
  %v3994 = vunpack.c.l.b16 %v3962
  %v3995 = vunpack.c.l.b16 %v3963
  %v3996 = vunpack.c.l.b16 %v3964
  %v3997 = vunpack.c.l.b16 %v3965
  %v3998 = vunpack.c.l.b16 %v3966
  %v3999 = vunpack.c.l.b16 %v3967
  %v4000 = vunpack.c.l.b16 %v3968
  %v4001 = vunpack.c.l.b16 %v3969
  %v4002 = vunpack.c.l.b16 %v3970
  %v4003 = vunpack.c.l.b16 %v3971
  %v4004 = vunpack.c.l.b16 %v3972
  %v4005 = vunpack.c.l.b16 %v3973
  %v4006 = vunpack.c.l.b16 %v3974
  %v4007 = vunpack.c.l.b16 %v3975
  %v4008 = vpack.c.b16 %v3993, %v3992
  %v4009 = vpack.c.b16 %v3995, %v3994
  %v4010 = vpack.c.b16 %v3997, %v3996
  %v4011 = vpack.c.b16 %v3999, %v3998
  %v4012 = vpack.c.b16 %v4001, %v4000
  %v4013 = vpack.c.b16 %v4003, %v4002
  %v4014 = vpack.c.b16 %v4005, %v4004
  %v4015 = vpack.c.b16 %v4007, %v4006
  %4024 = vmatprep.subr.bf16.mxu0 0
  %4025 = vmatpush1.bf16.msra.mxu0 %v4008
  %4026 = vmatprep.subr.bf16.mxu0 0
  %4027 = vmatpush1.bf16.msra.mxu0 %v4009
  %4028 = vmatprep.subr.bf16.mxu0 0
  %4029 = vmatpush1.bf16.msra.mxu0 %v4010
  %4030 = vmatprep.subr.bf16.mxu0 0
  %4031 = vmatpush1.bf16.msra.mxu0 %v4011
  %4032 = vmatprep.subr.bf16.mxu0 0
  %4033 = vmatpush1.bf16.msra.mxu0 %v4012
  %4034 = vmatprep.subr.bf16.mxu0 0
  %4035 = vmatpush1.bf16.msra.mxu0 %v4013
  %4036 = vmatprep.subr.bf16.mxu0 0
  %4037 = vmatpush1.bf16.msra.mxu0 %v4014
  %4038 = vmatprep.subr.bf16.mxu0 0
  %4039 = vmatpush1.bf16.msra.mxu0 %v4015
  %4040 = vmatprep.subr.bf16.mxu0 0
  %4041 = vmatpush1.bf16.msra.mxu0 0
  %4042 = vmatprep.subr.bf16.mxu0 0
  %4043 = vmatpush1.bf16.msra.mxu0 0
  %4044 = vmatprep.subr.bf16.mxu0 0
  %4045 = vmatpush1.bf16.msra.mxu0 0
  %4046 = vmatprep.subr.bf16.mxu0 0
  %4047 = vmatpush1.bf16.msra.mxu0 0
  %4048 = vmatprep.subr.bf16.mxu0 0
  %4049 = vmatpush1.bf16.msra.mxu0 0
  %4050 = vmatprep.subr.bf16.mxu0 0
  %4051 = vmatpush1.bf16.msra.mxu0 0
  %4052 = vmatprep.subr.bf16.mxu0 0
  %4053 = vmatpush1.bf16.msra.mxu0 0
  %4054 = vmatprep.subr.bf16.mxu0 0
  %4055 = vmatpush1.bf16.msra.mxu0 0
  %4056 = vmatprep.mubr.bf16.mxu0 0
  %4057 = vmatmul.mubr.bf16.gmra.mrb[0].mxu0 %v3958
  %v4058 = vpop.f32.mrb[0].mxu0
  %v4059 = vadd.f32 0.0, %v4058
  %v4060 = vpop.f32.mrb[0].mxu0
  %v4061 = vpop.f32.mrb[0].mxu0
  %v4062 = vpop.f32.mrb[0].mxu0
  %4063 = vdwg.mxu0
  %v4064 = vadd.f32 %v3957, %v4059
  %v4065 = vld [vmem:[%s18] sm:$0xf]
  %v4066 = vld [vmem:[%s18 + $0x4] sm:$0xf]
  %v4067 = vld [vmem:[%s18 + $0x8] sm:$0xf]
  %v4068 = vld [vmem:[%s18 + $0xc] sm:$0xf]
  %v4069 = vld [vmem:[%s18 + $0x10] sm:$0xf]
  %v4070 = vld [vmem:[%s18 + $0x14] sm:$0xf]
  %v4071 = vld [vmem:[%s18 + $0x18] sm:$0xf]
  %v4072 = vld [vmem:[%s18 + $0x1c] sm:$0xf]
  %v4073 = vld [vmem:[%s18 + $0x20] sm:$0xf]
  %v4074 = vld [vmem:[%s18 + $0x24] sm:$0xf]
  %v4075 = vld [vmem:[%s18 + $0x28] sm:$0xf]
  %v4076 = vld [vmem:[%s18 + $0x2c] sm:$0xf]
  %v4077 = vld [vmem:[%s18 + $0x30] sm:$0xf]
  %v4078 = vld [vmem:[%s18 + $0x34] sm:$0xf]
  %v4079 = vld [vmem:[%s18 + $0x38] sm:$0xf]
  %v4080 = vld [vmem:[%s18 + $0x3c] sm:$0xf]
  %v4081 = vpack.c.bf16 %v427, %v427
  %v4082 = vld [vmem:[%s19] sm:$0xf]
  %v4083 = vld [vmem:[%s19 + $0x4] sm:$0xf]
  %v4084 = vld [vmem:[%s19 + $0x8] sm:$0xf]
  %v4085 = vld [vmem:[%s19 + $0xc] sm:$0xf]
  %v4086 = vld [vmem:[%s19 + $0x10] sm:$0xf]
  %v4087 = vld [vmem:[%s19 + $0x14] sm:$0xf]
  %v4088 = vld [vmem:[%s19 + $0x18] sm:$0xf]
  %v4089 = vld [vmem:[%s19 + $0x1c] sm:$0xf]
  %v4090 = vld [vmem:[%s19 + $0x20] sm:$0xf]
  %v4091 = vld [vmem:[%s19 + $0x24] sm:$0xf]
  %v4092 = vld [vmem:[%s19 + $0x28] sm:$0xf]
  %v4093 = vld [vmem:[%s19 + $0x2c] sm:$0xf]
  %v4094 = vld [vmem:[%s19 + $0x30] sm:$0xf]
  %v4095 = vld [vmem:[%s19 + $0x34] sm:$0xf]
  %v4096 = vld [vmem:[%s19 + $0x38] sm:$0xf]
  %v4097 = vld [vmem:[%s19 + $0x3c] sm:$0xf]
  %v4098 = vpack.c.bf16 %v4064, %v4064
  %v4115 = vunpack.c.l.b16 %v4082
  %v4116 = vunpack.c.l.b16 %v4083
  %v4117 = vunpack.c.l.b16 %v4084
  %v4118 = vunpack.c.l.b16 %v4085
  %v4119 = vunpack.c.l.b16 %v4086
  %v4120 = vunpack.c.l.b16 %v4087
  %v4121 = vunpack.c.l.b16 %v4088
  %v4122 = vunpack.c.l.b16 %v4089
  %v4123 = vunpack.c.l.b16 %v4090
  %v4124 = vunpack.c.l.b16 %v4091
  %v4125 = vunpack.c.l.b16 %v4092
  %v4126 = vunpack.c.l.b16 %v4093
  %v4127 = vunpack.c.l.b16 %v4094
  %v4128 = vunpack.c.l.b16 %v4095
  %v4129 = vunpack.c.l.b16 %v4096
  %v4130 = vunpack.c.l.b16 %v4097
  %v4131 = vpack.c.b16 %v4116, %v4115
  %v4132 = vpack.c.b16 %v4118, %v4117
  %v4133 = vpack.c.b16 %v4120, %v4119
  %v4134 = vpack.c.b16 %v4122, %v4121
  %v4135 = vpack.c.b16 %v4124, %v4123
  %v4136 = vpack.c.b16 %v4126, %v4125
  %v4137 = vpack.c.b16 %v4128, %v4127
  %v4138 = vpack.c.b16 %v4130, %v4129
  %4147 = vmatprep.subr.bf16.mxu0 0
  %4148 = vmatpush1.bf16.msra.mxu0 %v4131
  %4149 = vmatprep.subr.bf16.mxu0 0
  %4150 = vmatpush1.bf16.msra.mxu0 %v4132
  %4151 = vmatprep.subr.bf16.mxu0 0
  %4152 = vmatpush1.bf16.msra.mxu0 %v4133
  %4153 = vmatprep.subr.bf16.mxu0 0
  %4154 = vmatpush1.bf16.msra.mxu0 %v4134
  %4155 = vmatprep.subr.bf16.mxu0 0
  %4156 = vmatpush1.bf16.msra.mxu0 %v4135
  %4157 = vmatprep.subr.bf16.mxu0 0
  %4158 = vmatpush1.bf16.msra.mxu0 %v4136
  %4159 = vmatprep.subr.bf16.mxu0 0
  %4160 = vmatpush1.bf16.msra.mxu0 %v4137
  %4161 = vmatprep.subr.bf16.mxu0 0
  %4162 = vmatpush1.bf16.msra.mxu0 %v4138
  %4163 = vmatprep.subr.bf16.mxu0 0
  %4164 = vmatpush1.bf16.msra.mxu0 0
  %4165 = vmatprep.subr.bf16.mxu0 0
  %4166 = vmatpush1.bf16.msra.mxu0 0
  %4167 = vmatprep.subr.bf16.mxu0 0
  %4168 = vmatpush1.bf16.msra.mxu0 0
  %4169 = vmatprep.subr.bf16.mxu0 0
  %4170 = vmatpush1.bf16.msra.mxu0 0
  %4171 = vmatprep.subr.bf16.mxu0 0
  %4172 = vmatpush1.bf16.msra.mxu0 0
  %4173 = vmatprep.subr.bf16.mxu0 0
  %4174 = vmatpush1.bf16.msra.mxu0 0
  %4175 = vmatprep.subr.bf16.mxu0 0
  %4176 = vmatpush1.bf16.msra.mxu0 0
  %4177 = vmatprep.subr.bf16.mxu0 0
  %4178 = vmatpush1.bf16.msra.mxu0 0
  %4179 = vmatprep.mubr.bf16.mxu0 0
  %4180 = vmatmul.mubr.bf16.gmra.mrb[0].mxu0 %v4098
  %v4181 = vpop.f32.mrb[0].mxu0
  %v4182 = vadd.f32 0.0, %v4181
  %v4183 = vpop.f32.mrb[0].mxu0
  %v4184 = vpop.f32.mrb[0].mxu0
  %v4185 = vpop.f32.mrb[0].mxu0
  %4186 = vdwg.mxu0
  %v4203 = vunpack.c.l.b16 %v4065
  %v4204 = vunpack.c.l.b16 %v4066
  %v4205 = vunpack.c.l.b16 %v4067
  %v4206 = vunpack.c.l.b16 %v4068
  %v4207 = vunpack.c.l.b16 %v4069
  %v4208 = vunpack.c.l.b16 %v4070
  %v4209 = vunpack.c.l.b16 %v4071
  %v4210 = vunpack.c.l.b16 %v4072
  %v4211 = vunpack.c.l.b16 %v4073
  %v4212 = vunpack.c.l.b16 %v4074
  %v4213 = vunpack.c.l.b16 %v4075
  %v4214 = vunpack.c.l.b16 %v4076
  %v4215 = vunpack.c.l.b16 %v4077
  %v4216 = vunpack.c.l.b16 %v4078
  %v4217 = vunpack.c.l.b16 %v4079
  %v4218 = vunpack.c.l.b16 %v4080
  %v4219 = vpack.c.b16 %v4204, %v4203
  %v4220 = vpack.c.b16 %v4206, %v4205
  %v4221 = vpack.c.b16 %v4208, %v4207
  %v4222 = vpack.c.b16 %v4210, %v4209
  %v4223 = vpack.c.b16 %v4212, %v4211
  %v4224 = vpack.c.b16 %v4214, %v4213
  %v4225 = vpack.c.b16 %v4216, %v4215
  %v4226 = vpack.c.b16 %v4218, %v4217
  %4235 = vmatprep.subr.bf16.mxu0 0
  %4236 = vmatpush1.bf16.msra.mxu0 %v4219
  %4237 = vmatprep.subr.bf16.mxu0 0
  %4238 = vmatpush1.bf16.msra.mxu0 %v4220
  %4239 = vmatprep.subr.bf16.mxu0 0
  %4240 = vmatpush1.bf16.msra.mxu0 %v4221
  %4241 = vmatprep.subr.bf16.mxu0 0
  %4242 = vmatpush1.bf16.msra.mxu0 %v4222
  %4243 = vmatprep.subr.bf16.mxu0 0
  %4244 = vmatpush1.bf16.msra.mxu0 %v4223
  %4245 = vmatprep.subr.bf16.mxu0 0
  %4246 = vmatpush1.bf16.msra.mxu0 %v4224
  %4247 = vmatprep.subr.bf16.mxu0 0
  %4248 = vmatpush1.bf16.msra.mxu0 %v4225
  %4249 = vmatprep.subr.bf16.mxu0 0
  %4250 = vmatpush1.bf16.msra.mxu0 %v4226
  %4251 = vmatprep.subr.bf16.mxu0 0
  %4252 = vmatpush1.bf16.msra.mxu0 0
  %4253 = vmatprep.subr.bf16.mxu0 0
  %4254 = vmatpush1.bf16.msra.mxu0 0
  %4255 = vmatprep.subr.bf16.mxu0 0
  %4256 = vmatpush1.bf16.msra.mxu0 0
  %4257 = vmatprep.subr.bf16.mxu0 0
  %4258 = vmatpush1.bf16.msra.mxu0 0
  %4259 = vmatprep.subr.bf16.mxu0 0
  %4260 = vmatpush1.bf16.msra.mxu0 0
  %4261 = vmatprep.subr.bf16.mxu0 0
  %4262 = vmatpush1.bf16.msra.mxu0 0
  %4263 = vmatprep.subr.bf16.mxu0 0
  %4264 = vmatpush1.bf16.msra.mxu0 0
  %4265 = vmatprep.subr.bf16.mxu0 0
  %4266 = vmatpush1.bf16.msra.mxu0 0
  %4267 = vmatprep.mubr.bf16.mxu0 0
  %4268 = vmatmul.mubr.bf16.gmra.mrb[0].mxu0 %v4081
  %v4269 = vpop.f32.mrb[0].mxu0
  %v4270 = vadd.f32 %v4182, %v4269
  %v4271 = vpop.f32.mrb[0].mxu0
  %v4272 = vpop.f32.mrb[0].mxu0
  %v4273 = vpop.f32.mrb[0].mxu0
  %4274 = vdwg.mxu0
  %v4275 = vld [vmem:[%s20] sm:$0x1]
  %v4277 = vlaneseq
  %v4278 = vshrl.u32 %v4277, 7
  %v4279 = vsub.s32 0, %v4278
  %v4280 = vrot.slane %v4275, %v4279
  %v4282 = vadd.f32 %v4270, %v4280
  %vm4283 = vcmp.gt.f32.partialorder %v4282, 0.0
  %v4284 = vmin.f32 %v4282, 0.0
  %v4285 = vmul.f32 %v4284, 1.442695
  %v4286 = vpow.pop %v4285
  %v4287 = vsub.f32 %v4286, 1.0
  %v4288 = vsel %vm4283, %v4282, %v4287
  %v4289 = vld [vmem:[%s21] sm:$0x1]
  %v4291 = vlaneseq
  %v4292 = vshrl.u32 %v4291, 7
  %v4293 = vsub.s32 0, %v4292
  %v4294 = vrot.slane %v4289, %v4293
  %v4296 = vmul.f32 %v4288, %v4294
  %4297 = vadd.xlane.f32.xlu0 %v4296
  %v4298 = vpop.xlane.xlu0 %4297
  %v4299 = vld [vmem:[#allocation6] sm:$0x1]
  %v4301 = vlaneseq
  %v4302 = vshrl.u32 %v4301, 7
  %v4303 = vsub.s32 0, %v4302
  %v4304 = vrot.slane %v4299, %v4303
  %v4306 = vadd.f32 %v4298, %v4304
  %vm4307 = vcmask 7168
  %4308 = vst.msk [vmem:[%s23] sm:$0xff] %vm4307, %v4306
  // Predicated region
  $region94: #{_lambda_.1} parent=0 // pred_check
    _
  $region95: #{_lambda_.1} parent=0 // pred_check_branch
    %4310 = sbr.rel (0) target = $region97
  $region96: #{_lambda_.1} parent=0 // pred_region
    _
  $region97: #{_lambda_.1} parent=0 // pred_fallthru
    _
  // Predicated region
  $region98: #{_lambda_.1} parent=0 // pred_check
    _
  $region99: #{_lambda_.1} parent=0 // pred_check_branch
    %4312 = sbr.rel (0) target = $region101
  $region100: #{_lambda_.1} parent=0 // pred_region
    _
  $region101: #{_lambda_.1} parent=0 // pred_fallthru
    _

</llo_original>
